<compile_context>
chip_gen: v5e
topology: v5e:2x2
jax: 0.10.0
libtpu: 0.0.40
codegen_flags: <defaults>
</compile_context>

<pallas_src>
import math
import numpy as np
import jax
import jax.numpy as jnp
from jax import lax
from jax.experimental import pallas as pl
from jax.experimental.pallas import tpu as pltpu

HIDDEN = 100   # fixed by the PyTorch module
HP = 128       # lane-aligned padded hidden size


# --------------------------------------------------------------------------
# Kernel
# --------------------------------------------------------------------------
def _rnn_kernel(x_ref,                       # (t_tile, b_blk, F)  raw input tile (f32)
                wi_l_ref, b_l_ref,           # (F, 4Hp) f32, (1, 4Hp) f32  LSTM input proj (+ bi+bh)
                wh_l_ref,                    # (Hp, 4Hp) bf16   LSTM hidden weights (fused i,f,g,o)
                wi_g_ref, wh_g_ref,          # (Hp, 3Hp) bf16   GRU input/hidden weights (fused r,z,n)
                bi_g_ref, bh_g_ref,          # (1, 3Hp) f32     GRU biases (bh separate for n-gate)
                w_fc_ref, b_fc_ref,          # (1, Hp) f32, (1,1) f32   fc_1
                out_ref,                     # (b_blk, t_tile)  lane-dense output slab
                h_ref, c_ref, hg_ref):       # (b_blk, Hp) f32  carried state across time tiles
    t_tile = x_ref.shape[0]
    b_blk, Hp = h_ref.shape

    # zero initial state at the first time tile of each batch block
    # (PyTorch: hx=None / zeros for the GRU)
    @pl.when(pl.program_id(1) == 0)
    def _():
        h_ref[...] = jnp.zeros_like(h_ref)
        c_ref[...] = jnp.zeros_like(c_ref)
        hg_ref[...] = jnp.zeros_like(hg_ref)

    # hoist loop-invariant loads / broadcasts (JAX does not CSE broadcasts)
    wi_l = wi_l_ref[...]
    wh_l = wh_l_ref[...]
    wi_g = wi_g_ref[...]
    wh_g = wh_g_ref[...]
    b_l = jnp.broadcast_to(b_l_ref[...], (b_blk, 4 * Hp))
    bi_g = jnp.broadcast_to(bi_g_ref[...], (b_blk, 3 * Hp))
    bh_g = jnp.broadcast_to(bh_g_ref[...], (b_blk, 3 * Hp))
    w_fc = jnp.broadcast_to(w_fc_ref[...], (b_blk, Hp))
    lane_t = lax.broadcasted_iota(jnp.int32, (b_blk, t_tile), 1)

    def step(tt, carry):
        h, c, hg, y_acc = carry
        x_t = x_ref[tt]                                              # (b_blk, F)

        # ---- LSTM input projection (off the serial chain, tiny K=F) ----
        xp = b_l + jnp.dot(x_t, wi_l, preferred_element_type=jnp.float32)

        # ---- LSTM cell, fused gates (PyTorch order i, f, g, o) ----
        gates = xp + jnp.dot(h.astype(wh_l.dtype), wh_l,
                             preferred_element_type=jnp.float32)     # (b_blk, 4Hp)
        i = jax.nn.sigmoid(gates[:, 0 * Hp:1 * Hp])
        f = jax.nn.sigmoid(gates[:, 1 * Hp:2 * Hp])
        g = jnp.tanh(gates[:, 2 * Hp:3 * Hp])
        o = jax.nn.sigmoid(gates[:, 3 * Hp:4 * Hp])
        c_new = f * c + i * g
        h_new = o * jnp.tanh(c_new)

        # ---- GRU cell, fused gates (PyTorch order r, z, n) ----
        gi = bi_g + jnp.dot(h_new.astype(wi_g.dtype), wi_g,
                            preferred_element_type=jnp.float32)      # (b_blk, 3Hp)
        gh = bh_g + jnp.dot(hg.astype(wh_g.dtype), wh_g,
                            preferred_element_type=jnp.float32)      # (b_blk, 3Hp)
        r = jax.nn.sigmoid(gi[:, 0 * Hp:1 * Hp] + gh[:, 0 * Hp:1 * Hp])
        z = jax.nn.sigmoid(gi[:, 1 * Hp:2 * Hp] + gh[:, 1 * Hp:2 * Hp])
        n = jnp.tanh(gi[:, 2 * Hp:3 * Hp] + r * gh[:, 2 * Hp:3 * Hp])
        hg_new = (1.0 - z) * n + z * hg

        # ---- fc_1: ReLU + VPU multiply + XLU lane reduce, accumulated into
        #      a vreg-resident lane-dense slab (no per-step masked stores) ----
        y_t = jnp.sum(jnp.maximum(hg_new, 0.0) * w_fc, axis=-1, keepdims=True)
        y_acc = jnp.where(lane_t == tt, y_t, y_acc)
        return h_new, c_new, hg_new, y_acc

    carry0 = (h_ref[...], c_ref[...], hg_ref[...],
              jnp.zeros((b_blk, t_tile), jnp.float32))
    h_f, c_f, hg_f, y_f = lax.fori_loop(0, t_tile, step, carry0,
                                        unroll=min(t_tile, 8))
    h_ref[...] = h_f
    c_ref[...] = c_f
    hg_ref[...] = hg_f
    out_ref[...] = y_f + b_fc_ref[...]            # single lane-dense store per tile


# --------------------------------------------------------------------------
# Wrapper
# --------------------------------------------------------------------------
def single_price_model_forward(x, prepared, *, t_tile=None):
    """x: (B, T, F) float32 -> (B, T, 1) float32."""
    (wi_l, b_l, wh_l, wi_g, wh_g, bi_g, bh_g, w_fc, b_fc) = prepared
    B, T, F = x.shape
    Hp = wh_l.shape[0]
    G4, G3 = 4 * Hp, 3 * Hp

    # ---- time tiling: whole sequence for short T, else 128-step (lane-dense
    #      output blocks) tiles; trailing pad steps are causal-safe & dropped.
    if t_tile is None:
        t_tile = T if T <= 512 else 128
    t_tile = min(t_tile, T)
    if t_tile < T and t_tile % 128 != 0:
        t_tile = 128
    n_tiles = pl.cdiv(T, t_tile)
    Tp = n_tiles * t_tile

    # ---- batch blocking: 2 "parallel" blocks feed v7x's second TensorCore
    #      (only when the sub-block stays sublane-aligned; else a single block)
    if B >= 16 and B % 16 == 0:
        nb, b_blk = 2, B // 2
    else:
        nb, b_blk = 1, B

    # time-major raw input (tiny HBM stream: B*T*F*4 bytes, no xp intermediate)
    x_tm = jnp.transpose(x, (1, 0, 2))
    if Tp != T:
        x_tm = jnp.pad(x_tm, ((0, Tp - T), (0, 0), (0, 0)))

    # ---- VMEM budget: exact double-buffered sum, capped by this part's VMEM
    nbytes = lambda a: int(a.size) * a.dtype.itemsize
    weight_bytes = sum(nbytes(w) for w in
                       (wi_l, b_l, wh_l, wi_g, wh_g, bi_g, bh_g, w_fc, b_fc))
    tile_in = t_tile * b_blk * F * 4
    tile_out = b_blk * t_tile * 4
    state = 3 * max(b_blk, 8) * Hp * 4
    needed = 2 * (tile_in + tile_out) + 2 * weight_bytes + state
    try:
        cap = pltpu.get_tpu_info().vmem_capacity_bytes
    except Exception:
        cap = None
    if not cap:
        cap = 64 << 20          # v7x floor; v5e/v6e have 128 MiB
    vmem_limit = int(min(max(2 * needed, 16 << 20), (3 * cap) // 4))

    const = lambda shape: pl.BlockSpec(shape, lambda b, t: tuple(0 for _ in shape))

    out_bt = pl.pallas_call(
        _rnn_kernel,
        out_shape=jax.ShapeDtypeStruct((B, Tp), jnp.float32),
        grid=(nb, n_tiles),
        in_specs=[
            pl.BlockSpec((t_tile, b_blk, F), lambda b, t: (t, b, 0)),  # raw x (streamed)
            const((F, G4)),    # wi_l   (f32)
            const((1, G4)),    # b_l    (f32, bi+bh pre-summed)
            const((Hp, G4)),   # wh_l   (bf16)
            const((Hp, G3)),   # wi_g   (bf16)
            const((Hp, G3)),   # wh_g   (bf16)
            const((1, G3)),    # bi_g   (f32)
            const((1, G3)),    # bh_g   (f32)
            const((1, Hp)),    # w_fc   (f32, row layout)
            const((1, 1)),     # b_fc   (f32)
        ],
        out_specs=pl.BlockSpec((b_blk, t_tile), lambda b, t: (b, t)),
        scratch_shapes=[
            pltpu.VMEM((b_blk, Hp), jnp.float32),   # h_lstm
            pltpu.VMEM((b_blk, Hp), jnp.float32),   # c_lstm
            pltpu.VMEM((b_blk, Hp), jnp.float32),   # h_gru
        ],
        compiler_params=pltpu.CompilerParams(
            dimension_semantics=("parallel", "arbitrary"),   # batch || , time sequential
            vmem_limit_bytes=vmem_limit,
        ),
    )(x_tm, wi_l, b_l, wh_l, wi_g, wh_g, bi_g, bh_g, w_fc, b_fc)

    # tiny layout fix back to PyTorch's (B, T, 1)
    return out_bt[:, :T, None]


# --------------------------------------------------------------------------
# Parameter handling
# --------------------------------------------------------------------------
def init_raw_params(key, features, hidden=HIDDEN):
    """Deterministic synthetic params in the native PyTorch layout."""
    bound = 1.0 / math.sqrt(hidden)
    ks = jax.random.split(key, 10)
    u = lambda k, s: jax.random.uniform(k, s, jnp.float32, -bound, bound)
    w_ih_l = u(ks[0], (4 * hidden, features))   # LSTM weight_ih_l0 (gates i,f,g,o)
    w_hh_l = u(ks[1], (4 * hidden, hidden))
    b_ih_l = u(ks[2], (4 * hidden,))
    b_hh_l = u(ks[3], (4 * hidden,))
    w_ih_g = u(ks[4], (3 * hidden, hidden))     # GRU weight_ih_l0 (gates r,z,n)
    w_hh_g = u(ks[5], (3 * hidden, hidden))
    b_ih_g = u(ks[6], (3 * hidden,))
    b_hh_g = u(ks[7], (3 * hidden,))
    w_fc = u(ks[8], (1, hidden))                # fc_1.weight
    b_fc = u(ks[9], (1,))                       # fc_1.bias
    return (w_ih_l, w_hh_l, b_ih_l, b_hh_l,
            w_ih_g, w_hh_g, b_ih_g, b_hh_g, w_fc, b_fc)


def prepare_params(raw, hp=HP, recurrent_dtype=jnp.bfloat16):
    """Fuse gates, transpose for right-multiplication, zero-pad H=100 -> Hp=128.

    Padded weight rows AND columns plus padded biases are zero, so padded
    hidden channels stay exactly 0 through the recurrence (zeros survive the
    bf16 cast exactly). The three recurrent weight matrices are stored in
    bf16 for the native-bf16 MXU; biases, the input projection, fc_1 and the
    carried state / accumulation stay f32.
    """
    (w_ih_l, w_hh_l, b_ih_l, b_hh_l,
     w_ih_g, w_hh_g, b_ih_g, b_hh_g, w_fc, b_fc) = raw
    H = w_hh_l.shape[1]
    pad = hp - H

    def pad_gate_cols(w_t, n_gates):
        # w_t: (in_dim, n_gates*H) -> (in_dim, n_gates*hp), padding each gate block
        in_dim = w_t.shape[0]
        w3 = w_t.reshape(in_dim, n_gates, H)
        w3 = jnp.pad(w3, ((0, 0), (0, 0), (0, pad)))
        return w3.reshape(in_dim, n_gates * hp)

    def pad_rows(w):
        return jnp.pad(w, ((0, hp - w.shape[0]), (0, 0)))

    # LSTM input projection (done in-kernel per tile) + pre-summed bias
    wi_l = pad_gate_cols(w_ih_l.T, 4).astype(jnp.float32)               # (F, 4hp)
    b_l = pad_gate_cols((b_ih_l + b_hh_l)[None, :], 4)                  # (1, 4hp)
    # recurrent weights -> bf16 (f32 accumulation in-kernel)
    wh_l = pad_rows(pad_gate_cols(w_hh_l.T, 4)).astype(recurrent_dtype)  # (hp, 4hp)
    wi_g = pad_rows(pad_gate_cols(w_ih_g.T, 3)).astype(recurrent_dtype)  # (hp, 3hp)
    wh_g = pad_rows(pad_gate_cols(w_hh_g.T, 3)).astype(recurrent_dtype)  # (hp, 3hp)
    bi_g = pad_gate_cols(b_ih_g[None, :], 3)                             # (1, 3hp)
    bh_g = pad_gate_cols(b_hh_g[None, :], 3)                             # (1, 3hp)
    # fc_1: row layout so the kernel can lane-broadcast it
    w_fc_row = jnp.pad(w_fc, ((0, 0), (0, pad)))                         # (1, hp)
    b_fc2 = b_fc.reshape(1, 1)                                           # (1, 1)
    return (wi_l, b_l, wh_l, wi_g, wh_g, bi_g, bh_g, w_fc_row, b_fc2)


# --------------------------------------------------------------------------
# Pure-JAX reference (PyTorch semantics, unpadded f32 H=100 params)
# --------------------------------------------------------------------------
def reference_forward(x, raw):
    (w_ih_l, w_hh_l, b_ih_l, b_hh_l,
     w_ih_g, w_hh_g, b_ih_g, b_hh_g, w_fc, b_fc) = raw
    H = w_hh_l.shape[1]
    B = x.shape[0]
    zeros = jnp.zeros((B, H), jnp.float32)

    def step(carry, x_t):
        h, c, hg = carry
        gates = x_t @ w_ih_l.T + b_ih_l + h @ w_hh_l.T + b_hh_l
        i = jax.nn.sigmoid(gates[:, 0:H])
        f = jax.nn.sigmoid(gates[:, H:2 * H])
        g = jnp.tanh(gates[:, 2 * H:3 * H])
        o = jax.nn.sigmoid(gates[:, 3 * H:4 * H])
        c = f * c + i * g
        h = o * jnp.tanh(c)
        gi = h @ w_ih_g.T + b_ih_g
        gh = hg @ w_hh_g.T + b_hh_g
        r = jax.nn.sigmoid(gi[:, :H] + gh[:, :H])
        z = jax.nn.sigmoid(gi[:, H:2 * H] + gh[:, H:2 * H])
        n = jnp.tanh(gi[:, 2 * H:] + r * gh[:, 2 * H:])
        hg = (1.0 - z) * n + z * hg
        y = jnp.maximum(hg, 0.0) @ w_fc.T + b_fc
        return (h, c, hg), y

    xs = jnp.transpose(x, (1, 0, 2))
    _, ys = jax.lax.scan(step, (zeros, zeros, zeros), xs)
    return jnp.transpose(ys, (1, 0, 2))


if __name__ == "__main__":
    key = jax.random.PRNGKey(0)
    k_x, k_p = jax.random.split(key)

    B, T, F = 2, 8, 4  # batch, seq_len, features
    x = jax.random.normal(k_x, (B, T, F), jnp.float32)
    raw = init_raw_params(k_p, F)
    prepared = prepare_params(raw)

    out = jax.jit(single_price_model_forward)(x, prepared)
    out = jax.block_until_ready(out)

    ref = reference_forward(x, raw)
    assert out.shape == (B, T, 1), out.shape
    # bf16 recurrent weights with f32 accumulation: validate at 1e-2
    np.testing.assert_allclose(np.asarray(out), np.asarray(ref),
                               rtol=1e-2, atol=1e-2)
    print("KERNEL_OK")
</pallas_src>

<mosaic_0001>
module attributes {stable_mosaic.version = 11 : i64} {
  func.func @_rnn_kernel(%arg0: i32, %arg1: i32, %arg2: memref<8x2x4xf32, #tpu.memory_space<vmem>>, %arg3: memref<4x512xf32, #tpu.memory_space<vmem>>, %arg4: memref<1x512xf32, #tpu.memory_space<vmem>>, %arg5: memref<128x512xbf16, #tpu.memory_space<vmem>>, %arg6: memref<128x384xbf16, #tpu.memory_space<vmem>>, %arg7: memref<128x384xbf16, #tpu.memory_space<vmem>>, %arg8: memref<1x384xf32, #tpu.memory_space<vmem>>, %arg9: memref<1x384xf32, #tpu.memory_space<vmem>>, %arg10: memref<1x128xf32, #tpu.memory_space<vmem>>, %arg11: memref<1x1xf32, #tpu.memory_space<vmem>>, %arg12: memref<2x8xf32, #tpu.memory_space<vmem>>, %arg13: memref<2x128xf32, #tpu.memory_space<vmem>>, %arg14: memref<2x128xf32, #tpu.memory_space<vmem>>, %arg15: memref<2x128xf32, #tpu.memory_space<vmem>>) attributes {dimension_semantics = [#tpu.dimension_semantics<parallel>, #tpu.dimension_semantics<arbitrary>], iteration_bounds = array<i64: 1, 1>, scalar_prefetch = 0 : i64, scratch_operands = 3 : i64, tpu.core_type = #tpu.core_type<tc>, window_params = [{transform_indices = @transform_0, window_bounds = array<i64: 8, 2, 4>}, {pipeline_mode = #tpu.pipeline_mode<synchronous>, transform_indices = @transform_1, window_bounds = array<i64: 4, 512>}, {pipeline_mode = #tpu.pipeline_mode<synchronous>, transform_indices = @transform_2, window_bounds = array<i64: 1, 512>}, {pipeline_mode = #tpu.pipeline_mode<synchronous>, transform_indices = @transform_3, window_bounds = array<i64: 128, 512>}, {pipeline_mode = #tpu.pipeline_mode<synchronous>, transform_indices = @transform_4, window_bounds = array<i64: 128, 384>}, {pipeline_mode = #tpu.pipeline_mode<synchronous>, transform_indices = @transform_5, window_bounds = array<i64: 128, 384>}, {pipeline_mode = #tpu.pipeline_mode<synchronous>, transform_indices = @transform_6, window_bounds = array<i64: 1, 384>}, {pipeline_mode = #tpu.pipeline_mode<synchronous>, transform_indices = @transform_7, window_bounds = array<i64: 1, 384>}, {pipeline_mode = #tpu.pipeline_mode<synchronous>, transform_indices = @transform_8, window_bounds = array<i64: 1, 128>}, {pipeline_mode = #tpu.pipeline_mode<synchronous>, transform_indices = @transform_9, window_bounds = array<i64: 1, 1>}, {transform_indices = @transform_10, window_bounds = array<i64: 2, 8>}]} {
    %c0_i32 = arith.constant 0 : i32
    %0 = arith.cmpi eq, %arg1, %c0_i32 : i32
    %1 = arith.extui %0 : i1 to i32
    %c0_i32_0 = arith.constant 0 : i32
    %2 = arith.cmpi ne, %1, %c0_i32_0 : i32
    scf.if %2 {
      %cst_145 = arith.constant 0.000000e+00 : f32
      %631 = vector.broadcast %cst_145 : f32 to vector<2x128xf32>
      %c0_146 = arith.constant 0 : index
      %c0_147 = arith.constant 0 : index
      %632 = vector.load %arg13[%c0_146, %c0_147] : memref<2x128xf32, #tpu.memory_space<vmem>>, vector<2x128xf32>
      tpu.vector_store %arg13[%c0_146, %c0_147], %631 {strides = array<i32>} : memref<2x128xf32, #tpu.memory_space<vmem>>, vector<2x128xf32>,
      %cst_148 = arith.constant 0.000000e+00 : f32
      %633 = vector.broadcast %cst_148 : f32 to vector<2x128xf32>
      %c0_149 = arith.constant 0 : index
      %c0_150 = arith.constant 0 : index
      %634 = vector.load %arg14[%c0_149, %c0_150] : memref<2x128xf32, #tpu.memory_space<vmem>>, vector<2x128xf32>
      tpu.vector_store %arg14[%c0_149, %c0_150], %633 {strides = array<i32>} : memref<2x128xf32, #tpu.memory_space<vmem>>, vector<2x128xf32>,
      %cst_151 = arith.constant 0.000000e+00 : f32
      %635 = vector.broadcast %cst_151 : f32 to vector<2x128xf32>
      %c0_152 = arith.constant 0 : index
      %c0_153 = arith.constant 0 : index
      %636 = vector.load %arg15[%c0_152, %c0_153] : memref<2x128xf32, #tpu.memory_space<vmem>>, vector<2x128xf32>
      tpu.vector_store %arg15[%c0_152, %c0_153], %635 {strides = array<i32>} : memref<2x128xf32, #tpu.memory_space<vmem>>, vector<2x128xf32>,
    } else {
    }
    %c0 = arith.constant 0 : index
    %c0_1 = arith.constant 0 : index
    %3 = vector.load %arg3[%c0, %c0_1] : memref<4x512xf32, #tpu.memory_space<vmem>>, vector<4x512xf32>
    %c0_2 = arith.constant 0 : index
    %c0_3 = arith.constant 0 : index
    %4 = vector.load %arg5[%c0_2, %c0_3] : memref<128x512xbf16, #tpu.memory_space<vmem>>, vector<128x512xbf16>
    %c0_4 = arith.constant 0 : index
    %c0_5 = arith.constant 0 : index
    %5 = vector.load %arg6[%c0_4, %c0_5] : memref<128x384xbf16, #tpu.memory_space<vmem>>, vector<128x384xbf16>
    %c0_6 = arith.constant 0 : index
    %c0_7 = arith.constant 0 : index
    %6 = vector.load %arg7[%c0_6, %c0_7] : memref<128x384xbf16, #tpu.memory_space<vmem>>, vector<128x384xbf16>
    %c0_8 = arith.constant 0 : index
    %c0_9 = arith.constant 0 : index
    %7 = vector.load %arg4[%c0_8, %c0_9] : memref<1x512xf32, #tpu.memory_space<vmem>>, vector<1x512xf32>
    %8 = vector.shape_cast %7 : vector<1x512xf32> to vector<1x512xf32>
    %9 = vector.broadcast %8 : vector<1x512xf32> to vector<2x512xf32>
    %c0_10 = arith.constant 0 : index
    %c0_11 = arith.constant 0 : index
    %10 = vector.load %arg8[%c0_10, %c0_11] : memref<1x384xf32, #tpu.memory_space<vmem>>, vector<1x384xf32>
    %11 = vector.shape_cast %10 : vector<1x384xf32> to vector<1x384xf32>
    %12 = vector.broadcast %11 : vector<1x384xf32> to vector<2x384xf32>
    %c0_12 = arith.constant 0 : index
    %c0_13 = arith.constant 0 : index
    %13 = vector.load %arg9[%c0_12, %c0_13] : memref<1x384xf32, #tpu.memory_space<vmem>>, vector<1x384xf32>
    %14 = vector.shape_cast %13 : vector<1x384xf32> to vector<1x384xf32>
    %15 = vector.broadcast %14 : vector<1x384xf32> to vector<2x384xf32>
    %c0_14 = arith.constant 0 : index
    %c0_15 = arith.constant 0 : index
    %16 = vector.load %arg10[%c0_14, %c0_15] : memref<1x128xf32, #tpu.memory_space<vmem>>, vector<1x128xf32>
    %17 = vector.shape_cast %16 : vector<1x128xf32> to vector<1x128xf32>
    %18 = vector.broadcast %17 : vector<1x128xf32> to vector<2x128xf32>
    %19 = tpu.iota {dimensions = array<i32: 1>} : vector<2x8xi32>
    %c0_16 = arith.constant 0 : index
    %c0_17 = arith.constant 0 : index
    %20 = vector.load %arg13[%c0_16, %c0_17] : memref<2x128xf32, #tpu.memory_space<vmem>>, vector<2x128xf32>
    %c0_18 = arith.constant 0 : index
    %c0_19 = arith.constant 0 : index
    %21 = vector.load %arg14[%c0_18, %c0_19] : memref<2x128xf32, #tpu.memory_space<vmem>>, vector<2x128xf32>
    %c0_20 = arith.constant 0 : index
    %c0_21 = arith.constant 0 : index
    %22 = vector.load %arg15[%c0_20, %c0_21] : memref<2x128xf32, #tpu.memory_space<vmem>>, vector<2x128xf32>
    %cst = arith.constant 0.000000e+00 : f32
    %23 = vector.broadcast %cst : f32 to vector<2x8xf32>
    %c0_i32_22 = arith.constant 0 : i32
    %24 = arith.index_cast %c0_i32_22 : i32 to index
    %c0_23 = arith.constant 0 : index
    %c0_24 = arith.constant 0 : index
    %25 = vector.load %arg2[%24, %c0_23, %c0_24] : memref<8x2x4xf32, #tpu.memory_space<vmem>>, vector<1x2x4xf32>
    %26 = vector.shape_cast %25 : vector<1x2x4xf32> to vector<2x4xf32>
    %cst_25 = arith.constant dense<0.000000e+00> : vector<2x512xf32>
    %27 = tpu.matmul %26, %3, %cst_25 {dimension_numbers = #tpu.dot_dimension_numbers<[1], [0], [0], [1], [0, 0, 1, 1], [], []>} : vector<2x4xf32>, vector<4x512xf32>, vector<2x512xf32> -> vector<2x512xf32>
    %28 = arith.addf %9, %27 : vector<2x512xf32>
    %29 = arith.truncf %20 : vector<2x128xf32> to vector<2x128xbf16>
    %cst_26 = arith.constant dense<0.000000e+00> : vector<2x512xf32>
    %30 = tpu.matmul %29, %4, %cst_26 {dimension_numbers = #tpu.dot_dimension_numbers<[1], [0], [0], [1], [0, 0, 1, 1], [], []>} : vector<2x128xbf16>, vector<128x512xbf16>, vector<2x512xf32> -> vector<2x512xf32>
    %31 = arith.addf %28, %30 : vector<2x512xf32>
    %32 = vector.extract_strided_slice %31 {offsets = [0, 0], sizes = [2, 128], strides = [1, 1]} : vector<2x512xf32> to vector<2x128xf32>
    %33 = arith.negf %32 : vector<2x128xf32>
    %34 = math.exp %33 : vector<2x128xf32>
    %cst_27 = arith.constant 1.000000e+00 : f32
    %35 = vector.broadcast %cst_27 : f32 to vector<2x128xf32>
    %36 = arith.addf %35, %34 : vector<2x128xf32>
    %37 = arith.divf %35, %36 : vector<2x128xf32>
    %38 = vector.extract_strided_slice %31 {offsets = [0, 128], sizes = [2, 128], strides = [1, 1]} : vector<2x512xf32> to vector<2x128xf32>
    %39 = arith.negf %38 : vector<2x128xf32>
    %40 = math.exp %39 : vector<2x128xf32>
    %cst_28 = arith.constant 1.000000e+00 : f32
    %41 = vector.broadcast %cst_28 : f32 to vector<2x128xf32>
    %42 = arith.addf %41, %40 : vector<2x128xf32>
    %43 = arith.divf %41, %42 : vector<2x128xf32>
    %44 = vector.extract_strided_slice %31 {offsets = [0, 256], sizes = [2, 128], strides = [1, 1]} : vector<2x512xf32> to vector<2x128xf32>
    %45 = math.tanh %44 : vector<2x128xf32>
    %46 = vector.extract_strided_slice %31 {offsets = [0, 384], sizes = [2, 128], strides = [1, 1]} : vector<2x512xf32> to vector<2x128xf32>
    %47 = arith.negf %46 : vector<2x128xf32>
    %48 = math.exp %47 : vector<2x128xf32>
    %cst_29 = arith.constant 1.000000e+00 : f32
    %49 = vector.broadcast %cst_29 : f32 to vector<2x128xf32>
    %50 = arith.addf %49, %48 : vector<2x128xf32>
    %51 = arith.divf %49, %50 : vector<2x128xf32>
    %52 = arith.mulf %43, %21 : vector<2x128xf32>
    %53 = arith.mulf %37, %45 : vector<2x128xf32>
    %54 = arith.addf %52, %53 : vector<2x128xf32>
    %55 = math.tanh %54 : vector<2x128xf32>
    %56 = arith.mulf %51, %55 : vector<2x128xf32>
    %57 = arith.truncf %56 : vector<2x128xf32> to vector<2x128xbf16>
    %cst_30 = arith.constant dense<0.000000e+00> : vector<2x384xf32>
    %58 = tpu.matmul %57, %5, %cst_30 {dimension_numbers = #tpu.dot_dimension_numbers<[1], [0], [0], [1], [0, 0, 1, 1], [], []>} : vector<2x128xbf16>, vector<128x384xbf16>, vector<2x384xf32> -> vector<2x384xf32>
    %59 = arith.addf %12, %58 : vector<2x384xf32>
    %60 = arith.truncf %22 : vector<2x128xf32> to vector<2x128xbf16>
    %cst_31 = arith.constant dense<0.000000e+00> : vector<2x384xf32>
    %61 = tpu.matmul %60, %6, %cst_31 {dimension_numbers = #tpu.dot_dimension_numbers<[1], [0], [0], [1], [0, 0, 1, 1], [], []>} : vector<2x128xbf16>, vector<128x384xbf16>, vector<2x384xf32> -> vector<2x384xf32>
    %62 = arith.addf %15, %61 : vector<2x384xf32>
    %63 = vector.extract_strided_slice %59 {offsets = [0, 0], sizes = [2, 128], strides = [1, 1]} : vector<2x384xf32> to vector<2x128xf32>
    %64 = vector.extract_strided_slice %62 {offsets = [0, 0], sizes = [2, 128], strides = [1, 1]} : vector<2x384xf32> to vector<2x128xf32>
    %65 = arith.addf %63, %64 : vector<2x128xf32>
    %66 = arith.negf %65 : vector<2x128xf32>
    %67 = math.exp %66 : vector<2x128xf32>
    %cst_32 = arith.constant 1.000000e+00 : f32
    %68 = vector.broadcast %cst_32 : f32 to vector<2x128xf32>
    %69 = arith.addf %68, %67 : vector<2x128xf32>
    %70 = arith.divf %68, %69 : vector<2x128xf32>
    %71 = vector.extract_strided_slice %59 {offsets = [0, 128], sizes = [2, 128], strides = [1, 1]} : vector<2x384xf32> to vector<2x128xf32>
    %72 = vector.extract_strided_slice %62 {offsets = [0, 128], sizes = [2, 128], strides = [1, 1]} : vector<2x384xf32> to vector<2x128xf32>
    %73 = arith.addf %71, %72 : vector<2x128xf32>
    %74 = arith.negf %73 : vector<2x128xf32>
    %75 = math.exp %74 : vector<2x128xf32>
    %cst_33 = arith.constant 1.000000e+00 : f32
    %76 = vector.broadcast %cst_33 : f32 to vector<2x128xf32>
    %77 = arith.addf %76, %75 : vector<2x128xf32>
    %78 = arith.divf %76, %77 : vector<2x128xf32>
    %79 = vector.extract_strided_slice %59 {offsets = [0, 256], sizes = [2, 128], strides = [1, 1]} : vector<2x384xf32> to vector<2x128xf32>
    %80 = vector.extract_strided_slice %62 {offsets = [0, 256], sizes = [2, 128], strides = [1, 1]} : vector<2x384xf32> to vector<2x128xf32>
    %81 = arith.mulf %70, %80 : vector<2x128xf32>
    %82 = arith.addf %79, %81 : vector<2x128xf32>
    %83 = math.tanh %82 : vector<2x128xf32>
    %cst_34 = arith.constant 1.000000e+00 : f32
    %84 = vector.broadcast %cst_34 : f32 to vector<2x128xf32>
    %85 = arith.subf %84, %78 : vector<2x128xf32>
    %86 = arith.mulf %85, %83 : vector<2x128xf32>
    %87 = arith.mulf %78, %22 : vector<2x128xf32>
    %88 = arith.addf %86, %87 : vector<2x128xf32>
    %cst_35 = arith.constant 0.000000e+00 : f32
    %89 = vector.broadcast %cst_35 : f32 to vector<2x128xf32>
    %90 = arith.maximumf %88, %89 : vector<2x128xf32>
    %91 = arith.mulf %90, %18 : vector<2x128xf32>
    %cst_36 = arith.constant dense<0.000000e+00> : vector<2xf32>
    %92 = vector.multi_reduction <add>, %91, %cst_36 [1] : vector<2x128xf32> to vector<2xf32>
    %93 = vector.shape_cast %92 : vector<2xf32> to vector<2x1xf32>
    %94 = vector.broadcast %c0_i32_22 : i32 to vector<2x8xi32>
    %95 = arith.cmpi eq, %19, %94 : vector<2x8xi32>
    %96 = vector.shape_cast %93 : vector<2x1xf32> to vector<2x1xf32>
    %97 = vector.broadcast %96 : vector<2x1xf32> to vector<2x8xf32>
    %98 = arith.select %95, %97, %23 : vector<2x8xi1>, vector<2x8xf32>
    %c1_i32 = arith.constant 1 : i32
    %99 = arith.index_cast %c1_i32 : i32 to index
    %c0_37 = arith.constant 0 : index
    %c0_38 = arith.constant 0 : index
    %100 = vector.load %arg2[%99, %c0_37, %c0_38] : memref<8x2x4xf32, #tpu.memory_space<vmem>>, vector<1x2x4xf32>
    %101 = vector.shape_cast %100 : vector<1x2x4xf32> to vector<2x4xf32>
    %cst_39 = arith.constant dense<0.000000e+00> : vector<2x512xf32>
    %102 = tpu.matmul %101, %3, %cst_39 {dimension_numbers = #tpu.dot_dimension_numbers<[1], [0], [0], [1], [0, 0, 1, 1], [], []>} : vector<2x4xf32>, vector<4x512xf32>, vector<2x512xf32> -> vector<2x512xf32>
    %103 = arith.addf %9, %102 : vector<2x512xf32>
    %104 = arith.truncf %56 : vector<2x128xf32> to vector<2x128xbf16>
    %cst_40 = arith.constant dense<0.000000e+00> : vector<2x512xf32>
    %105 = tpu.matmul %104, %4, %cst_40 {dimension_numbers = #tpu.dot_dimension_numbers<[1], [0], [0], [1], [0, 0, 1, 1], [], []>} : vector<2x128xbf16>, vector<128x512xbf16>, vector<2x512xf32> -> vector<2x512xf32>
    %106 = arith.addf %103, %105 : vector<2x512xf32>
    %107 = vector.extract_strided_slice %106 {offsets = [0, 0], sizes = [2, 128], strides = [1, 1]} : vector<2x512xf32> to vector<2x128xf32>
    %108 = arith.negf %107 : vector<2x128xf32>
    %109 = math.exp %108 : vector<2x128xf32>
    %cst_41 = arith.constant 1.000000e+00 : f32
    %110 = vector.broadcast %cst_41 : f32 to vector<2x128xf32>
    %111 = arith.addf %110, %109 : vector<2x128xf32>
    %112 = arith.divf %110, %111 : vector<2x128xf32>
    %113 = vector.extract_strided_slice %106 {offsets = [0, 128], sizes = [2, 128], strides = [1, 1]} : vector<2x512xf32> to vector<2x128xf32>
    %114 = arith.negf %113 : vector<2x128xf32>
    %115 = math.exp %114 : vector<2x128xf32>
    %cst_42 = arith.constant 1.000000e+00 : f32
    %116 = vector.broadcast %cst_42 : f32 to vector<2x128xf32>
    %117 = arith.addf %116, %115 : vector<2x128xf32>
    %118 = arith.divf %116, %117 : vector<2x128xf32>
    %119 = vector.extract_strided_slice %106 {offsets = [0, 256], sizes = [2, 128], strides = [1, 1]} : vector<2x512xf32> to vector<2x128xf32>
    %120 = math.tanh %119 : vector<2x128xf32>
    %121 = vector.extract_strided_slice %106 {offsets = [0, 384], sizes = [2, 128], strides = [1, 1]} : vector<2x512xf32> to vector<2x128xf32>
    %122 = arith.negf %121 : vector<2x128xf32>
    %123 = math.exp %122 : vector<2x128xf32>
    %cst_43 = arith.constant 1.000000e+00 : f32
    %124 = vector.broadcast %cst_43 : f32 to vector<2x128xf32>
    %125 = arith.addf %124, %123 : vector<2x128xf32>
    %126 = arith.divf %124, %125 : vector<2x128xf32>
    %127 = arith.mulf %118, %54 : vector<2x128xf32>
    %128 = arith.mulf %112, %120 : vector<2x128xf32>
    %129 = arith.addf %127, %128 : vector<2x128xf32>
    %130 = math.tanh %129 : vector<2x128xf32>
    %131 = arith.mulf %126, %130 : vector<2x128xf32>
    %132 = arith.truncf %131 : vector<2x128xf32> to vector<2x128xbf16>
    %cst_44 = arith.constant dense<0.000000e+00> : vector<2x384xf32>
    %133 = tpu.matmul %132, %5, %cst_44 {dimension_numbers = #tpu.dot_dimension_numbers<[1], [0], [0], [1], [0, 0, 1, 1], [], []>} : vector<2x128xbf16>, vector<128x384xbf16>, vector<2x384xf32> -> vector<2x384xf32>
    %134 = arith.addf %12, %133 : vector<2x384xf32>
    %135 = arith.truncf %88 : vector<2x128xf32> to vector<2x128xbf16>
    %cst_45 = arith.constant dense<0.000000e+00> : vector<2x384xf32>
    %136 = tpu.matmul %135, %6, %cst_45 {dimension_numbers = #tpu.dot_dimension_numbers<[1], [0], [0], [1], [0, 0, 1, 1], [], []>} : vector<2x128xbf16>, vector<128x384xbf16>, vector<2x384xf32> -> vector<2x384xf32>
    %137 = arith.addf %15, %136 : vector<2x384xf32>
    %138 = vector.extract_strided_slice %134 {offsets = [0, 0], sizes = [2, 128], strides = [1, 1]} : vector<2x384xf32> to vector<2x128xf32>
    %139 = vector.extract_strided_slice %137 {offsets = [0, 0], sizes = [2, 128], strides = [1, 1]} : vector<2x384xf32> to vector<2x128xf32>
    %140 = arith.addf %138, %139 : vector<2x128xf32>
    %141 = arith.negf %140 : vector<2x128xf32>
    %142 = math.exp %141 : vector<2x128xf32>
    %cst_46 = arith.constant 1.000000e+00 : f32
    %143 = vector.broadcast %cst_46 : f32 to vector<2x128xf32>
    %144 = arith.addf %143, %142 : vector<2x128xf32>
    %145 = arith.divf %143, %144 : vector<2x128xf32>
    %146 = vector.extract_strided_slice %134 {offsets = [0, 128], sizes = [2, 128], strides = [1, 1]} : vector<2x384xf32> to vector<2x128xf32>
    %147 = vector.extract_strided_slice %137 {offsets = [0, 128], sizes = [2, 128], strides = [1, 1]} : vector<2x384xf32> to vector<2x128xf32>
    %148 = arith.addf %146, %147 : vector<2x128xf32>
    %149 = arith.negf %148 : vector<2x128xf32>
    %150 = math.exp %149 : vector<2x128xf32>
    %cst_47 = arith.constant 1.000000e+00 : f32
    %151 = vector.broadcast %cst_47 : f32 to vector<2x128xf32>
    %152 = arith.addf %151, %150 : vector<2x128xf32>
    %153 = arith.divf %151, %152 : vector<2x128xf32>
    %154 = vector.extract_strided_slice %134 {offsets = [0, 256], sizes = [2, 128], strides = [1, 1]} : vector<2x384xf32> to vector<2x128xf32>
    %155 = vector.extract_strided_slice %137 {offsets = [0, 256], sizes = [2, 128], strides = [1, 1]} : vector<2x384xf32> to vector<2x128xf32>
    %156 = arith.mulf %145, %155 : vector<2x128xf32>
    %157 = arith.addf %154, %156 : vector<2x128xf32>
    %158 = math.tanh %157 : vector<2x128xf32>
    %cst_48 = arith.constant 1.000000e+00 : f32
    %159 = vector.broadcast %cst_48 : f32 to vector<2x128xf32>
    %160 = arith.subf %159, %153 : vector<2x128xf32>
    %161 = arith.mulf %160, %158 : vector<2x128xf32>
    %162 = arith.mulf %153, %88 : vector<2x128xf32>
    %163 = arith.addf %161, %162 : vector<2x128xf32>
    %cst_49 = arith.constant 0.000000e+00 : f32
    %164 = vector.broadcast %cst_49 : f32 to vector<2x128xf32>
    %165 = arith.maximumf %163, %164 : vector<2x128xf32>
    %166 = arith.mulf %165, %18 : vector<2x128xf32>
    %cst_50 = arith.constant dense<0.000000e+00> : vector<2xf32>
    %167 = vector.multi_reduction <add>, %166, %cst_50 [1] : vector<2x128xf32> to vector<2xf32>
    %168 = vector.shape_cast %167 : vector<2xf32> to vector<2x1xf32>
    %169 = vector.broadcast %c1_i32 : i32 to vector<2x8xi32>
    %170 = arith.cmpi eq, %19, %169 : vector<2x8xi32>
    %171 = vector.shape_cast %168 : vector<2x1xf32> to vector<2x1xf32>
    %172 = vector.broadcast %171 : vector<2x1xf32> to vector<2x8xf32>
    %173 = arith.select %170, %172, %98 : vector<2x8xi1>, vector<2x8xf32>
    %c2_i32 = arith.constant 2 : i32
    %174 = arith.index_cast %c2_i32 : i32 to index
    %c0_51 = arith.constant 0 : index
    %c0_52 = arith.constant 0 : index
    %175 = vector.load %arg2[%174, %c0_51, %c0_52] : memref<8x2x4xf32, #tpu.memory_space<vmem>>, vector<1x2x4xf32>
    %176 = vector.shape_cast %175 : vector<1x2x4xf32> to vector<2x4xf32>
    %cst_53 = arith.constant dense<0.000000e+00> : vector<2x512xf32>
    %177 = tpu.matmul %176, %3, %cst_53 {dimension_numbers = #tpu.dot_dimension_numbers<[1], [0], [0], [1], [0, 0, 1, 1], [], []>} : vector<2x4xf32>, vector<4x512xf32>, vector<2x512xf32> -> vector<2x512xf32>
    %178 = arith.addf %9, %177 : vector<2x512xf32>
    %179 = arith.truncf %131 : vector<2x128xf32> to vector<2x128xbf16>
    %cst_54 = arith.constant dense<0.000000e+00> : vector<2x512xf32>
    %180 = tpu.matmul %179, %4, %cst_54 {dimension_numbers = #tpu.dot_dimension_numbers<[1], [0], [0], [1], [0, 0, 1, 1], [], []>} : vector<2x128xbf16>, vector<128x512xbf16>, vector<2x512xf32> -> vector<2x512xf32>
    %181 = arith.addf %178, %180 : vector<2x512xf32>
    %182 = vector.extract_strided_slice %181 {offsets = [0, 0], sizes = [2, 128], strides = [1, 1]} : vector<2x512xf32> to vector<2x128xf32>
    %183 = arith.negf %182 : vector<2x128xf32>
    %184 = math.exp %183 : vector<2x128xf32>
    %cst_55 = arith.constant 1.000000e+00 : f32
    %185 = vector.broadcast %cst_55 : f32 to vector<2x128xf32>
    %186 = arith.addf %185, %184 : vector<2x128xf32>
    %187 = arith.divf %185, %186 : vector<2x128xf32>
    %188 = vector.extract_strided_slice %181 {offsets = [0, 128], sizes = [2, 128], strides = [1, 1]} : vector<2x512xf32> to vector<2x128xf32>
    %189 = arith.negf %188 : vector<2x128xf32>
    %190 = math.exp %189 : vector<2x128xf32>
    %cst_56 = arith.constant 1.000000e+00 : f32
    %191 = vector.broadcast %cst_56 : f32 to vector<2x128xf32>
    %192 = arith.addf %191, %190 : vector<2x128xf32>
    %193 = arith.divf %191, %192 : vector<2x128xf32>
    %194 = vector.extract_strided_slice %181 {offsets = [0, 256], sizes = [2, 128], strides = [1, 1]} : vector<2x512xf32> to vector<2x128xf32>
    %195 = math.tanh %194 : vector<2x128xf32>
    %196 = vector.extract_strided_slice %181 {offsets = [0, 384], sizes = [2, 128], strides = [1, 1]} : vector<2x512xf32> to vector<2x128xf32>
    %197 = arith.negf %196 : vector<2x128xf32>
    %198 = math.exp %197 : vector<2x128xf32>
    %cst_57 = arith.constant 1.000000e+00 : f32
    %199 = vector.broadcast %cst_57 : f32 to vector<2x128xf32>
    %200 = arith.addf %199, %198 : vector<2x128xf32>
    %201 = arith.divf %199, %200 : vector<2x128xf32>
    %202 = arith.mulf %193, %129 : vector<2x128xf32>
    %203 = arith.mulf %187, %195 : vector<2x128xf32>
    %204 = arith.addf %202, %203 : vector<2x128xf32>
    %205 = math.tanh %204 : vector<2x128xf32>
    %206 = arith.mulf %201, %205 : vector<2x128xf32>
    %207 = arith.truncf %206 : vector<2x128xf32> to vector<2x128xbf16>
    %cst_58 = arith.constant dense<0.000000e+00> : vector<2x384xf32>
    %208 = tpu.matmul %207, %5, %cst_58 {dimension_numbers = #tpu.dot_dimension_numbers<[1], [0], [0], [1], [0, 0, 1, 1], [], []>} : vector<2x128xbf16>, vector<128x384xbf16>, vector<2x384xf32> -> vector<2x384xf32>
    %209 = arith.addf %12, %208 : vector<2x384xf32>
    %210 = arith.truncf %163 : vector<2x128xf32> to vector<2x128xbf16>
    %cst_59 = arith.constant dense<0.000000e+00> : vector<2x384xf32>
    %211 = tpu.matmul %210, %6, %cst_59 {dimension_numbers = #tpu.dot_dimension_numbers<[1], [0], [0], [1], [0, 0, 1, 1], [], []>} : vector<2x128xbf16>, vector<128x384xbf16>, vector<2x384xf32> -> vector<2x384xf32>
    %212 = arith.addf %15, %211 : vector<2x384xf32>
    %213 = vector.extract_strided_slice %209 {offsets = [0, 0], sizes = [2, 128], strides = [1, 1]} : vector<2x384xf32> to vector<2x128xf32>
    %214 = vector.extract_strided_slice %212 {offsets = [0, 0], sizes = [2, 128], strides = [1, 1]} : vector<2x384xf32> to vector<2x128xf32>
    %215 = arith.addf %213, %214 : vector<2x128xf32>
    %216 = arith.negf %215 : vector<2x128xf32>
    %217 = math.exp %216 : vector<2x128xf32>
    %cst_60 = arith.constant 1.000000e+00 : f32
    %218 = vector.broadcast %cst_60 : f32 to vector<2x128xf32>
    %219 = arith.addf %218, %217 : vector<2x128xf32>
    %220 = arith.divf %218, %219 : vector<2x128xf32>
    %221 = vector.extract_strided_slice %209 {offsets = [0, 128], sizes = [2, 128], strides = [1, 1]} : vector<2x384xf32> to vector<2x128xf32>
    %222 = vector.extract_strided_slice %212 {offsets = [0, 128], sizes = [2, 128], strides = [1, 1]} : vector<2x384xf32> to vector<2x128xf32>
    %223 = arith.addf %221, %222 : vector<2x128xf32>
    %224 = arith.negf %223 : vector<2x128xf32>
    %225 = math.exp %224 : vector<2x128xf32>
    %cst_61 = arith.constant 1.000000e+00 : f32
    %226 = vector.broadcast %cst_61 : f32 to vector<2x128xf32>
    %227 = arith.addf %226, %225 : vector<2x128xf32>
    %228 = arith.divf %226, %227 : vector<2x128xf32>
    %229 = vector.extract_strided_slice %209 {offsets = [0, 256], sizes = [2, 128], strides = [1, 1]} : vector<2x384xf32> to vector<2x128xf32>
    %230 = vector.extract_strided_slice %212 {offsets = [0, 256], sizes = [2, 128], strides = [1, 1]} : vector<2x384xf32> to vector<2x128xf32>
    %231 = arith.mulf %220, %230 : vector<2x128xf32>
    %232 = arith.addf %229, %231 : vector<2x128xf32>
    %233 = math.tanh %232 : vector<2x128xf32>
    %cst_62 = arith.constant 1.000000e+00 : f32
    %234 = vector.broadcast %cst_62 : f32 to vector<2x128xf32>
    %235 = arith.subf %234, %228 : vector<2x128xf32>
    %236 = arith.mulf %235, %233 : vector<2x128xf32>
    %237 = arith.mulf %228, %163 : vector<2x128xf32>
    %238 = arith.addf %236, %237 : vector<2x128xf32>
    %cst_63 = arith.constant 0.000000e+00 : f32
    %239 = vector.broadcast %cst_63 : f32 to vector<2x128xf32>
    %240 = arith.maximumf %238, %239 : vector<2x128xf32>
    %241 = arith.mulf %240, %18 : vector<2x128xf32>
    %cst_64 = arith.constant dense<0.000000e+00> : vector<2xf32>
    %242 = vector.multi_reduction <add>, %241, %cst_64 [1] : vector<2x128xf32> to vector<2xf32>
    %243 = vector.shape_cast %242 : vector<2xf32> to vector<2x1xf32>
    %244 = vector.broadcast %c2_i32 : i32 to vector<2x8xi32>
    %245 = arith.cmpi eq, %19, %244 : vector<2x8xi32>
    %246 = vector.shape_cast %243 : vector<2x1xf32> to vector<2x1xf32>
    %247 = vector.broadcast %246 : vector<2x1xf32> to vector<2x8xf32>
    %248 = arith.select %245, %247, %173 : vector<2x8xi1>, vector<2x8xf32>
    %c3_i32 = arith.constant 3 : i32
    %249 = arith.index_cast %c3_i32 : i32 to index
    %c0_65 = arith.constant 0 : index
    %c0_66 = arith.constant 0 : index
    %250 = vector.load %arg2[%249, %c0_65, %c0_66] : memref<8x2x4xf32, #tpu.memory_space<vmem>>, vector<1x2x4xf32>
    %251 = vector.shape_cast %250 : vector<1x2x4xf32> to vector<2x4xf32>
    %cst_67 = arith.constant dense<0.000000e+00> : vector<2x512xf32>
    %252 = tpu.matmul %251, %3, %cst_67 {dimension_numbers = #tpu.dot_dimension_numbers<[1], [0], [0], [1], [0, 0, 1, 1], [], []>} : vector<2x4xf32>, vector<4x512xf32>, vector<2x512xf32> -> vector<2x512xf32>
    %253 = arith.addf %9, %252 : vector<2x512xf32>
    %254 = arith.truncf %206 : vector<2x128xf32> to vector<2x128xbf16>
    %cst_68 = arith.constant dense<0.000000e+00> : vector<2x512xf32>
    %255 = tpu.matmul %254, %4, %cst_68 {dimension_numbers = #tpu.dot_dimension_numbers<[1], [0], [0], [1], [0, 0, 1, 1], [], []>} : vector<2x128xbf16>, vector<128x512xbf16>, vector<2x512xf32> -> vector<2x512xf32>
    %256 = arith.addf %253, %255 : vector<2x512xf32>
    %257 = vector.extract_strided_slice %256 {offsets = [0, 0], sizes = [2, 128], strides = [1, 1]} : vector<2x512xf32> to vector<2x128xf32>
    %258 = arith.negf %257 : vector<2x128xf32>
    %259 = math.exp %258 : vector<2x128xf32>
    %cst_69 = arith.constant 1.000000e+00 : f32
    %260 = vector.broadcast %cst_69 : f32 to vector<2x128xf32>
    %261 = arith.addf %260, %259 : vector<2x128xf32>
    %262 = arith.divf %260, %261 : vector<2x128xf32>
    %263 = vector.extract_strided_slice %256 {offsets = [0, 128], sizes = [2, 128], strides = [1, 1]} : vector<2x512xf32> to vector<2x128xf32>
    %264 = arith.negf %263 : vector<2x128xf32>
    %265 = math.exp %264 : vector<2x128xf32>
    %cst_70 = arith.constant 1.000000e+00 : f32
    %266 = vector.broadcast %cst_70 : f32 to vector<2x128xf32>
    %267 = arith.addf %266, %265 : vector<2x128xf32>
    %268 = arith.divf %266, %267 : vector<2x128xf32>
    %269 = vector.extract_strided_slice %256 {offsets = [0, 256], sizes = [2, 128], strides = [1, 1]} : vector<2x512xf32> to vector<2x128xf32>
    %270 = math.tanh %269 : vector<2x128xf32>
    %271 = vector.extract_strided_slice %256 {offsets = [0, 384], sizes = [2, 128], strides = [1, 1]} : vector<2x512xf32> to vector<2x128xf32>
    %272 = arith.negf %271 : vector<2x128xf32>
    %273 = math.exp %272 : vector<2x128xf32>
    %cst_71 = arith.constant 1.000000e+00 : f32
    %274 = vector.broadcast %cst_71 : f32 to vector<2x128xf32>
    %275 = arith.addf %274, %273 : vector<2x128xf32>
    %276 = arith.divf %274, %275 : vector<2x128xf32>
    %277 = arith.mulf %268, %204 : vector<2x128xf32>
    %278 = arith.mulf %262, %270 : vector<2x128xf32>
    %279 = arith.addf %277, %278 : vector<2x128xf32>
    %280 = math.tanh %279 : vector<2x128xf32>
    %281 = arith.mulf %276, %280 : vector<2x128xf32>
    %282 = arith.truncf %281 : vector<2x128xf32> to vector<2x128xbf16>
    %cst_72 = arith.constant dense<0.000000e+00> : vector<2x384xf32>
    %283 = tpu.matmul %282, %5, %cst_72 {dimension_numbers = #tpu.dot_dimension_numbers<[1], [0], [0], [1], [0, 0, 1, 1], [], []>} : vector<2x128xbf16>, vector<128x384xbf16>, vector<2x384xf32> -> vector<2x384xf32>
    %284 = arith.addf %12, %283 : vector<2x384xf32>
    %285 = arith.truncf %238 : vector<2x128xf32> to vector<2x128xbf16>
    %cst_73 = arith.constant dense<0.000000e+00> : vector<2x384xf32>
    %286 = tpu.matmul %285, %6, %cst_73 {dimension_numbers = #tpu.dot_dimension_numbers<[1], [0], [0], [1], [0, 0, 1, 1], [], []>} : vector<2x128xbf16>, vector<128x384xbf16>, vector<2x384xf32> -> vector<2x384xf32>
    %287 = arith.addf %15, %286 : vector<2x384xf32>
    %288 = vector.extract_strided_slice %284 {offsets = [0, 0], sizes = [2, 128], strides = [1, 1]} : vector<2x384xf32> to vector<2x128xf32>
    %289 = vector.extract_strided_slice %287 {offsets = [0, 0], sizes = [2, 128], strides = [1, 1]} : vector<2x384xf32> to vector<2x128xf32>
    %290 = arith.addf %288, %289 : vector<2x128xf32>
    %291 = arith.negf %290 : vector<2x128xf32>
    %292 = math.exp %291 : vector<2x128xf32>
    %cst_74 = arith.constant 1.000000e+00 : f32
    %293 = vector.broadcast %cst_74 : f32 to vector<2x128xf32>
    %294 = arith.addf %293, %292 : vector<2x128xf32>
    %295 = arith.divf %293, %294 : vector<2x128xf32>
    %296 = vector.extract_strided_slice %284 {offsets = [0, 128], sizes = [2, 128], strides = [1, 1]} : vector<2x384xf32> to vector<2x128xf32>
    %297 = vector.extract_strided_slice %287 {offsets = [0, 128], sizes = [2, 128], strides = [1, 1]} : vector<2x384xf32> to vector<2x128xf32>
    %298 = arith.addf %296, %297 : vector<2x128xf32>
    %299 = arith.negf %298 : vector<2x128xf32>
    %300 = math.exp %299 : vector<2x128xf32>
    %cst_75 = arith.constant 1.000000e+00 : f32
    %301 = vector.broadcast %cst_75 : f32 to vector<2x128xf32>
    %302 = arith.addf %301, %300 : vector<2x128xf32>
    %303 = arith.divf %301, %302 : vector<2x128xf32>
    %304 = vector.extract_strided_slice %284 {offsets = [0, 256], sizes = [2, 128], strides = [1, 1]} : vector<2x384xf32> to vector<2x128xf32>
    %305 = vector.extract_strided_slice %287 {offsets = [0, 256], sizes = [2, 128], strides = [1, 1]} : vector<2x384xf32> to vector<2x128xf32>
    %306 = arith.mulf %295, %305 : vector<2x128xf32>
    %307 = arith.addf %304, %306 : vector<2x128xf32>
    %308 = math.tanh %307 : vector<2x128xf32>
    %cst_76 = arith.constant 1.000000e+00 : f32
    %309 = vector.broadcast %cst_76 : f32 to vector<2x128xf32>
    %310 = arith.subf %309, %303 : vector<2x128xf32>
    %311 = arith.mulf %310, %308 : vector<2x128xf32>
    %312 = arith.mulf %303, %238 : vector<2x128xf32>
    %313 = arith.addf %311, %312 : vector<2x128xf32>
    %cst_77 = arith.constant 0.000000e+00 : f32
    %314 = vector.broadcast %cst_77 : f32 to vector<2x128xf32>
    %315 = arith.maximumf %313, %314 : vector<2x128xf32>
    %316 = arith.mulf %315, %18 : vector<2x128xf32>
    %cst_78 = arith.constant dense<0.000000e+00> : vector<2xf32>
    %317 = vector.multi_reduction <add>, %316, %cst_78 [1] : vector<2x128xf32> to vector<2xf32>
    %318 = vector.shape_cast %317 : vector<2xf32> to vector<2x1xf32>
    %319 = vector.broadcast %c3_i32 : i32 to vector<2x8xi32>
    %320 = arith.cmpi eq, %19, %319 : vector<2x8xi32>
    %321 = vector.shape_cast %318 : vector<2x1xf32> to vector<2x1xf32>
    %322 = vector.broadcast %321 : vector<2x1xf32> to vector<2x8xf32>
    %323 = arith.select %320, %322, %248 : vector<2x8xi1>, vector<2x8xf32>
    %c4_i32 = arith.constant 4 : i32
    %324 = arith.index_cast %c4_i32 : i32 to index
    %c0_79 = arith.constant 0 : index
    %c0_80 = arith.constant 0 : index
    %325 = vector.load %arg2[%324, %c0_79, %c0_80] : memref<8x2x4xf32, #tpu.memory_space<vmem>>, vector<1x2x4xf32>
    %326 = vector.shape_cast %325 : vector<1x2x4xf32> to vector<2x4xf32>
    %cst_81 = arith.constant dense<0.000000e+00> : vector<2x512xf32>
    %327 = tpu.matmul %326, %3, %cst_81 {dimension_numbers = #tpu.dot_dimension_numbers<[1], [0], [0], [1], [0, 0, 1, 1], [], []>} : vector<2x4xf32>, vector<4x512xf32>, vector<2x512xf32> -> vector<2x512xf32>
    %328 = arith.addf %9, %327 : vector<2x512xf32>
    %329 = arith.truncf %281 : vector<2x128xf32> to vector<2x128xbf16>
    %cst_82 = arith.constant dense<0.000000e+00> : vector<2x512xf32>
    %330 = tpu.matmul %329, %4, %cst_82 {dimension_numbers = #tpu.dot_dimension_numbers<[1], [0], [0], [1], [0, 0, 1, 1], [], []>} : vector<2x128xbf16>, vector<128x512xbf16>, vector<2x512xf32> -> vector<2x512xf32>
    %331 = arith.addf %328, %330 : vector<2x512xf32>
    %332 = vector.extract_strided_slice %331 {offsets = [0, 0], sizes = [2, 128], strides = [1, 1]} : vector<2x512xf32> to vector<2x128xf32>
    %333 = arith.negf %332 : vector<2x128xf32>
    %334 = math.exp %333 : vector<2x128xf32>
    %cst_83 = arith.constant 1.000000e+00 : f32
    %335 = vector.broadcast %cst_83 : f32 to vector<2x128xf32>
    %336 = arith.addf %335, %334 : vector<2x128xf32>
    %337 = arith.divf %335, %336 : vector<2x128xf32>
    %338 = vector.extract_strided_slice %331 {offsets = [0, 128], sizes = [2, 128], strides = [1, 1]} : vector<2x512xf32> to vector<2x128xf32>
    %339 = arith.negf %338 : vector<2x128xf32>
    %340 = math.exp %339 : vector<2x128xf32>
    %cst_84 = arith.constant 1.000000e+00 : f32
    %341 = vector.broadcast %cst_84 : f32 to vector<2x128xf32>
    %342 = arith.addf %341, %340 : vector<2x128xf32>
    %343 = arith.divf %341, %342 : vector<2x128xf32>
    %344 = vector.extract_strided_slice %331 {offsets = [0, 256], sizes = [2, 128], strides = [1, 1]} : vector<2x512xf32> to vector<2x128xf32>
    %345 = math.tanh %344 : vector<2x128xf32>
    %346 = vector.extract_strided_slice %331 {offsets = [0, 384], sizes = [2, 128], strides = [1, 1]} : vector<2x512xf32> to vector<2x128xf32>
    %347 = arith.negf %346 : vector<2x128xf32>
    %348 = math.exp %347 : vector<2x128xf32>
    %cst_85 = arith.constant 1.000000e+00 : f32
    %349 = vector.broadcast %cst_85 : f32 to vector<2x128xf32>
    %350 = arith.addf %349, %348 : vector<2x128xf32>
    %351 = arith.divf %349, %350 : vector<2x128xf32>
    %352 = arith.mulf %343, %279 : vector<2x128xf32>
    %353 = arith.mulf %337, %345 : vector<2x128xf32>
    %354 = arith.addf %352, %353 : vector<2x128xf32>
    %355 = math.tanh %354 : vector<2x128xf32>
    %356 = arith.mulf %351, %355 : vector<2x128xf32>
    %357 = arith.truncf %356 : vector<2x128xf32> to vector<2x128xbf16>
    %cst_86 = arith.constant dense<0.000000e+00> : vector<2x384xf32>
    %358 = tpu.matmul %357, %5, %cst_86 {dimension_numbers = #tpu.dot_dimension_numbers<[1], [0], [0], [1], [0, 0, 1, 1], [], []>} : vector<2x128xbf16>, vector<128x384xbf16>, vector<2x384xf32> -> vector<2x384xf32>
    %359 = arith.addf %12, %358 : vector<2x384xf32>
    %360 = arith.truncf %313 : vector<2x128xf32> to vector<2x128xbf16>
    %cst_87 = arith.constant dense<0.000000e+00> : vector<2x384xf32>
    %361 = tpu.matmul %360, %6, %cst_87 {dimension_numbers = #tpu.dot_dimension_numbers<[1], [0], [0], [1], [0, 0, 1, 1], [], []>} : vector<2x128xbf16>, vector<128x384xbf16>, vector<2x384xf32> -> vector<2x384xf32>
    %362 = arith.addf %15, %361 : vector<2x384xf32>
    %363 = vector.extract_strided_slice %359 {offsets = [0, 0], sizes = [2, 128], strides = [1, 1]} : vector<2x384xf32> to vector<2x128xf32>
    %364 = vector.extract_strided_slice %362 {offsets = [0, 0], sizes = [2, 128], strides = [1, 1]} : vector<2x384xf32> to vector<2x128xf32>
    %365 = arith.addf %363, %364 : vector<2x128xf32>
    %366 = arith.negf %365 : vector<2x128xf32>
    %367 = math.exp %366 : vector<2x128xf32>
    %cst_88 = arith.constant 1.000000e+00 : f32
    %368 = vector.broadcast %cst_88 : f32 to vector<2x128xf32>
    %369 = arith.addf %368, %367 : vector<2x128xf32>
    %370 = arith.divf %368, %369 : vector<2x128xf32>
    %371 = vector.extract_strided_slice %359 {offsets = [0, 128], sizes = [2, 128], strides = [1, 1]} : vector<2x384xf32> to vector<2x128xf32>
    %372 = vector.extract_strided_slice %362 {offsets = [0, 128], sizes = [2, 128], strides = [1, 1]} : vector<2x384xf32> to vector<2x128xf32>
    %373 = arith.addf %371, %372 : vector<2x128xf32>
    %374 = arith.negf %373 : vector<2x128xf32>
    %375 = math.exp %374 : vector<2x128xf32>
    %cst_89 = arith.constant 1.000000e+00 : f32
    %376 = vector.broadcast %cst_89 : f32 to vector<2x128xf32>
    %377 = arith.addf %376, %375 : vector<2x128xf32>
    %378 = arith.divf %376, %377 : vector<2x128xf32>
    %379 = vector.extract_strided_slice %359 {offsets = [0, 256], sizes = [2, 128], strides = [1, 1]} : vector<2x384xf32> to vector<2x128xf32>
    %380 = vector.extract_strided_slice %362 {offsets = [0, 256], sizes = [2, 128], strides = [1, 1]} : vector<2x384xf32> to vector<2x128xf32>
    %381 = arith.mulf %370, %380 : vector<2x128xf32>
    %382 = arith.addf %379, %381 : vector<2x128xf32>
    %383 = math.tanh %382 : vector<2x128xf32>
    %cst_90 = arith.constant 1.000000e+00 : f32
    %384 = vector.broadcast %cst_90 : f32 to vector<2x128xf32>
    %385 = arith.subf %384, %378 : vector<2x128xf32>
    %386 = arith.mulf %385, %383 : vector<2x128xf32>
    %387 = arith.mulf %378, %313 : vector<2x128xf32>
    %388 = arith.addf %386, %387 : vector<2x128xf32>
    %cst_91 = arith.constant 0.000000e+00 : f32
    %389 = vector.broadcast %cst_91 : f32 to vector<2x128xf32>
    %390 = arith.maximumf %388, %389 : vector<2x128xf32>
    %391 = arith.mulf %390, %18 : vector<2x128xf32>
    %cst_92 = arith.constant dense<0.000000e+00> : vector<2xf32>
    %392 = vector.multi_reduction <add>, %391, %cst_92 [1] : vector<2x128xf32> to vector<2xf32>
    %393 = vector.shape_cast %392 : vector<2xf32> to vector<2x1xf32>
    %394 = vector.broadcast %c4_i32 : i32 to vector<2x8xi32>
    %395 = arith.cmpi eq, %19, %394 : vector<2x8xi32>
    %396 = vector.shape_cast %393 : vector<2x1xf32> to vector<2x1xf32>
    %397 = vector.broadcast %396 : vector<2x1xf32> to vector<2x8xf32>
    %398 = arith.select %395, %397, %323 : vector<2x8xi1>, vector<2x8xf32>
    %c5_i32 = arith.constant 5 : i32
    %399 = arith.index_cast %c5_i32 : i32 to index
    %c0_93 = arith.constant 0 : index
    %c0_94 = arith.constant 0 : index
    %400 = vector.load %arg2[%399, %c0_93, %c0_94] : memref<8x2x4xf32, #tpu.memory_space<vmem>>, vector<1x2x4xf32>
    %401 = vector.shape_cast %400 : vector<1x2x4xf32> to vector<2x4xf32>
    %cst_95 = arith.constant dense<0.000000e+00> : vector<2x512xf32>
    %402 = tpu.matmul %401, %3, %cst_95 {dimension_numbers = #tpu.dot_dimension_numbers<[1], [0], [0], [1], [0, 0, 1, 1], [], []>} : vector<2x4xf32>, vector<4x512xf32>, vector<2x512xf32> -> vector<2x512xf32>
    %403 = arith.addf %9, %402 : vector<2x512xf32>
    %404 = arith.truncf %356 : vector<2x128xf32> to vector<2x128xbf16>
    %cst_96 = arith.constant dense<0.000000e+00> : vector<2x512xf32>
    %405 = tpu.matmul %404, %4, %cst_96 {dimension_numbers = #tpu.dot_dimension_numbers<[1], [0], [0], [1], [0, 0, 1, 1], [], []>} : vector<2x128xbf16>, vector<128x512xbf16>, vector<2x512xf32> -> vector<2x512xf32>
    %406 = arith.addf %403, %405 : vector<2x512xf32>
    %407 = vector.extract_strided_slice %406 {offsets = [0, 0], sizes = [2, 128], strides = [1, 1]} : vector<2x512xf32> to vector<2x128xf32>
    %408 = arith.negf %407 : vector<2x128xf32>
    %409 = math.exp %408 : vector<2x128xf32>
    %cst_97 = arith.constant 1.000000e+00 : f32
    %410 = vector.broadcast %cst_97 : f32 to vector<2x128xf32>
    %411 = arith.addf %410, %409 : vector<2x128xf32>
    %412 = arith.divf %410, %411 : vector<2x128xf32>
    %413 = vector.extract_strided_slice %406 {offsets = [0, 128], sizes = [2, 128], strides = [1, 1]} : vector<2x512xf32> to vector<2x128xf32>
    %414 = arith.negf %413 : vector<2x128xf32>
    %415 = math.exp %414 : vector<2x128xf32>
    %cst_98 = arith.constant 1.000000e+00 : f32
    %416 = vector.broadcast %cst_98 : f32 to vector<2x128xf32>
    %417 = arith.addf %416, %415 : vector<2x128xf32>
    %418 = arith.divf %416, %417 : vector<2x128xf32>
    %419 = vector.extract_strided_slice %406 {offsets = [0, 256], sizes = [2, 128], strides = [1, 1]} : vector<2x512xf32> to vector<2x128xf32>
    %420 = math.tanh %419 : vector<2x128xf32>
    %421 = vector.extract_strided_slice %406 {offsets = [0, 384], sizes = [2, 128], strides = [1, 1]} : vector<2x512xf32> to vector<2x128xf32>
    %422 = arith.negf %421 : vector<2x128xf32>
    %423 = math.exp %422 : vector<2x128xf32>
    %cst_99 = arith.constant 1.000000e+00 : f32
    %424 = vector.broadcast %cst_99 : f32 to vector<2x128xf32>
    %425 = arith.addf %424, %423 : vector<2x128xf32>
    %426 = arith.divf %424, %425 : vector<2x128xf32>
    %427 = arith.mulf %418, %354 : vector<2x128xf32>
    %428 = arith.mulf %412, %420 : vector<2x128xf32>
    %429 = arith.addf %427, %428 : vector<2x128xf32>
    %430 = math.tanh %429 : vector<2x128xf32>
    %431 = arith.mulf %426, %430 : vector<2x128xf32>
    %432 = arith.truncf %431 : vector<2x128xf32> to vector<2x128xbf16>
    %cst_100 = arith.constant dense<0.000000e+00> : vector<2x384xf32>
    %433 = tpu.matmul %432, %5, %cst_100 {dimension_numbers = #tpu.dot_dimension_numbers<[1], [0], [0], [1], [0, 0, 1, 1], [], []>} : vector<2x128xbf16>, vector<128x384xbf16>, vector<2x384xf32> -> vector<2x384xf32>
    %434 = arith.addf %12, %433 : vector<2x384xf32>
    %435 = arith.truncf %388 : vector<2x128xf32> to vector<2x128xbf16>
    %cst_101 = arith.constant dense<0.000000e+00> : vector<2x384xf32>
    %436 = tpu.matmul %435, %6, %cst_101 {dimension_numbers = #tpu.dot_dimension_numbers<[1], [0], [0], [1], [0, 0, 1, 1], [], []>} : vector<2x128xbf16>, vector<128x384xbf16>, vector<2x384xf32> -> vector<2x384xf32>
    %437 = arith.addf %15, %436 : vector<2x384xf32>
    %438 = vector.extract_strided_slice %434 {offsets = [0, 0], sizes = [2, 128], strides = [1, 1]} : vector<2x384xf32> to vector<2x128xf32>
    %439 = vector.extract_strided_slice %437 {offsets = [0, 0], sizes = [2, 128], strides = [1, 1]} : vector<2x384xf32> to vector<2x128xf32>
    %440 = arith.addf %438, %439 : vector<2x128xf32>
    %441 = arith.negf %440 : vector<2x128xf32>
    %442 = math.exp %441 : vector<2x128xf32>
    %cst_102 = arith.constant 1.000000e+00 : f32
    %443 = vector.broadcast %cst_102 : f32 to vector<2x128xf32>
    %444 = arith.addf %443, %442 : vector<2x128xf32>
    %445 = arith.divf %443, %444 : vector<2x128xf32>
    %446 = vector.extract_strided_slice %434 {offsets = [0, 128], sizes = [2, 128], strides = [1, 1]} : vector<2x384xf32> to vector<2x128xf32>
    %447 = vector.extract_strided_slice %437 {offsets = [0, 128], sizes = [2, 128], strides = [1, 1]} : vector<2x384xf32> to vector<2x128xf32>
    %448 = arith.addf %446, %447 : vector<2x128xf32>
    %449 = arith.negf %448 : vector<2x128xf32>
    %450 = math.exp %449 : vector<2x128xf32>
    %cst_103 = arith.constant 1.000000e+00 : f32
    %451 = vector.broadcast %cst_103 : f32 to vector<2x128xf32>
    %452 = arith.addf %451, %450 : vector<2x128xf32>
    %453 = arith.divf %451, %452 : vector<2x128xf32>
    %454 = vector.extract_strided_slice %434 {offsets = [0, 256], sizes = [2, 128], strides = [1, 1]} : vector<2x384xf32> to vector<2x128xf32>
    %455 = vector.extract_strided_slice %437 {offsets = [0, 256], sizes = [2, 128], strides = [1, 1]} : vector<2x384xf32> to vector<2x128xf32>
    %456 = arith.mulf %445, %455 : vector<2x128xf32>
    %457 = arith.addf %454, %456 : vector<2x128xf32>
    %458 = math.tanh %457 : vector<2x128xf32>
    %cst_104 = arith.constant 1.000000e+00 : f32
    %459 = vector.broadcast %cst_104 : f32 to vector<2x128xf32>
    %460 = arith.subf %459, %453 : vector<2x128xf32>
    %461 = arith.mulf %460, %458 : vector<2x128xf32>
    %462 = arith.mulf %453, %388 : vector<2x128xf32>
    %463 = arith.addf %461, %462 : vector<2x128xf32>
    %cst_105 = arith.constant 0.000000e+00 : f32
    %464 = vector.broadcast %cst_105 : f32 to vector<2x128xf32>
    %465 = arith.maximumf %463, %464 : vector<2x128xf32>
    %466 = arith.mulf %465, %18 : vector<2x128xf32>
    %cst_106 = arith.constant dense<0.000000e+00> : vector<2xf32>
    %467 = vector.multi_reduction <add>, %466, %cst_106 [1] : vector<2x128xf32> to vector<2xf32>
    %468 = vector.shape_cast %467 : vector<2xf32> to vector<2x1xf32>
    %469 = vector.broadcast %c5_i32 : i32 to vector<2x8xi32>
    %470 = arith.cmpi eq, %19, %469 : vector<2x8xi32>
    %471 = vector.shape_cast %468 : vector<2x1xf32> to vector<2x1xf32>
    %472 = vector.broadcast %471 : vector<2x1xf32> to vector<2x8xf32>
    %473 = arith.select %470, %472, %398 : vector<2x8xi1>, vector<2x8xf32>
    %c6_i32 = arith.constant 6 : i32
    %474 = arith.index_cast %c6_i32 : i32 to index
    %c0_107 = arith.constant 0 : index
    %c0_108 = arith.constant 0 : index
    %475 = vector.load %arg2[%474, %c0_107, %c0_108] : memref<8x2x4xf32, #tpu.memory_space<vmem>>, vector<1x2x4xf32>
    %476 = vector.shape_cast %475 : vector<1x2x4xf32> to vector<2x4xf32>
    %cst_109 = arith.constant dense<0.000000e+00> : vector<2x512xf32>
    %477 = tpu.matmul %476, %3, %cst_109 {dimension_numbers = #tpu.dot_dimension_numbers<[1], [0], [0], [1], [0, 0, 1, 1], [], []>} : vector<2x4xf32>, vector<4x512xf32>, vector<2x512xf32> -> vector<2x512xf32>
    %478 = arith.addf %9, %477 : vector<2x512xf32>
    %479 = arith.truncf %431 : vector<2x128xf32> to vector<2x128xbf16>
    %cst_110 = arith.constant dense<0.000000e+00> : vector<2x512xf32>
    %480 = tpu.matmul %479, %4, %cst_110 {dimension_numbers = #tpu.dot_dimension_numbers<[1], [0], [0], [1], [0, 0, 1, 1], [], []>} : vector<2x128xbf16>, vector<128x512xbf16>, vector<2x512xf32> -> vector<2x512xf32>
    %481 = arith.addf %478, %480 : vector<2x512xf32>
    %482 = vector.extract_strided_slice %481 {offsets = [0, 0], sizes = [2, 128], strides = [1, 1]} : vector<2x512xf32> to vector<2x128xf32>
    %483 = arith.negf %482 : vector<2x128xf32>
    %484 = math.exp %483 : vector<2x128xf32>
    %cst_111 = arith.constant 1.000000e+00 : f32
    %485 = vector.broadcast %cst_111 : f32 to vector<2x128xf32>
    %486 = arith.addf %485, %484 : vector<2x128xf32>
    %487 = arith.divf %485, %486 : vector<2x128xf32>
    %488 = vector.extract_strided_slice %481 {offsets = [0, 128], sizes = [2, 128], strides = [1, 1]} : vector<2x512xf32> to vector<2x128xf32>
    %489 = arith.negf %488 : vector<2x128xf32>
    %490 = math.exp %489 : vector<2x128xf32>
    %cst_112 = arith.constant 1.000000e+00 : f32
    %491 = vector.broadcast %cst_112 : f32 to vector<2x128xf32>
    %492 = arith.addf %491, %490 : vector<2x128xf32>
    %493 = arith.divf %491, %492 : vector<2x128xf32>
    %494 = vector.extract_strided_slice %481 {offsets = [0, 256], sizes = [2, 128], strides = [1, 1]} : vector<2x512xf32> to vector<2x128xf32>
    %495 = math.tanh %494 : vector<2x128xf32>
    %496 = vector.extract_strided_slice %481 {offsets = [0, 384], sizes = [2, 128], strides = [1, 1]} : vector<2x512xf32> to vector<2x128xf32>
    %497 = arith.negf %496 : vector<2x128xf32>
    %498 = math.exp %497 : vector<2x128xf32>
    %cst_113 = arith.constant 1.000000e+00 : f32
    %499 = vector.broadcast %cst_113 : f32 to vector<2x128xf32>
    %500 = arith.addf %499, %498 : vector<2x128xf32>
    %501 = arith.divf %499, %500 : vector<2x128xf32>
    %502 = arith.mulf %493, %429 : vector<2x128xf32>
    %503 = arith.mulf %487, %495 : vector<2x128xf32>
    %504 = arith.addf %502, %503 : vector<2x128xf32>
    %505 = math.tanh %504 : vector<2x128xf32>
    %506 = arith.mulf %501, %505 : vector<2x128xf32>
    %507 = arith.truncf %506 : vector<2x128xf32> to vector<2x128xbf16>
    %cst_114 = arith.constant dense<0.000000e+00> : vector<2x384xf32>
    %508 = tpu.matmul %507, %5, %cst_114 {dimension_numbers = #tpu.dot_dimension_numbers<[1], [0], [0], [1], [0, 0, 1, 1], [], []>} : vector<2x128xbf16>, vector<128x384xbf16>, vector<2x384xf32> -> vector<2x384xf32>
    %509 = arith.addf %12, %508 : vector<2x384xf32>
    %510 = arith.truncf %463 : vector<2x128xf32> to vector<2x128xbf16>
    %cst_115 = arith.constant dense<0.000000e+00> : vector<2x384xf32>
    %511 = tpu.matmul %510, %6, %cst_115 {dimension_numbers = #tpu.dot_dimension_numbers<[1], [0], [0], [1], [0, 0, 1, 1], [], []>} : vector<2x128xbf16>, vector<128x384xbf16>, vector<2x384xf32> -> vector<2x384xf32>
    %512 = arith.addf %15, %511 : vector<2x384xf32>
    %513 = vector.extract_strided_slice %509 {offsets = [0, 0], sizes = [2, 128], strides = [1, 1]} : vector<2x384xf32> to vector<2x128xf32>
    %514 = vector.extract_strided_slice %512 {offsets = [0, 0], sizes = [2, 128], strides = [1, 1]} : vector<2x384xf32> to vector<2x128xf32>
    %515 = arith.addf %513, %514 : vector<2x128xf32>
    %516 = arith.negf %515 : vector<2x128xf32>
    %517 = math.exp %516 : vector<2x128xf32>
    %cst_116 = arith.constant 1.000000e+00 : f32
    %518 = vector.broadcast %cst_116 : f32 to vector<2x128xf32>
    %519 = arith.addf %518, %517 : vector<2x128xf32>
    %520 = arith.divf %518, %519 : vector<2x128xf32>
    %521 = vector.extract_strided_slice %509 {offsets = [0, 128], sizes = [2, 128], strides = [1, 1]} : vector<2x384xf32> to vector<2x128xf32>
    %522 = vector.extract_strided_slice %512 {offsets = [0, 128], sizes = [2, 128], strides = [1, 1]} : vector<2x384xf32> to vector<2x128xf32>
    %523 = arith.addf %521, %522 : vector<2x128xf32>
    %524 = arith.negf %523 : vector<2x128xf32>
    %525 = math.exp %524 : vector<2x128xf32>
    %cst_117 = arith.constant 1.000000e+00 : f32
    %526 = vector.broadcast %cst_117 : f32 to vector<2x128xf32>
    %527 = arith.addf %526, %525 : vector<2x128xf32>
    %528 = arith.divf %526, %527 : vector<2x128xf32>
    %529 = vector.extract_strided_slice %509 {offsets = [0, 256], sizes = [2, 128], strides = [1, 1]} : vector<2x384xf32> to vector<2x128xf32>
    %530 = vector.extract_strided_slice %512 {offsets = [0, 256], sizes = [2, 128], strides = [1, 1]} : vector<2x384xf32> to vector<2x128xf32>
    %531 = arith.mulf %520, %530 : vector<2x128xf32>
    %532 = arith.addf %529, %531 : vector<2x128xf32>
    %533 = math.tanh %532 : vector<2x128xf32>
    %cst_118 = arith.constant 1.000000e+00 : f32
    %534 = vector.broadcast %cst_118 : f32 to vector<2x128xf32>
    %535 = arith.subf %534, %528 : vector<2x128xf32>
    %536 = arith.mulf %535, %533 : vector<2x128xf32>
    %537 = arith.mulf %528, %463 : vector<2x128xf32>
    %538 = arith.addf %536, %537 : vector<2x128xf32>
    %cst_119 = arith.constant 0.000000e+00 : f32
    %539 = vector.broadcast %cst_119 : f32 to vector<2x128xf32>
    %540 = arith.maximumf %538, %539 : vector<2x128xf32>
    %541 = arith.mulf %540, %18 : vector<2x128xf32>
    %cst_120 = arith.constant dense<0.000000e+00> : vector<2xf32>
    %542 = vector.multi_reduction <add>, %541, %cst_120 [1] : vector<2x128xf32> to vector<2xf32>
    %543 = vector.shape_cast %542 : vector<2xf32> to vector<2x1xf32>
    %544 = vector.broadcast %c6_i32 : i32 to vector<2x8xi32>
    %545 = arith.cmpi eq, %19, %544 : vector<2x8xi32>
    %546 = vector.shape_cast %543 : vector<2x1xf32> to vector<2x1xf32>
    %547 = vector.broadcast %546 : vector<2x1xf32> to vector<2x8xf32>
    %548 = arith.select %545, %547, %473 : vector<2x8xi1>, vector<2x8xf32>
    %c7_i32 = arith.constant 7 : i32
    %549 = arith.index_cast %c7_i32 : i32 to index
    %c0_121 = arith.constant 0 : index
    %c0_122 = arith.constant 0 : index
    %550 = vector.load %arg2[%549, %c0_121, %c0_122] : memref<8x2x4xf32, #tpu.memory_space<vmem>>, vector<1x2x4xf32>
    %551 = vector.shape_cast %550 : vector<1x2x4xf32> to vector<2x4xf32>
    %cst_123 = arith.constant dense<0.000000e+00> : vector<2x512xf32>
    %552 = tpu.matmul %551, %3, %cst_123 {dimension_numbers = #tpu.dot_dimension_numbers<[1], [0], [0], [1], [0, 0, 1, 1], [], []>} : vector<2x4xf32>, vector<4x512xf32>, vector<2x512xf32> -> vector<2x512xf32>
    %553 = arith.addf %9, %552 : vector<2x512xf32>
    %554 = arith.truncf %506 : vector<2x128xf32> to vector<2x128xbf16>
    %cst_124 = arith.constant dense<0.000000e+00> : vector<2x512xf32>
    %555 = tpu.matmul %554, %4, %cst_124 {dimension_numbers = #tpu.dot_dimension_numbers<[1], [0], [0], [1], [0, 0, 1, 1], [], []>} : vector<2x128xbf16>, vector<128x512xbf16>, vector<2x512xf32> -> vector<2x512xf32>
    %556 = arith.addf %553, %555 : vector<2x512xf32>
    %557 = vector.extract_strided_slice %556 {offsets = [0, 0], sizes = [2, 128], strides = [1, 1]} : vector<2x512xf32> to vector<2x128xf32>
    %558 = arith.negf %557 : vector<2x128xf32>
    %559 = math.exp %558 : vector<2x128xf32>
    %cst_125 = arith.constant 1.000000e+00 : f32
    %560 = vector.broadcast %cst_125 : f32 to vector<2x128xf32>
    %561 = arith.addf %560, %559 : vector<2x128xf32>
    %562 = arith.divf %560, %561 : vector<2x128xf32>
    %563 = vector.extract_strided_slice %556 {offsets = [0, 128], sizes = [2, 128], strides = [1, 1]} : vector<2x512xf32> to vector<2x128xf32>
    %564 = arith.negf %563 : vector<2x128xf32>
    %565 = math.exp %564 : vector<2x128xf32>
    %cst_126 = arith.constant 1.000000e+00 : f32
    %566 = vector.broadcast %cst_126 : f32 to vector<2x128xf32>
    %567 = arith.addf %566, %565 : vector<2x128xf32>
    %568 = arith.divf %566, %567 : vector<2x128xf32>
    %569 = vector.extract_strided_slice %556 {offsets = [0, 256], sizes = [2, 128], strides = [1, 1]} : vector<2x512xf32> to vector<2x128xf32>
    %570 = math.tanh %569 : vector<2x128xf32>
    %571 = vector.extract_strided_slice %556 {offsets = [0, 384], sizes = [2, 128], strides = [1, 1]} : vector<2x512xf32> to vector<2x128xf32>
    %572 = arith.negf %571 : vector<2x128xf32>
    %573 = math.exp %572 : vector<2x128xf32>
    %cst_127 = arith.constant 1.000000e+00 : f32
    %574 = vector.broadcast %cst_127 : f32 to vector<2x128xf32>
    %575 = arith.addf %574, %573 : vector<2x128xf32>
    %576 = arith.divf %574, %575 : vector<2x128xf32>
    %577 = arith.mulf %568, %504 : vector<2x128xf32>
    %578 = arith.mulf %562, %570 : vector<2x128xf32>
    %579 = arith.addf %577, %578 : vector<2x128xf32>
    %580 = math.tanh %579 : vector<2x128xf32>
    %581 = arith.mulf %576, %580 : vector<2x128xf32>
    %582 = arith.truncf %581 : vector<2x128xf32> to vector<2x128xbf16>
    %cst_128 = arith.constant dense<0.000000e+00> : vector<2x384xf32>
    %583 = tpu.matmul %582, %5, %cst_128 {dimension_numbers = #tpu.dot_dimension_numbers<[1], [0], [0], [1], [0, 0, 1, 1], [], []>} : vector<2x128xbf16>, vector<128x384xbf16>, vector<2x384xf32> -> vector<2x384xf32>
    %584 = arith.addf %12, %583 : vector<2x384xf32>
    %585 = arith.truncf %538 : vector<2x128xf32> to vector<2x128xbf16>
    %cst_129 = arith.constant dense<0.000000e+00> : vector<2x384xf32>
    %586 = tpu.matmul %585, %6, %cst_129 {dimension_numbers = #tpu.dot_dimension_numbers<[1], [0], [0], [1], [0, 0, 1, 1], [], []>} : vector<2x128xbf16>, vector<128x384xbf16>, vector<2x384xf32> -> vector<2x384xf32>
    %587 = arith.addf %15, %586 : vector<2x384xf32>
    %588 = vector.extract_strided_slice %584 {offsets = [0, 0], sizes = [2, 128], strides = [1, 1]} : vector<2x384xf32> to vector<2x128xf32>
    %589 = vector.extract_strided_slice %587 {offsets = [0, 0], sizes = [2, 128], strides = [1, 1]} : vector<2x384xf32> to vector<2x128xf32>
    %590 = arith.addf %588, %589 : vector<2x128xf32>
    %591 = arith.negf %590 : vector<2x128xf32>
    %592 = math.exp %591 : vector<2x128xf32>
    %cst_130 = arith.constant 1.000000e+00 : f32
    %593 = vector.broadcast %cst_130 : f32 to vector<2x128xf32>
    %594 = arith.addf %593, %592 : vector<2x128xf32>
    %595 = arith.divf %593, %594 : vector<2x128xf32>
    %596 = vector.extract_strided_slice %584 {offsets = [0, 128], sizes = [2, 128], strides = [1, 1]} : vector<2x384xf32> to vector<2x128xf32>
    %597 = vector.extract_strided_slice %587 {offsets = [0, 128], sizes = [2, 128], strides = [1, 1]} : vector<2x384xf32> to vector<2x128xf32>
    %598 = arith.addf %596, %597 : vector<2x128xf32>
    %599 = arith.negf %598 : vector<2x128xf32>
    %600 = math.exp %599 : vector<2x128xf32>
    %cst_131 = arith.constant 1.000000e+00 : f32
    %601 = vector.broadcast %cst_131 : f32 to vector<2x128xf32>
    %602 = arith.addf %601, %600 : vector<2x128xf32>
    %603 = arith.divf %601, %602 : vector<2x128xf32>
    %604 = vector.extract_strided_slice %584 {offsets = [0, 256], sizes = [2, 128], strides = [1, 1]} : vector<2x384xf32> to vector<2x128xf32>
    %605 = vector.extract_strided_slice %587 {offsets = [0, 256], sizes = [2, 128], strides = [1, 1]} : vector<2x384xf32> to vector<2x128xf32>
    %606 = arith.mulf %595, %605 : vector<2x128xf32>
    %607 = arith.addf %604, %606 : vector<2x128xf32>
    %608 = math.tanh %607 : vector<2x128xf32>
    %cst_132 = arith.constant 1.000000e+00 : f32
    %609 = vector.broadcast %cst_132 : f32 to vector<2x128xf32>
    %610 = arith.subf %609, %603 : vector<2x128xf32>
    %611 = arith.mulf %610, %608 : vector<2x128xf32>
    %612 = arith.mulf %603, %538 : vector<2x128xf32>
    %613 = arith.addf %611, %612 : vector<2x128xf32>
    %cst_133 = arith.constant 0.000000e+00 : f32
    %614 = vector.broadcast %cst_133 : f32 to vector<2x128xf32>
    %615 = arith.maximumf %613, %614 : vector<2x128xf32>
    %616 = arith.mulf %615, %18 : vector<2x128xf32>
    %cst_134 = arith.constant dense<0.000000e+00> : vector<2xf32>
    %617 = vector.multi_reduction <add>, %616, %cst_134 [1] : vector<2x128xf32> to vector<2xf32>
    %618 = vector.shape_cast %617 : vector<2xf32> to vector<2x1xf32>
    %619 = vector.broadcast %c7_i32 : i32 to vector<2x8xi32>
    %620 = arith.cmpi eq, %19, %619 : vector<2x8xi32>
    %621 = vector.shape_cast %618 : vector<2x1xf32> to vector<2x1xf32>
    %622 = vector.broadcast %621 : vector<2x1xf32> to vector<2x8xf32>
    %623 = arith.select %620, %622, %548 : vector<2x8xi1>, vector<2x8xf32>
    %c8_i32 = arith.constant 8 : i32
    %c0_135 = arith.constant 0 : index
    %c0_136 = arith.constant 0 : index
    %624 = vector.load %arg13[%c0_135, %c0_136] : memref<2x128xf32, #tpu.memory_space<vmem>>, vector<2x128xf32>
    tpu.vector_store %arg13[%c0_135, %c0_136], %581 {strides = array<i32>} : memref<2x128xf32, #tpu.memory_space<vmem>>, vector<2x128xf32>,
    %c0_137 = arith.constant 0 : index
    %c0_138 = arith.constant 0 : index
    %625 = vector.load %arg14[%c0_137, %c0_138] : memref<2x128xf32, #tpu.memory_space<vmem>>, vector<2x128xf32>
    tpu.vector_store %arg14[%c0_137, %c0_138], %579 {strides = array<i32>} : memref<2x128xf32, #tpu.memory_space<vmem>>, vector<2x128xf32>,
    %c0_139 = arith.constant 0 : index
    %c0_140 = arith.constant 0 : index
    %626 = vector.load %arg15[%c0_139, %c0_140] : memref<2x128xf32, #tpu.memory_space<vmem>>, vector<2x128xf32>
    tpu.vector_store %arg15[%c0_139, %c0_140], %613 {strides = array<i32>} : memref<2x128xf32, #tpu.memory_space<vmem>>, vector<2x128xf32>,
    %c0_141 = arith.constant 0 : index
    %c0_142 = arith.constant 0 : index
    %627 = vector.load %arg11[%c0_141, %c0_142] : memref<1x1xf32, #tpu.memory_space<vmem>>, vector<1x1xf32>
    %628 = vector.broadcast %627 : vector<1x1xf32> to vector<2x8xf32>
    %629 = arith.addf %623, %628 : vector<2x8xf32>
    %c0_143 = arith.constant 0 : index
    %c0_144 = arith.constant 0 : index
    %630 = vector.load %arg12[%c0_143, %c0_144] : memref<2x8xf32, #tpu.memory_space<vmem>>, vector<2x8xf32>
    tpu.vector_store %arg12[%c0_143, %c0_144], %629 {strides = array<i32>} : memref<2x8xf32, #tpu.memory_space<vmem>>, vector<2x8xf32>,
    return
  }
  func.func @transform_0(%arg0: i32, %arg1: i32) -> (i32, i32, i32) {
    %c0_i32 = arith.constant 0 : i32
    %c0_i32_0 = arith.constant 0 : i32
    return %arg1, %arg0, %c0_i32 : i32, i32, i32
  }
  func.func @transform_1(%arg0: i32, %arg1: i32) -> (i32, i32) {
    %c0_i32 = arith.constant 0 : i32
    %c0_i32_0 = arith.constant 0 : i32
    %c0_i32_1 = arith.constant 0 : i32
    return %c0_i32, %c0_i32_0 : i32, i32
  }
  func.func @transform_2(%arg0: i32, %arg1: i32) -> (i32, i32) {
    %c0_i32 = arith.constant 0 : i32
    %c0_i32_0 = arith.constant 0 : i32
    %c0_i32_1 = arith.constant 0 : i32
    return %c0_i32, %c0_i32_0 : i32, i32
  }
  func.func @transform_3(%arg0: i32, %arg1: i32) -> (i32, i32) {
    %c0_i32 = arith.constant 0 : i32
    %c0_i32_0 = arith.constant 0 : i32
    %c0_i32_1 = arith.constant 0 : i32
    return %c0_i32, %c0_i32_0 : i32, i32
  }
  func.func @transform_4(%arg0: i32, %arg1: i32) -> (i32, i32) {
    %c0_i32 = arith.constant 0 : i32
    %c0_i32_0 = arith.constant 0 : i32
    %c0_i32_1 = arith.constant 0 : i32
    return %c0_i32, %c0_i32_0 : i32, i32
  }
  func.func @transform_5(%arg0: i32, %arg1: i32) -> (i32, i32) {
    %c0_i32 = arith.constant 0 : i32
    %c0_i32_0 = arith.constant 0 : i32
    %c0_i32_1 = arith.constant 0 : i32
    return %c0_i32, %c0_i32_0 : i32, i32
  }
  func.func @transform_6(%arg0: i32, %arg1: i32) -> (i32, i32) {
    %c0_i32 = arith.constant 0 : i32
    %c0_i32_0 = arith.constant 0 : i32
    %c0_i32_1 = arith.constant 0 : i32
    return %c0_i32, %c0_i32_0 : i32, i32
  }
  func.func @transform_7(%arg0: i32, %arg1: i32) -> (i32, i32) {
    %c0_i32 = arith.constant 0 : i32
    %c0_i32_0 = arith.constant 0 : i32
    %c0_i32_1 = arith.constant 0 : i32
    return %c0_i32, %c0_i32_0 : i32, i32
  }
  func.func @transform_8(%arg0: i32, %arg1: i32) -> (i32, i32) {
    %c0_i32 = arith.constant 0 : i32
    %c0_i32_0 = arith.constant 0 : i32
    %c0_i32_1 = arith.constant 0 : i32
    return %c0_i32, %c0_i32_0 : i32, i32
  }
  func.func @transform_9(%arg0: i32, %arg1: i32) -> (i32, i32) {
    %c0_i32 = arith.constant 0 : i32
    %c0_i32_0 = arith.constant 0 : i32
    %c0_i32_1 = arith.constant 0 : i32
    return %c0_i32, %c0_i32_0 : i32, i32
  }
  func.func @transform_10(%arg0: i32, %arg1: i32) -> (i32, i32) {
    %c0_i32 = arith.constant 0 : i32
    return %arg0, %arg1 : i32, i32
  }
}

</mosaic_0001>

<llo_original>
// kernel: single_price_model_forward.1
$region0: #{single_price_model_forward.1}
  #allocation0 [shape = 'u32[]', space=smem, size = 0x4, offset = 0x4, fixed_abs, tag = 'smem constant byte address 0x4 - core index']
  #allocation1 [shape = 'u32[72,128]{1,0:T(1,128)}', space=vmem, size = 0x9000, scoped, tag = 'internal scratch']
  #allocation2 [shape = 'f32[2,128]{1,0:T(2,128)}', space=vmem, size = 0x400, scoped, tag = 'scratch operand']
  #allocation3 [shape = 'f32[2,128]{1,0:T(2,128)}', space=vmem, size = 0x400, scoped, tag = 'scratch operand']
  #allocation4 [shape = 'f32[2,128]{1,0:T(2,128)}', space=vmem, size = 0x400, scoped, tag = 'scratch operand']
  #allocation5 [shape = 'f32[1,1]{1,0:T(1,128)S(1)}', space=vmem, size = 0x200, scoped, tag = 'scoped memory for single_price_model_forward.1']
  %s0 = inlined_call_operand.vmem [shape: f32[8,2,4], index: 0, kind: input, shape index: {}]
  %s1 = inlined_call_operand.vmem [shape: f32[4,512], index: 1, kind: input, shape index: {}]
  %s2 = inlined_call_operand.vmem [shape: f32[1,512], index: 2, kind: input, shape index: {}]
  %s3 = inlined_call_operand.hbm [shape: bf16[128,512], index: 3, kind: input, shape index: {}]
  %s4 = inlined_call_operand.hbm [shape: bf16[128,384], index: 4, kind: input, shape index: {}]
  %s5 = inlined_call_operand.hbm [shape: bf16[128,384], index: 5, kind: input, shape index: {}]
  %s6 = inlined_call_operand.vmem [shape: f32[1,384], index: 6, kind: input, shape index: {}]
  %s7 = inlined_call_operand.vmem [shape: f32[1,384], index: 7, kind: input, shape index: {}]
  %s8 = inlined_call_operand.vmem [shape: f32[1,128], index: 8, kind: input, shape index: {}]
  %s9 = inlined_call_operand.<no memory space> [shape: f32[1,1], index: 9, kind: input, shape index: {}]
  %s10 = inlined_call_operand.hbm [shape: f32[2,8], index: 10, kind: output, shape index: {}]
  %s11 = sld [smem:[#allocation0]]
  $region66: #{single_price_model_forward.1} parent=0
    _
  %s13 = ssub.s32 1, %s11
  %s14 = scalar_select 0, %s13, %s11
  %v15 = vstv %s9
  %16 = vst [vmem:[#allocation5] sm:$0x1] %v15
  $region1: #{single_price_model_forward.1} parent=0
    #allocation6 [shape = 'u8[131072]{0}', space=vmem, size = 0x20000, scoped, tag = 'input window, operand 3, single buffered']
    #allocation7 [shape = 's32[1]{0}', space=sflag, size = 0x4, scoped, tag = 'scoped memory for single_price_model_forward.1']
    #allocation8 [shape = 's32[1]{0}', space=sflag, size = 0x4, scoped, tag = 'scoped memory for single_price_model_forward.1']
    #allocation9 [shape = 'u8[98304]{0}', space=vmem, size = 0x18000, scoped, tag = 'input window, operand 4, single buffered']
    #allocation10 [shape = 's32[1]{0}', space=sflag, size = 0x4, scoped, tag = 'scoped memory for single_price_model_forward.1']
    #allocation11 [shape = 'u8[98304]{0}', space=vmem, size = 0x18000, scoped, tag = 'input window, operand 5, single buffered']
    #allocation12 [shape = 'u8[1024]{0}', space=vmem, size = 0x400, scoped, tag = 'output window, operand 0, single buffered']
    %17 = vsyncpa [#allocation7], 0
    %18 = vsyncpa [#allocation10], 0
    %19 = vsyncpa [#allocation8], 0
    // Predicated region
    $region2: #{single_price_model_forward.1} parent=1 // pred_check
      _
    $region3: #{single_price_model_forward.1} parent=1 // pred_check_branch
      %21 = sbr.rel (0) target = $region5
    $region4: #{single_price_model_forward.1} parent=1 // pred_region
      _
    $region5: #{single_price_model_forward.1} parent=1 // pred_fallthru
      _
    // Predicated region
    $region6: #{single_price_model_forward.1} parent=1 // pred_check
      _
    $region7: #{single_price_model_forward.1} parent=1 // pred_check_branch
      %23 = sbr.rel (0) target = $region9
    $region8: #{single_price_model_forward.1} parent=1 // pred_region
      _
    $region9: #{single_price_model_forward.1} parent=1 // pred_fallthru
      _
    // Predicated region
    $region10: #{single_price_model_forward.1} parent=1 // pred_check
      _
    $region11: #{single_price_model_forward.1} parent=1 // pred_check_branch
      %25 = sbr.rel (0) target = $region13
    $region12: #{single_price_model_forward.1} parent=1 // pred_region
      _
    $region13: #{single_price_model_forward.1} parent=1 // pred_fallthru
      _
    // Predicated region
    $region14: #{single_price_model_forward.1} parent=1 // pred_check
      _
    $region15: #{single_price_model_forward.1} parent=1 // pred_check_branch
      %27 = sbr.rel (0) target = $region17
    $region16: #{single_price_model_forward.1} parent=1 // pred_region
      %29 = vsyncadd [#allocation7], 0
      %s30 = sshll.u32 %s3, 4
      %s31 = int_to_ptr.hbm [resolvable:$true] %s30
      %s32 = sshll.u32 [#allocation6], 4
      %s33 = int_to_ptr.vmem [resolvable:$true] %s32
      %38 = dma.hbm_to_vmem [thread:$0]  %s31, 4096, %s33, [#allocation7], 256, 256, 16
    $region17: #{single_price_model_forward.1} parent=1 // pred_fallthru
      _
    // Predicated region
    $region18: #{single_price_model_forward.1} parent=1 // pred_check
      _
    $region19: #{single_price_model_forward.1} parent=1 // pred_check_branch
      %40 = sbr.rel (0) target = $region21
    $region20: #{single_price_model_forward.1} parent=1 // pred_region
      %42 = vsyncadd [#allocation10], 0
      %s43 = sshll.u32 %s4, 4
      %s44 = int_to_ptr.hbm [resolvable:$true] %s43
      %s45 = sshll.u32 [#allocation9], 4
      %s46 = int_to_ptr.vmem [resolvable:$true] %s45
      %51 = dma.hbm_to_vmem [thread:$0]  %s44, 3072, %s46, [#allocation10], 192, 192, 12
    $region21: #{single_price_model_forward.1} parent=1 // pred_fallthru
      _
    // Predicated region
    $region22: #{single_price_model_forward.1} parent=1 // pred_check
      _
    $region23: #{single_price_model_forward.1} parent=1 // pred_check_branch
      %53 = sbr.rel (0) target = $region25
    $region24: #{single_price_model_forward.1} parent=1 // pred_region
      %55 = vsyncadd [#allocation10], 0
      %s56 = sshll.u32 %s5, 4
      %s57 = int_to_ptr.hbm [resolvable:$true] %s56
      %s58 = sshll.u32 [#allocation11], 4
      %s59 = int_to_ptr.vmem [resolvable:$true] %s58
      %64 = dma.hbm_to_vmem [thread:$0]  %s57, 3072, %s59, [#allocation10], 192, 192, 12
    $region25: #{single_price_model_forward.1} parent=1 // pred_fallthru
      _
    // Predicated region
    $region26: #{single_price_model_forward.1} parent=1 // pred_check
      _
    $region27: #{single_price_model_forward.1} parent=1 // pred_check_branch
      %66 = sbr.rel (0) target = $region29
    $region28: #{single_price_model_forward.1} parent=1 // pred_region
      _
    $region29: #{single_price_model_forward.1} parent=1 // pred_fallthru
      _
    // Predicated region
    $region30: #{single_price_model_forward.1} parent=1 // pred_check
      _
    $region31: #{single_price_model_forward.1} parent=1 // pred_check_branch
      %68 = sbr.rel (0) target = $region33
    $region32: #{single_price_model_forward.1} parent=1 // pred_region
      _
    $region33: #{single_price_model_forward.1} parent=1 // pred_fallthru
      _
    // Predicated region
    $region34: #{single_price_model_forward.1} parent=1 // pred_check
      _
    $region35: #{single_price_model_forward.1} parent=1 // pred_check_branch
      %70 = sbr.rel (0) target = $region37
    $region36: #{single_price_model_forward.1} parent=1 // pred_region
      _
    $region37: #{single_price_model_forward.1} parent=1 // pred_fallthru
      _
    // Predicated region
    $region38: #{single_price_model_forward.1} parent=1 // pred_check
      _
    $region39: #{single_price_model_forward.1} parent=1 // pred_check_branch
      %72 = sbr.rel (0) target = $region41
    $region40: #{single_price_model_forward.1} parent=1 // pred_region
      _
    $region41: #{single_price_model_forward.1} parent=1 // pred_fallthru
      _
    // Predicated region
    $region42: #{single_price_model_forward.1} parent=1 // pred_check
      _
    $region43: #{single_price_model_forward.1} parent=1 // pred_check_branch
      %74 = sbr.rel (0) target = $region45
    $region44: #{single_price_model_forward.1} parent=1 // pred_region
      %76 = dma.done [#allocation7], 4096
    $region45: #{single_price_model_forward.1} parent=1 // pred_fallthru
      _
    // Predicated region
    $region46: #{single_price_model_forward.1} parent=1 // pred_check
      _
    $region47: #{single_price_model_forward.1} parent=1 // pred_check_branch
      %78 = sbr.rel (0) target = $region49
    $region48: #{single_price_model_forward.1} parent=1 // pred_region
      %80 = dma.done [#allocation10], 3072
    $region49: #{single_price_model_forward.1} parent=1 // pred_fallthru
      _
    // Predicated region
    $region50: #{single_price_model_forward.1} parent=1 // pred_check
      _
    $region51: #{single_price_model_forward.1} parent=1 // pred_check_branch
      %82 = sbr.rel (0) target = $region53
    $region52: #{single_price_model_forward.1} parent=1 // pred_region
      %84 = dma.done [#allocation10], 3072
    $region53: #{single_price_model_forward.1} parent=1 // pred_fallthru
      _
    %p85 = scmp.eq.s32.totalorder 0, 0
    // Predicated region
    $region54: #{single_price_model_forward.1} parent=1 // pred_check
      %p86 = pneg %p85
    $region55: #{single_price_model_forward.1} parent=1 // pred_check_branch
      %88 = sbr.rel (%p86) target = $region57
    $region56: #{single_price_model_forward.1} parent=1 // pred_region
      %89 = vst [vmem:[#allocation2] sm:$0x3] 0.0
      %90 = vst [vmem:[#allocation3] sm:$0x3] 0.0
      %91 = vst [vmem:[#allocation4] sm:$0x3] 0.0
    $region57: #{single_price_model_forward.1} parent=1 // pred_fallthru
      _
    %v92 = vld [vmem:[%s1] sm:$0xff]
    %v93 = vld [vmem:[%s1 + $0x8] sm:$0xff]
    %v94 = vld [vmem:[#allocation6] sm:$0xff]
    %v95 = vld [vmem:[#allocation6 + $0x8] sm:$0xff]
    %v96 = vld [vmem:[#allocation6 + $0x10] sm:$0xff]
    %v97 = vld [vmem:[#allocation6 + $0x18] sm:$0xff]
    %v98 = vld [vmem:[#allocation6 + $0x20] sm:$0xff]
    %v99 = vld [vmem:[#allocation6 + $0x28] sm:$0xff]
    %v100 = vld [vmem:[#allocation6 + $0x30] sm:$0xff]
    %v101 = vld [vmem:[#allocation6 + $0x38] sm:$0xff]
    %v102 = vld [vmem:[#allocation6 + $0x40] sm:$0xff]
    %v103 = vld [vmem:[#allocation6 + $0x48] sm:$0xff]
    %v104 = vld [vmem:[#allocation6 + $0x50] sm:$0xff]
    %v105 = vld [vmem:[#allocation6 + $0x58] sm:$0xff]
    %v106 = vld [vmem:[#allocation6 + $0x60] sm:$0xff]
    %v107 = vld [vmem:[#allocation6 + $0x68] sm:$0xff]
    %v108 = vld [vmem:[#allocation6 + $0x70] sm:$0xff]
    %v109 = vld [vmem:[#allocation6 + $0x78] sm:$0xff]
    %v110 = vld [vmem:[#allocation6 + $0x80] sm:$0xff]
    %v111 = vld [vmem:[#allocation6 + $0x88] sm:$0xff]
    %v112 = vld [vmem:[#allocation6 + $0x90] sm:$0xff]
    %v113 = vld [vmem:[#allocation6 + $0x98] sm:$0xff]
    %v114 = vld [vmem:[#allocation6 + $0xa0] sm:$0xff]
    %v115 = vld [vmem:[#allocation6 + $0xa8] sm:$0xff]
    %v116 = vld [vmem:[#allocation6 + $0xb0] sm:$0xff]
    %v117 = vld [vmem:[#allocation6 + $0xb8] sm:$0xff]
    %v118 = vld [vmem:[#allocation6 + $0xc0] sm:$0xff]
    %v119 = vld [vmem:[#allocation6 + $0xc8] sm:$0xff]
    %v120 = vld [vmem:[#allocation6 + $0xd0] sm:$0xff]
    %v121 = vld [vmem:[#allocation6 + $0xd8] sm:$0xff]
    %v122 = vld [vmem:[#allocation6 + $0xe0] sm:$0xff]
    %v123 = vld [vmem:[#allocation6 + $0xe8] sm:$0xff]
    %v124 = vld [vmem:[#allocation6 + $0xf0] sm:$0xff]
    %v125 = vld [vmem:[#allocation6 + $0xf8] sm:$0xff]
    %v126 = vld [vmem:[#allocation9] sm:$0xff]
    %v127 = vld [vmem:[#allocation9 + $0x8] sm:$0xf]
    %v128 = vld [vmem:[#allocation9 + $0xc] sm:$0xff]
    %v129 = vld [vmem:[#allocation9 + $0x14] sm:$0xf]
    %v130 = vld [vmem:[#allocation9 + $0x18] sm:$0xff]
    %v131 = vld [vmem:[#allocation9 + $0x20] sm:$0xf]
    %v132 = vld [vmem:[#allocation9 + $0x24] sm:$0xff]
    %v133 = vld [vmem:[#allocation9 + $0x2c] sm:$0xf]
    %v134 = vld [vmem:[#allocation9 + $0x30] sm:$0xff]
    %v135 = vld [vmem:[#allocation9 + $0x38] sm:$0xf]
    %v136 = vld [vmem:[#allocation9 + $0x3c] sm:$0xff]
    %v137 = vld [vmem:[#allocation9 + $0x44] sm:$0xf]
    %v138 = vld [vmem:[#allocation9 + $0x48] sm:$0xff]
    %v139 = vld [vmem:[#allocation9 + $0x50] sm:$0xf]
    %v140 = vld [vmem:[#allocation9 + $0x54] sm:$0xff]
    %v141 = vld [vmem:[#allocation9 + $0x5c] sm:$0xf]
    %v142 = vld [vmem:[#allocation9 + $0x60] sm:$0xff]
    %v143 = vld [vmem:[#allocation9 + $0x68] sm:$0xf]
    %v144 = vld [vmem:[#allocation9 + $0x6c] sm:$0xff]
    %v145 = vld [vmem:[#allocation9 + $0x74] sm:$0xf]
    %v146 = vld [vmem:[#allocation9 + $0x78] sm:$0xff]
    %v147 = vld [vmem:[#allocation9 + $0x80] sm:$0xf]
    %v148 = vld [vmem:[#allocation9 + $0x84] sm:$0xff]
    %v149 = vld [vmem:[#allocation9 + $0x8c] sm:$0xf]
    %v150 = vld [vmem:[#allocation9 + $0x90] sm:$0xff]
    %v151 = vld [vmem:[#allocation9 + $0x98] sm:$0xf]
    %v152 = vld [vmem:[#allocation9 + $0x9c] sm:$0xff]
    %v153 = vld [vmem:[#allocation9 + $0xa4] sm:$0xf]
    %v154 = vld [vmem:[#allocation9 + $0xa8] sm:$0xff]
    %v155 = vld [vmem:[#allocation9 + $0xb0] sm:$0xf]
    %v156 = vld [vmem:[#allocation9 + $0xb4] sm:$0xff]
    %v157 = vld [vmem:[#allocation9 + $0xbc] sm:$0xf]
    %v158 = vld [vmem:[#allocation11] sm:$0xff]
    %v159 = vld [vmem:[#allocation11 + $0x8] sm:$0xf]
    %v160 = vld [vmem:[#allocation11 + $0xc] sm:$0xff]
    %v161 = vld [vmem:[#allocation11 + $0x14] sm:$0xf]
    %v162 = vld [vmem:[#allocation11 + $0x18] sm:$0xff]
    %v163 = vld [vmem:[#allocation11 + $0x20] sm:$0xf]
    %v164 = vld [vmem:[#allocation11 + $0x24] sm:$0xff]
    %v165 = vld [vmem:[#allocation11 + $0x2c] sm:$0xf]
    %v166 = vld [vmem:[#allocation11 + $0x30] sm:$0xff]
    %v167 = vld [vmem:[#allocation11 + $0x38] sm:$0xf]
    %v168 = vld [vmem:[#allocation11 + $0x3c] sm:$0xff]
    %v169 = vld [vmem:[#allocation11 + $0x44] sm:$0xf]
    %v170 = vld [vmem:[#allocation11 + $0x48] sm:$0xff]
    %v171 = vld [vmem:[#allocation11 + $0x50] sm:$0xf]
    %v172 = vld [vmem:[#allocation11 + $0x54] sm:$0xff]
    %v173 = vld [vmem:[#allocation11 + $0x5c] sm:$0xf]
    %v174 = vld [vmem:[#allocation11 + $0x60] sm:$0xff]
    %v175 = vld [vmem:[#allocation11 + $0x68] sm:$0xf]
    %v176 = vld [vmem:[#allocation11 + $0x6c] sm:$0xff]
    %v177 = vld [vmem:[#allocation11 + $0x74] sm:$0xf]
    %v178 = vld [vmem:[#allocation11 + $0x78] sm:$0xff]
    %v179 = vld [vmem:[#allocation11 + $0x80] sm:$0xf]
    %v180 = vld [vmem:[#allocation11 + $0x84] sm:$0xff]
    %v181 = vld [vmem:[#allocation11 + $0x8c] sm:$0xf]
    %v182 = vld [vmem:[#allocation11 + $0x90] sm:$0xff]
    %v183 = vld [vmem:[#allocation11 + $0x98] sm:$0xf]
    %v184 = vld [vmem:[#allocation11 + $0x9c] sm:$0xff]
    %v185 = vld [vmem:[#allocation11 + $0xa4] sm:$0xf]
    %v186 = vld [vmem:[#allocation11 + $0xa8] sm:$0xff]
    %v187 = vld [vmem:[#allocation11 + $0xb0] sm:$0xf]
    %v188 = vld [vmem:[#allocation11 + $0xb4] sm:$0xff]
    %v189 = vld [vmem:[#allocation11 + $0xbc] sm:$0xf]
    %v190 = vld [vmem:[%s2] sm:$0xf]
    %v192 = vperm.slane %v190, 0
    %v193 = vperm.slane %v190, 1
    %v194 = vperm.slane %v190, 2
    %v195 = vperm.slane %v190, 3
    %v200 = vld [vmem:[%s6] sm:$0x7]
    %v202 = vperm.slane %v200, 0
    %v203 = vperm.slane %v200, 1
    %v204 = vperm.slane %v200, 2
    %v208 = vld [vmem:[%s7] sm:$0x7]
    %v210 = vperm.slane %v208, 0
    %v211 = vperm.slane %v208, 1
    %v212 = vperm.slane %v208, 2
    %v216 = vld [vmem:[%s8] sm:$0x1]
    %v218 = vperm.slane %v216, 0
    %v220 = vlaneseq
    %v221 = vand.u32 %v220, 127
    %v222 = vld [vmem:[#allocation2] sm:$0x3]
    %v223 = vld [vmem:[#allocation3] sm:$0x3]
    %v224 = vld [vmem:[#allocation4] sm:$0x3]
    %v225 = vld [vmem:[%s0] sm:$0x3]
    %228 = vst [vmem:[#allocation1] ss:$2 sm:$0xff] %v92
    %s229 = scalar_lea.vmem [#allocation1], 16
    %230 = vst [vmem:[%s229] ss:$2 sm:$0xff] %v93
    %v231 = vld.sshfl [vmem:[#allocation1] sm:$0xff pattern:$0x75316420]
    %v232 = vld.sshfl [vmem:[#allocation1 + $0x8] sm:$0xff pattern:$0x75316420]
    %v233 = vld.sshfl [vmem:[#allocation1 + $0x10] sm:$0xff pattern:$0x75316420]
    %v234 = vld.sshfl [vmem:[#allocation1 + $0x18] sm:$0xff pattern:$0x75316420]
    %vm235 = vcmask 31744
    %v237 = vsel %vm235, %v225, 0
    %vm239 = vcmask 1043456
    %v240 = vsel %vm239, %v231, 0
    %v242 = vsel %vm239, %v232, 0
    %v244 = vsel %vm239, %v233, 0
    %v246 = vsel %vm239, %v234, 0
    %248 = vmatpush.msra.mxu0 0.0
    %249 = vmatpush.msra.mxu0 0.0
    %250 = vmatpush.msra.mxu0 0.0
    %251 = vmatpush.msra.mxu0 0.0
    %252 = vmatpush.msra.mxu0 0.0
    %253 = vmatpush.msra.mxu0 0.0
    %254 = vmatpush.msra.mxu0 0.0
    %255 = vmatpush.msra.mxu0 0.0
    %256 = vmatpush.msra.mxu0 0.0
    %257 = vmatpush.msra.mxu0 0.0
    %258 = vmatpush.msra.mxu0 0.0
    %259 = vmatpush.msra.mxu0 0.0
    %260 = vmatpush.msra.mxu0 0.0
    %261 = vmatpush.msra.mxu0 0.0
    %262 = vmatpush.msra.mxu0 0.0
    %263 = vmatpush.msra.mxu0 %v240
    %264 = vmatmul.f32.gmra.mxu0 %v237
    %v265 = vpop.f32.mrf.mxu0
    %v266 = vadd.f32 0.0, %v265
    %267 = vdwg.mxu0
    %268 = vmatpush.msra.mxu0 0.0
    %269 = vmatpush.msra.mxu0 0.0
    %270 = vmatpush.msra.mxu0 0.0
    %271 = vmatpush.msra.mxu0 0.0
    %272 = vmatpush.msra.mxu0 0.0
    %273 = vmatpush.msra.mxu0 0.0
    %274 = vmatpush.msra.mxu0 0.0
    %275 = vmatpush.msra.mxu0 0.0
    %276 = vmatpush.msra.mxu0 0.0
    %277 = vmatpush.msra.mxu0 0.0
    %278 = vmatpush.msra.mxu0 0.0
    %279 = vmatpush.msra.mxu0 0.0
    %280 = vmatpush.msra.mxu0 0.0
    %281 = vmatpush.msra.mxu0 0.0
    %282 = vmatpush.msra.mxu0 0.0
    %283 = vmatpush.msra.mxu0 %v242
    %284 = vmatmul.f32.gmra.mxu0 %v237
    %v285 = vpop.f32.mrf.mxu0
    %v286 = vadd.f32 0.0, %v285
    %287 = vdwg.mxu0
    %288 = vmatpush.msra.mxu0 0.0
    %289 = vmatpush.msra.mxu0 0.0
    %290 = vmatpush.msra.mxu0 0.0
    %291 = vmatpush.msra.mxu0 0.0
    %292 = vmatpush.msra.mxu0 0.0
    %293 = vmatpush.msra.mxu0 0.0
    %294 = vmatpush.msra.mxu0 0.0
    %295 = vmatpush.msra.mxu0 0.0
    %296 = vmatpush.msra.mxu0 0.0
    %297 = vmatpush.msra.mxu0 0.0
    %298 = vmatpush.msra.mxu0 0.0
    %299 = vmatpush.msra.mxu0 0.0
    %300 = vmatpush.msra.mxu0 0.0
    %301 = vmatpush.msra.mxu0 0.0
    %302 = vmatpush.msra.mxu0 0.0
    %303 = vmatpush.msra.mxu0 %v244
    %304 = vmatmul.f32.gmra.mxu0 %v237
    %v305 = vpop.f32.mrf.mxu0
    %v306 = vadd.f32 0.0, %v305
    %307 = vdwg.mxu0
    %308 = vmatpush.msra.mxu0 0.0
    %309 = vmatpush.msra.mxu0 0.0
    %310 = vmatpush.msra.mxu0 0.0
    %311 = vmatpush.msra.mxu0 0.0
    %312 = vmatpush.msra.mxu0 0.0
    %313 = vmatpush.msra.mxu0 0.0
    %314 = vmatpush.msra.mxu0 0.0
    %315 = vmatpush.msra.mxu0 0.0
    %316 = vmatpush.msra.mxu0 0.0
    %317 = vmatpush.msra.mxu0 0.0
    %318 = vmatpush.msra.mxu0 0.0
    %319 = vmatpush.msra.mxu0 0.0
    %320 = vmatpush.msra.mxu0 0.0
    %321 = vmatpush.msra.mxu0 0.0
    %322 = vmatpush.msra.mxu0 0.0
    %323 = vmatpush.msra.mxu0 %v246
    %324 = vmatmul.f32.gmra.mxu0 %v237
    %v325 = vpop.f32.mrf.mxu0
    %v326 = vadd.f32 0.0, %v325
    %327 = vdwg.mxu0
    %v328 = vadd.f32 %v192, %v266
    %v329 = vadd.f32 %v193, %v286
    %v330 = vadd.f32 %v194, %v306
    %v331 = vadd.f32 %v195, %v326
    %v332 = vpack.c.bf16 %v222, %v222
    %v365 = vunpack.c.l.b16 %v94
    %v366 = vunpack.c.h.b16 %v94
    %v367 = vunpack.c.l.b16 %v95
    %v368 = vunpack.c.h.b16 %v95
    %v369 = vunpack.c.l.b16 %v96
    %v370 = vunpack.c.h.b16 %v96
    %v371 = vunpack.c.l.b16 %v97
    %v372 = vunpack.c.h.b16 %v97
    %v373 = vunpack.c.l.b16 %v98
    %v374 = vunpack.c.h.b16 %v98
    %v375 = vunpack.c.l.b16 %v99
    %v376 = vunpack.c.h.b16 %v99
    %v377 = vunpack.c.l.b16 %v100
    %v378 = vunpack.c.h.b16 %v100
    %v379 = vunpack.c.l.b16 %v101
    %v380 = vunpack.c.h.b16 %v101
    %v381 = vunpack.c.l.b16 %v102
    %v382 = vunpack.c.h.b16 %v102
    %v383 = vunpack.c.l.b16 %v103
    %v384 = vunpack.c.h.b16 %v103
    %v385 = vunpack.c.l.b16 %v104
    %v386 = vunpack.c.h.b16 %v104
    %v387 = vunpack.c.l.b16 %v105
    %v388 = vunpack.c.h.b16 %v105
    %v389 = vunpack.c.l.b16 %v106
    %v390 = vunpack.c.h.b16 %v106
    %v391 = vunpack.c.l.b16 %v107
    %v392 = vunpack.c.h.b16 %v107
    %v393 = vunpack.c.l.b16 %v108
    %v394 = vunpack.c.h.b16 %v108
    %v395 = vunpack.c.l.b16 %v109
    %v396 = vunpack.c.h.b16 %v109
    %v397 = vunpack.c.l.b16 %v110
    %v398 = vunpack.c.h.b16 %v110
    %v399 = vunpack.c.l.b16 %v111
    %v400 = vunpack.c.h.b16 %v111
    %v401 = vunpack.c.l.b16 %v112
    %v402 = vunpack.c.h.b16 %v112
    %v403 = vunpack.c.l.b16 %v113
    %v404 = vunpack.c.h.b16 %v113
    %v405 = vunpack.c.l.b16 %v114
    %v406 = vunpack.c.h.b16 %v114
    %v407 = vunpack.c.l.b16 %v115
    %v408 = vunpack.c.h.b16 %v115
    %v409 = vunpack.c.l.b16 %v116
    %v410 = vunpack.c.h.b16 %v116
    %v411 = vunpack.c.l.b16 %v117
    %v412 = vunpack.c.h.b16 %v117
    %v413 = vunpack.c.l.b16 %v118
    %v414 = vunpack.c.h.b16 %v118
    %v415 = vunpack.c.l.b16 %v119
    %v416 = vunpack.c.h.b16 %v119
    %v417 = vunpack.c.l.b16 %v120
    %v418 = vunpack.c.h.b16 %v120
    %v419 = vunpack.c.l.b16 %v121
    %v420 = vunpack.c.h.b16 %v121
    %v421 = vunpack.c.l.b16 %v122
    %v422 = vunpack.c.h.b16 %v122
    %v423 = vunpack.c.l.b16 %v123
    %v424 = vunpack.c.h.b16 %v123
    %v425 = vunpack.c.l.b16 %v124
    %v426 = vunpack.c.h.b16 %v124
    %v427 = vunpack.c.l.b16 %v125
    %v428 = vunpack.c.h.b16 %v125
    %v429 = vpack.c.b16 %v369, %v365
    %v430 = vpack.c.b16 %v370, %v366
    %v431 = vpack.c.b16 %v371, %v367
    %v432 = vpack.c.b16 %v372, %v368
    %v433 = vpack.c.b16 %v377, %v373
    %v434 = vpack.c.b16 %v378, %v374
    %v435 = vpack.c.b16 %v379, %v375
    %v436 = vpack.c.b16 %v380, %v376
    %v437 = vpack.c.b16 %v385, %v381
    %v438 = vpack.c.b16 %v386, %v382
    %v439 = vpack.c.b16 %v387, %v383
    %v440 = vpack.c.b16 %v388, %v384
    %v441 = vpack.c.b16 %v393, %v389
    %v442 = vpack.c.b16 %v394, %v390
    %v443 = vpack.c.b16 %v395, %v391
    %v444 = vpack.c.b16 %v396, %v392
    %v445 = vpack.c.b16 %v401, %v397
    %v446 = vpack.c.b16 %v402, %v398
    %v447 = vpack.c.b16 %v403, %v399
    %v448 = vpack.c.b16 %v404, %v400
    %v449 = vpack.c.b16 %v409, %v405
    %v450 = vpack.c.b16 %v410, %v406
    %v451 = vpack.c.b16 %v411, %v407
    %v452 = vpack.c.b16 %v412, %v408
    %v453 = vpack.c.b16 %v417, %v413
    %v454 = vpack.c.b16 %v418, %v414
    %v455 = vpack.c.b16 %v419, %v415
    %v456 = vpack.c.b16 %v420, %v416
    %v457 = vpack.c.b16 %v425, %v421
    %v458 = vpack.c.b16 %v426, %v422
    %v459 = vpack.c.b16 %v427, %v423
    %v460 = vpack.c.b16 %v428, %v424
    %493 = vmatpush.bf16.msra.mxu0 %v457
    %494 = vmatpush.bf16.msra.mxu0 %v453
    %495 = vmatpush.bf16.msra.mxu0 %v449
    %496 = vmatpush.bf16.msra.mxu0 %v445
    %497 = vmatpush.bf16.msra.mxu0 %v441
    %498 = vmatpush.bf16.msra.mxu0 %v437
    %499 = vmatpush.bf16.msra.mxu0 %v433
    %500 = vmatpush.bf16.msra.mxu0 %v429
    %501 = vmatmul.bf16.gmra.mxu0 %v332
    %v502 = vpop.f32.mrf.mxu0
    %v503 = vadd.f32 0.0, %v502
    %v504 = vpop.f32.mrf.mxu0
    %505 = vdwg.mxu0
    %506 = vmatpush.bf16.msra.mxu0 %v458
    %507 = vmatpush.bf16.msra.mxu0 %v454
    %508 = vmatpush.bf16.msra.mxu0 %v450
    %509 = vmatpush.bf16.msra.mxu0 %v446
    %510 = vmatpush.bf16.msra.mxu0 %v442
    %511 = vmatpush.bf16.msra.mxu0 %v438
    %512 = vmatpush.bf16.msra.mxu0 %v434
    %513 = vmatpush.bf16.msra.mxu0 %v430
    %514 = vmatmul.bf16.gmra.mxu0 %v332
    %v515 = vpop.f32.mrf.mxu0
    %v516 = vadd.f32 0.0, %v515
    %v517 = vpop.f32.mrf.mxu0
    %518 = vdwg.mxu0
    %519 = vmatpush.bf16.msra.mxu0 %v459
    %520 = vmatpush.bf16.msra.mxu0 %v455
    %521 = vmatpush.bf16.msra.mxu0 %v451
    %522 = vmatpush.bf16.msra.mxu0 %v447
    %523 = vmatpush.bf16.msra.mxu0 %v443
    %524 = vmatpush.bf16.msra.mxu0 %v439
    %525 = vmatpush.bf16.msra.mxu0 %v435
    %526 = vmatpush.bf16.msra.mxu0 %v431
    %527 = vmatmul.bf16.gmra.mxu0 %v332
    %v528 = vpop.f32.mrf.mxu0
    %v529 = vadd.f32 0.0, %v528
    %v530 = vpop.f32.mrf.mxu0
    %531 = vdwg.mxu0
    %532 = vmatpush.bf16.msra.mxu0 %v460
    %533 = vmatpush.bf16.msra.mxu0 %v456
    %534 = vmatpush.bf16.msra.mxu0 %v452
    %535 = vmatpush.bf16.msra.mxu0 %v448
    %536 = vmatpush.bf16.msra.mxu0 %v444
    %537 = vmatpush.bf16.msra.mxu0 %v440
    %538 = vmatpush.bf16.msra.mxu0 %v436
    %539 = vmatpush.bf16.msra.mxu0 %v432
    %540 = vmatmul.bf16.gmra.mxu0 %v332
    %v541 = vpop.f32.mrf.mxu0
    %v542 = vadd.f32 0.0, %v541
    %v543 = vpop.f32.mrf.mxu0
    %544 = vdwg.mxu0
    %v545 = vadd.f32 %v328, %v503
    %v546 = vadd.f32 %v329, %v516
    %v547 = vadd.f32 %v330, %v529
    %v548 = vadd.f32 %v331, %v542
    %v549 = vxor.u32 %v545, 2147483648
    %v550 = vmul.f32 %v549, 1.442695
    %v551 = vpow.pop %v550
    %v552 = vadd.f32 %v551, 1.0
    %v553 = vrcp.pop %v552
    %v554 = vmul.f32 %v552, %v553
    %v555 = vsub.f32 1.0, %v554
    %v556 = vmul.f32 %v553, %v555
    %v557 = vadd.f32 %v553, %v556
    %vm558 = vweird.f32 %v552
    %vm559 = vweird.f32 %v553
    %vm560 = vmor %vm558, %vm559
    %v561 = vsel %vm560, %v553, %v557
    %v562 = vand.u32 2147483647, %v552
    %vm563 = vcmp.eq.f32.partialorder %v562, 8.507059e+37
    %v564 = vand.u32 %v552, 2147483648
    %v565 = vor.u32 1.1754944e-38, %v564
    %v566 = vsel %vm563, %v565, %v561
    %v567 = vmul.f32 1.0, %v566
    %v568 = vxor.u32 %v546, 2147483648
    %v569 = vmul.f32 %v568, 1.442695
    %v570 = vpow.pop %v569
    %v571 = vadd.f32 %v570, 1.0
    %v572 = vrcp.pop %v571
    %v573 = vmul.f32 %v571, %v572
    %v574 = vsub.f32 1.0, %v573
    %v575 = vmul.f32 %v572, %v574
    %v576 = vadd.f32 %v572, %v575
    %vm577 = vweird.f32 %v571
    %vm578 = vweird.f32 %v572
    %vm579 = vmor %vm577, %vm578
    %v580 = vsel %vm579, %v572, %v576
    %v581 = vand.u32 2147483647, %v571
    %vm582 = vcmp.eq.f32.partialorder %v581, 8.507059e+37
    %v583 = vand.u32 %v571, 2147483648
    %v584 = vor.u32 1.1754944e-38, %v583
    %v585 = vsel %vm582, %v584, %v580
    %v586 = vmul.f32 1.0, %v585
    %v587 = vtanh.pop %v547
    %v588 = vxor.u32 %v548, 2147483648
    %v589 = vmul.f32 %v588, 1.442695
    %v590 = vpow.pop %v589
    %v591 = vadd.f32 %v590, 1.0
    %v592 = vrcp.pop %v591
    %v593 = vmul.f32 %v591, %v592
    %v594 = vsub.f32 1.0, %v593
    %v595 = vmul.f32 %v592, %v594
    %v596 = vadd.f32 %v592, %v595
    %vm597 = vweird.f32 %v591
    %vm598 = vweird.f32 %v592
    %vm599 = vmor %vm597, %vm598
    %v600 = vsel %vm599, %v592, %v596
    %v601 = vand.u32 2147483647, %v591
    %vm602 = vcmp.eq.f32.partialorder %v601, 8.507059e+37
    %v603 = vand.u32 %v591, 2147483648
    %v604 = vor.u32 1.1754944e-38, %v603
    %v605 = vsel %vm602, %v604, %v600
    %v606 = vmul.f32 1.0, %v605
    %v607 = vmul.f32 %v586, %v223
    %v608 = vmul.f32 %v567, %v587
    %v609 = vadd.f32 %v607, %v608
    %v610 = vtanh.pop %v609
    %v611 = vmul.f32 %v606, %v610
    %v612 = vpack.c.bf16 %v611, %v611
    %v645 = vunpack.c.l.b16 %v126
    %v646 = vunpack.c.h.b16 %v126
    %v647 = vunpack.c.l.b16 %v127
    %v648 = vunpack.c.l.b16 %v128
    %v649 = vunpack.c.h.b16 %v128
    %v650 = vunpack.c.l.b16 %v129
    %v651 = vunpack.c.l.b16 %v130
    %v652 = vunpack.c.h.b16 %v130
    %v653 = vunpack.c.l.b16 %v131
    %v654 = vunpack.c.l.b16 %v132
    %v655 = vunpack.c.h.b16 %v132
    %v656 = vunpack.c.l.b16 %v133
    %v657 = vunpack.c.l.b16 %v134
    %v658 = vunpack.c.h.b16 %v134
    %v659 = vunpack.c.l.b16 %v135
    %v660 = vunpack.c.l.b16 %v136
    %v661 = vunpack.c.h.b16 %v136
    %v662 = vunpack.c.l.b16 %v137
    %v663 = vunpack.c.l.b16 %v138
    %v664 = vunpack.c.h.b16 %v138
    %v665 = vunpack.c.l.b16 %v139
    %v666 = vunpack.c.l.b16 %v140
    %v667 = vunpack.c.h.b16 %v140
    %v668 = vunpack.c.l.b16 %v141
    %v669 = vunpack.c.l.b16 %v142
    %v670 = vunpack.c.h.b16 %v142
    %v671 = vunpack.c.l.b16 %v143
    %v672 = vunpack.c.l.b16 %v144
    %v673 = vunpack.c.h.b16 %v144
    %v674 = vunpack.c.l.b16 %v145
    %v675 = vunpack.c.l.b16 %v146
    %v676 = vunpack.c.h.b16 %v146
    %v677 = vunpack.c.l.b16 %v147
    %v678 = vunpack.c.l.b16 %v148
    %v679 = vunpack.c.h.b16 %v148
    %v680 = vunpack.c.l.b16 %v149
    %v681 = vunpack.c.l.b16 %v150
    %v682 = vunpack.c.h.b16 %v150
    %v683 = vunpack.c.l.b16 %v151
    %v684 = vunpack.c.l.b16 %v152
    %v685 = vunpack.c.h.b16 %v152
    %v686 = vunpack.c.l.b16 %v153
    %v687 = vunpack.c.l.b16 %v154
    %v688 = vunpack.c.h.b16 %v154
    %v689 = vunpack.c.l.b16 %v155
    %v690 = vunpack.c.l.b16 %v156
    %v691 = vunpack.c.h.b16 %v156
    %v692 = vunpack.c.l.b16 %v157
    %v693 = vpack.c.b16 %v648, %v645
    %v694 = vpack.c.b16 %v649, %v646
    %v695 = vpack.c.b16 %v650, %v647
    %v696 = vpack.c.b16 %v654, %v651
    %v697 = vpack.c.b16 %v655, %v652
    %v698 = vpack.c.b16 %v656, %v653
    %v699 = vpack.c.b16 %v660, %v657
    %v700 = vpack.c.b16 %v661, %v658
    %v701 = vpack.c.b16 %v662, %v659
    %v702 = vpack.c.b16 %v666, %v663
    %v703 = vpack.c.b16 %v667, %v664
    %v704 = vpack.c.b16 %v668, %v665
    %v705 = vpack.c.b16 %v672, %v669
    %v706 = vpack.c.b16 %v673, %v670
    %v707 = vpack.c.b16 %v674, %v671
    %v708 = vpack.c.b16 %v678, %v675
    %v709 = vpack.c.b16 %v679, %v676
    %v710 = vpack.c.b16 %v680, %v677
    %v711 = vpack.c.b16 %v684, %v681
    %v712 = vpack.c.b16 %v685, %v682
    %v713 = vpack.c.b16 %v686, %v683
    %v714 = vpack.c.b16 %v690, %v687
    %v715 = vpack.c.b16 %v691, %v688
    %v716 = vpack.c.b16 %v692, %v689
    %741 = vmatpush.bf16.msra.mxu0 %v714
    %742 = vmatpush.bf16.msra.mxu0 %v711
    %743 = vmatpush.bf16.msra.mxu0 %v708
    %744 = vmatpush.bf16.msra.mxu0 %v705
    %745 = vmatpush.bf16.msra.mxu0 %v702
    %746 = vmatpush.bf16.msra.mxu0 %v699
    %747 = vmatpush.bf16.msra.mxu0 %v696
    %748 = vmatpush.bf16.msra.mxu0 %v693
    %749 = vmatmul.bf16.gmra.mxu0 %v612
    %v750 = vpop.f32.mrf.mxu0
    %v751 = vadd.f32 0.0, %v750
    %v752 = vpop.f32.mrf.mxu0
    %753 = vdwg.mxu0
    %754 = vmatpush.bf16.msra.mxu0 %v715
    %755 = vmatpush.bf16.msra.mxu0 %v712
    %756 = vmatpush.bf16.msra.mxu0 %v709
    %757 = vmatpush.bf16.msra.mxu0 %v706
    %758 = vmatpush.bf16.msra.mxu0 %v703
    %759 = vmatpush.bf16.msra.mxu0 %v700
    %760 = vmatpush.bf16.msra.mxu0 %v697
    %761 = vmatpush.bf16.msra.mxu0 %v694
    %762 = vmatmul.bf16.gmra.mxu0 %v612
    %v763 = vpop.f32.mrf.mxu0
    %v764 = vadd.f32 0.0, %v763
    %v765 = vpop.f32.mrf.mxu0
    %766 = vdwg.mxu0
    %767 = vmatpush.bf16.msra.mxu0 %v716
    %768 = vmatpush.bf16.msra.mxu0 %v713
    %769 = vmatpush.bf16.msra.mxu0 %v710
    %770 = vmatpush.bf16.msra.mxu0 %v707
    %771 = vmatpush.bf16.msra.mxu0 %v704
    %772 = vmatpush.bf16.msra.mxu0 %v701
    %773 = vmatpush.bf16.msra.mxu0 %v698
    %774 = vmatpush.bf16.msra.mxu0 %v695
    %775 = vmatmul.bf16.gmra.mxu0 %v612
    %v776 = vpop.f32.mrf.mxu0
    %v777 = vadd.f32 0.0, %v776
    %v778 = vpop.f32.mrf.mxu0
    %779 = vdwg.mxu0
    %v780 = vadd.f32 %v202, %v751
    %v781 = vadd.f32 %v203, %v764
    %v782 = vadd.f32 %v204, %v777
    %v783 = vpack.c.bf16 %v224, %v224
    %v816 = vunpack.c.l.b16 %v158
    %v817 = vunpack.c.h.b16 %v158
    %v818 = vunpack.c.l.b16 %v159
    %v819 = vunpack.c.l.b16 %v160
    %v820 = vunpack.c.h.b16 %v160
    %v821 = vunpack.c.l.b16 %v161
    %v822 = vunpack.c.l.b16 %v162
    %v823 = vunpack.c.h.b16 %v162
    %v824 = vunpack.c.l.b16 %v163
    %v825 = vunpack.c.l.b16 %v164
    %v826 = vunpack.c.h.b16 %v164
    %v827 = vunpack.c.l.b16 %v165
    %v828 = vunpack.c.l.b16 %v166
    %v829 = vunpack.c.h.b16 %v166
    %v830 = vunpack.c.l.b16 %v167
    %v831 = vunpack.c.l.b16 %v168
    %v832 = vunpack.c.h.b16 %v168
    %v833 = vunpack.c.l.b16 %v169
    %v834 = vunpack.c.l.b16 %v170
    %v835 = vunpack.c.h.b16 %v170
    %v836 = vunpack.c.l.b16 %v171
    %v837 = vunpack.c.l.b16 %v172
    %v838 = vunpack.c.h.b16 %v172
    %v839 = vunpack.c.l.b16 %v173
    %v840 = vunpack.c.l.b16 %v174
    %v841 = vunpack.c.h.b16 %v174
    %v842 = vunpack.c.l.b16 %v175
    %v843 = vunpack.c.l.b16 %v176
    %v844 = vunpack.c.h.b16 %v176
    %v845 = vunpack.c.l.b16 %v177
    %v846 = vunpack.c.l.b16 %v178
    %v847 = vunpack.c.h.b16 %v178
    %v848 = vunpack.c.l.b16 %v179
    %v849 = vunpack.c.l.b16 %v180
    %v850 = vunpack.c.h.b16 %v180
    %v851 = vunpack.c.l.b16 %v181
    %v852 = vunpack.c.l.b16 %v182
    %v853 = vunpack.c.h.b16 %v182
    %v854 = vunpack.c.l.b16 %v183
    %v855 = vunpack.c.l.b16 %v184
    %v856 = vunpack.c.h.b16 %v184
    %v857 = vunpack.c.l.b16 %v185
    %v858 = vunpack.c.l.b16 %v186
    %v859 = vunpack.c.h.b16 %v186
    %v860 = vunpack.c.l.b16 %v187
    %v861 = vunpack.c.l.b16 %v188
    %v862 = vunpack.c.h.b16 %v188
    %v863 = vunpack.c.l.b16 %v189
    %v864 = vpack.c.b16 %v819, %v816
    %v865 = vpack.c.b16 %v820, %v817
    %v866 = vpack.c.b16 %v821, %v818
    %v867 = vpack.c.b16 %v825, %v822
    %v868 = vpack.c.b16 %v826, %v823
    %v869 = vpack.c.b16 %v827, %v824
    %v870 = vpack.c.b16 %v831, %v828
    %v871 = vpack.c.b16 %v832, %v829
    %v872 = vpack.c.b16 %v833, %v830
    %v873 = vpack.c.b16 %v837, %v834
    %v874 = vpack.c.b16 %v838, %v835
    %v875 = vpack.c.b16 %v839, %v836
    %v876 = vpack.c.b16 %v843, %v840
    %v877 = vpack.c.b16 %v844, %v841
    %v878 = vpack.c.b16 %v845, %v842
    %v879 = vpack.c.b16 %v849, %v846
    %v880 = vpack.c.b16 %v850, %v847
    %v881 = vpack.c.b16 %v851, %v848
    %v882 = vpack.c.b16 %v855, %v852
    %v883 = vpack.c.b16 %v856, %v853
    %v884 = vpack.c.b16 %v857, %v854
    %v885 = vpack.c.b16 %v861, %v858
    %v886 = vpack.c.b16 %v862, %v859
    %v887 = vpack.c.b16 %v863, %v860
    %912 = vmatpush.bf16.msra.mxu0 %v885
    %913 = vmatpush.bf16.msra.mxu0 %v882
    %914 = vmatpush.bf16.msra.mxu0 %v879
    %915 = vmatpush.bf16.msra.mxu0 %v876
    %916 = vmatpush.bf16.msra.mxu0 %v873
    %917 = vmatpush.bf16.msra.mxu0 %v870
    %918 = vmatpush.bf16.msra.mxu0 %v867
    %919 = vmatpush.bf16.msra.mxu0 %v864
    %920 = vmatmul.bf16.gmra.mxu0 %v783
    %v921 = vpop.f32.mrf.mxu0
    %v922 = vadd.f32 0.0, %v921
    %v923 = vpop.f32.mrf.mxu0
    %924 = vdwg.mxu0
    %925 = vmatpush.bf16.msra.mxu0 %v886
    %926 = vmatpush.bf16.msra.mxu0 %v883
    %927 = vmatpush.bf16.msra.mxu0 %v880
    %928 = vmatpush.bf16.msra.mxu0 %v877
    %929 = vmatpush.bf16.msra.mxu0 %v874
    %930 = vmatpush.bf16.msra.mxu0 %v871
    %931 = vmatpush.bf16.msra.mxu0 %v868
    %932 = vmatpush.bf16.msra.mxu0 %v865
    %933 = vmatmul.bf16.gmra.mxu0 %v783
    %v934 = vpop.f32.mrf.mxu0
    %v935 = vadd.f32 0.0, %v934
    %v936 = vpop.f32.mrf.mxu0
    %937 = vdwg.mxu0
    %938 = vmatpush.bf16.msra.mxu0 %v887
    %939 = vmatpush.bf16.msra.mxu0 %v884
    %940 = vmatpush.bf16.msra.mxu0 %v881
    %941 = vmatpush.bf16.msra.mxu0 %v878
    %942 = vmatpush.bf16.msra.mxu0 %v875
    %943 = vmatpush.bf16.msra.mxu0 %v872
    %944 = vmatpush.bf16.msra.mxu0 %v869
    %945 = vmatpush.bf16.msra.mxu0 %v866
    %946 = vmatmul.bf16.gmra.mxu0 %v783
    %v947 = vpop.f32.mrf.mxu0
    %v948 = vadd.f32 0.0, %v947
    %v949 = vpop.f32.mrf.mxu0
    %950 = vdwg.mxu0
    %v951 = vadd.f32 %v210, %v922
    %v952 = vadd.f32 %v211, %v935
    %v953 = vadd.f32 %v212, %v948
    %v954 = vadd.f32 %v780, %v951
    %v955 = vxor.u32 %v954, 2147483648
    %v956 = vmul.f32 %v955, 1.442695
    %v957 = vpow.pop %v956
    %v958 = vadd.f32 %v957, 1.0
    %v959 = vrcp.pop %v958
    %v960 = vmul.f32 %v958, %v959
    %v961 = vsub.f32 1.0, %v960
    %v962 = vmul.f32 %v959, %v961
    %v963 = vadd.f32 %v959, %v962
    %vm964 = vweird.f32 %v958
    %vm965 = vweird.f32 %v959
    %vm966 = vmor %vm964, %vm965
    %v967 = vsel %vm966, %v959, %v963
    %v968 = vand.u32 2147483647, %v958
    %vm969 = vcmp.eq.f32.partialorder %v968, 8.507059e+37
    %v970 = vand.u32 %v958, 2147483648
    %v971 = vor.u32 1.1754944e-38, %v970
    %v972 = vsel %vm969, %v971, %v967
    %v973 = vmul.f32 1.0, %v972
    %v974 = vadd.f32 %v781, %v952
    %v975 = vxor.u32 %v974, 2147483648
    %v976 = vmul.f32 %v975, 1.442695
    %v977 = vpow.pop %v976
    %v978 = vadd.f32 %v977, 1.0
    %v979 = vrcp.pop %v978
    %v980 = vmul.f32 %v978, %v979
    %v981 = vsub.f32 1.0, %v980
    %v982 = vmul.f32 %v979, %v981
    %v983 = vadd.f32 %v979, %v982
    %vm984 = vweird.f32 %v978
    %vm985 = vweird.f32 %v979
    %vm986 = vmor %vm984, %vm985
    %v987 = vsel %vm986, %v979, %v983
    %v988 = vand.u32 2147483647, %v978
    %vm989 = vcmp.eq.f32.partialorder %v988, 8.507059e+37
    %v990 = vand.u32 %v978, 2147483648
    %v991 = vor.u32 1.1754944e-38, %v990
    %v992 = vsel %vm989, %v991, %v987
    %v993 = vmul.f32 1.0, %v992
    %v994 = vmul.f32 %v973, %v953
    %v995 = vadd.f32 %v782, %v994
    %v996 = vtanh.pop %v995
    %v997 = vsub.f32 1.0, %v993
    %v998 = vmul.f32 %v997, %v996
    %v999 = vmul.f32 %v993, %v224
    %v1000 = vadd.f32 %v998, %v999
    %v1001 = vmax.f32 %v1000, 0.0
    %v1002 = vmul.f32 %v1001, %v218
    %vm1003 = vcmask 1041408
    %v1004 = vsel %vm1003, %v1002, 0.0
    %1005 = vadd.xlane.f32.xlu0 %v1004
    %v1006 = vpop.xlane.xlu0 %1005
    %vm1007 = vcmp.eq.s32.totalorder %v221, 0
    %v1008 = vsel %vm1007, %v1006, 0.0
    %s1009 = scalar_lea.vmem %s0, 2
    %v1010 = vld [vmem:[%s1009] sm:$0x3]
    %1011 = vst [vmem:[#allocation1] ss:$2 sm:$0xff] %v92
    %s1012 = scalar_lea.vmem [#allocation1], 16
    %1013 = vst [vmem:[%s1012] ss:$2 sm:$0xff] %v93
    %v1014 = vld.sshfl [vmem:[#allocation1] sm:$0xff pattern:$0x75316420]
    %v1015 = vld.sshfl [vmem:[#allocation1 + $0x8] sm:$0xff pattern:$0x75316420]
    %v1016 = vld.sshfl [vmem:[#allocation1 + $0x10] sm:$0xff pattern:$0x75316420]
    %v1017 = vld.sshfl [vmem:[#allocation1 + $0x18] sm:$0xff pattern:$0x75316420]
    %v1019 = vsel %vm235, %v1010, 0
    %v1021 = vsel %vm239, %v1014, 0
    %v1023 = vsel %vm239, %v1015, 0
    %v1025 = vsel %vm239, %v1016, 0
    %v1027 = vsel %vm239, %v1017, 0
    %1029 = vmatpush.msra.mxu0 0.0
    %1030 = vmatpush.msra.mxu0 0.0
    %1031 = vmatpush.msra.mxu0 0.0
    %1032 = vmatpush.msra.mxu0 0.0
    %1033 = vmatpush.msra.mxu0 0.0
    %1034 = vmatpush.msra.mxu0 0.0
    %1035 = vmatpush.msra.mxu0 0.0
    %1036 = vmatpush.msra.mxu0 0.0
    %1037 = vmatpush.msra.mxu0 0.0
    %1038 = vmatpush.msra.mxu0 0.0
    %1039 = vmatpush.msra.mxu0 0.0
    %1040 = vmatpush.msra.mxu0 0.0
    %1041 = vmatpush.msra.mxu0 0.0
    %1042 = vmatpush.msra.mxu0 0.0
    %1043 = vmatpush.msra.mxu0 0.0
    %1044 = vmatpush.msra.mxu0 %v1021
    %1045 = vmatmul.f32.gmra.mxu0 %v1019
    %v1046 = vpop.f32.mrf.mxu0
    %v1047 = vadd.f32 0.0, %v1046
    %1048 = vdwg.mxu0
    %1049 = vmatpush.msra.mxu0 0.0
    %1050 = vmatpush.msra.mxu0 0.0
    %1051 = vmatpush.msra.mxu0 0.0
    %1052 = vmatpush.msra.mxu0 0.0
    %1053 = vmatpush.msra.mxu0 0.0
    %1054 = vmatpush.msra.mxu0 0.0
    %1055 = vmatpush.msra.mxu0 0.0
    %1056 = vmatpush.msra.mxu0 0.0
    %1057 = vmatpush.msra.mxu0 0.0
    %1058 = vmatpush.msra.mxu0 0.0
    %1059 = vmatpush.msra.mxu0 0.0
    %1060 = vmatpush.msra.mxu0 0.0
    %1061 = vmatpush.msra.mxu0 0.0
    %1062 = vmatpush.msra.mxu0 0.0
    %1063 = vmatpush.msra.mxu0 0.0
    %1064 = vmatpush.msra.mxu0 %v1023
    %1065 = vmatmul.f32.gmra.mxu0 %v1019
    %v1066 = vpop.f32.mrf.mxu0
    %v1067 = vadd.f32 0.0, %v1066
    %1068 = vdwg.mxu0
    %1069 = vmatpush.msra.mxu0 0.0
    %1070 = vmatpush.msra.mxu0 0.0
    %1071 = vmatpush.msra.mxu0 0.0
    %1072 = vmatpush.msra.mxu0 0.0
    %1073 = vmatpush.msra.mxu0 0.0
    %1074 = vmatpush.msra.mxu0 0.0
    %1075 = vmatpush.msra.mxu0 0.0
    %1076 = vmatpush.msra.mxu0 0.0
    %1077 = vmatpush.msra.mxu0 0.0
    %1078 = vmatpush.msra.mxu0 0.0
    %1079 = vmatpush.msra.mxu0 0.0
    %1080 = vmatpush.msra.mxu0 0.0
    %1081 = vmatpush.msra.mxu0 0.0
    %1082 = vmatpush.msra.mxu0 0.0
    %1083 = vmatpush.msra.mxu0 0.0
    %1084 = vmatpush.msra.mxu0 %v1025
    %1085 = vmatmul.f32.gmra.mxu0 %v1019
    %v1086 = vpop.f32.mrf.mxu0
    %v1087 = vadd.f32 0.0, %v1086
    %1088 = vdwg.mxu0
    %1089 = vmatpush.msra.mxu0 0.0
    %1090 = vmatpush.msra.mxu0 0.0
    %1091 = vmatpush.msra.mxu0 0.0
    %1092 = vmatpush.msra.mxu0 0.0
    %1093 = vmatpush.msra.mxu0 0.0
    %1094 = vmatpush.msra.mxu0 0.0
    %1095 = vmatpush.msra.mxu0 0.0
    %1096 = vmatpush.msra.mxu0 0.0
    %1097 = vmatpush.msra.mxu0 0.0
    %1098 = vmatpush.msra.mxu0 0.0
    %1099 = vmatpush.msra.mxu0 0.0
    %1100 = vmatpush.msra.mxu0 0.0
    %1101 = vmatpush.msra.mxu0 0.0
    %1102 = vmatpush.msra.mxu0 0.0
    %1103 = vmatpush.msra.mxu0 0.0
    %1104 = vmatpush.msra.mxu0 %v1027
    %1105 = vmatmul.f32.gmra.mxu0 %v1019
    %v1106 = vpop.f32.mrf.mxu0
    %v1107 = vadd.f32 0.0, %v1106
    %1108 = vdwg.mxu0
    %v1109 = vadd.f32 %v192, %v1047
    %v1110 = vadd.f32 %v193, %v1067
    %v1111 = vadd.f32 %v194, %v1087
    %v1112 = vadd.f32 %v195, %v1107
    %1113 = vmatpush.bf16.msra.mxu0 %v457
    %1114 = vmatpush.bf16.msra.mxu0 %v453
    %1115 = vmatpush.bf16.msra.mxu0 %v449
    %1116 = vmatpush.bf16.msra.mxu0 %v445
    %1117 = vmatpush.bf16.msra.mxu0 %v441
    %1118 = vmatpush.bf16.msra.mxu0 %v437
    %1119 = vmatpush.bf16.msra.mxu0 %v433
    %1120 = vmatpush.bf16.msra.mxu0 %v429
    %1121 = vmatmul.bf16.gmra.mxu0 %v612
    %v1122 = vpop.f32.mrf.mxu0
    %v1123 = vadd.f32 0.0, %v1122
    %v1124 = vpop.f32.mrf.mxu0
    %1125 = vdwg.mxu0
    %1126 = vmatpush.bf16.msra.mxu0 %v458
    %1127 = vmatpush.bf16.msra.mxu0 %v454
    %1128 = vmatpush.bf16.msra.mxu0 %v450
    %1129 = vmatpush.bf16.msra.mxu0 %v446
    %1130 = vmatpush.bf16.msra.mxu0 %v442
    %1131 = vmatpush.bf16.msra.mxu0 %v438
    %1132 = vmatpush.bf16.msra.mxu0 %v434
    %1133 = vmatpush.bf16.msra.mxu0 %v430
    %1134 = vmatmul.bf16.gmra.mxu0 %v612
    %v1135 = vpop.f32.mrf.mxu0
    %v1136 = vadd.f32 0.0, %v1135
    %v1137 = vpop.f32.mrf.mxu0
    %1138 = vdwg.mxu0
    %1139 = vmatpush.bf16.msra.mxu0 %v459
    %1140 = vmatpush.bf16.msra.mxu0 %v455
    %1141 = vmatpush.bf16.msra.mxu0 %v451
    %1142 = vmatpush.bf16.msra.mxu0 %v447
    %1143 = vmatpush.bf16.msra.mxu0 %v443
    %1144 = vmatpush.bf16.msra.mxu0 %v439
    %1145 = vmatpush.bf16.msra.mxu0 %v435
    %1146 = vmatpush.bf16.msra.mxu0 %v431
    %1147 = vmatmul.bf16.gmra.mxu0 %v612
    %v1148 = vpop.f32.mrf.mxu0
    %v1149 = vadd.f32 0.0, %v1148
    %v1150 = vpop.f32.mrf.mxu0
    %1151 = vdwg.mxu0
    %1152 = vmatpush.bf16.msra.mxu0 %v460
    %1153 = vmatpush.bf16.msra.mxu0 %v456
    %1154 = vmatpush.bf16.msra.mxu0 %v452
    %1155 = vmatpush.bf16.msra.mxu0 %v448
    %1156 = vmatpush.bf16.msra.mxu0 %v444
    %1157 = vmatpush.bf16.msra.mxu0 %v440
    %1158 = vmatpush.bf16.msra.mxu0 %v436
    %1159 = vmatpush.bf16.msra.mxu0 %v432
    %1160 = vmatmul.bf16.gmra.mxu0 %v612
    %v1161 = vpop.f32.mrf.mxu0
    %v1162 = vadd.f32 0.0, %v1161
    %v1163 = vpop.f32.mrf.mxu0
    %1164 = vdwg.mxu0
    %v1165 = vadd.f32 %v1109, %v1123
    %v1166 = vadd.f32 %v1110, %v1136
    %v1167 = vadd.f32 %v1111, %v1149
    %v1168 = vadd.f32 %v1112, %v1162
    %v1169 = vxor.u32 %v1165, 2147483648
    %v1170 = vmul.f32 %v1169, 1.442695
    %v1171 = vpow.pop %v1170
    %v1172 = vadd.f32 %v1171, 1.0
    %v1173 = vrcp.pop %v1172
    %v1174 = vmul.f32 %v1172, %v1173
    %v1175 = vsub.f32 1.0, %v1174
    %v1176 = vmul.f32 %v1173, %v1175
    %v1177 = vadd.f32 %v1173, %v1176
    %vm1178 = vweird.f32 %v1172
    %vm1179 = vweird.f32 %v1173
    %vm1180 = vmor %vm1178, %vm1179
    %v1181 = vsel %vm1180, %v1173, %v1177
    %v1182 = vand.u32 2147483647, %v1172
    %vm1183 = vcmp.eq.f32.partialorder %v1182, 8.507059e+37
    %v1184 = vand.u32 %v1172, 2147483648
    %v1185 = vor.u32 1.1754944e-38, %v1184
    %v1186 = vsel %vm1183, %v1185, %v1181
    %v1187 = vmul.f32 1.0, %v1186
    %v1188 = vxor.u32 %v1166, 2147483648
    %v1189 = vmul.f32 %v1188, 1.442695
    %v1190 = vpow.pop %v1189
    %v1191 = vadd.f32 %v1190, 1.0
    %v1192 = vrcp.pop %v1191
    %v1193 = vmul.f32 %v1191, %v1192
    %v1194 = vsub.f32 1.0, %v1193
    %v1195 = vmul.f32 %v1192, %v1194
    %v1196 = vadd.f32 %v1192, %v1195
    %vm1197 = vweird.f32 %v1191
    %vm1198 = vweird.f32 %v1192
    %vm1199 = vmor %vm1197, %vm1198
    %v1200 = vsel %vm1199, %v1192, %v1196
    %v1201 = vand.u32 2147483647, %v1191
    %vm1202 = vcmp.eq.f32.partialorder %v1201, 8.507059e+37
    %v1203 = vand.u32 %v1191, 2147483648
    %v1204 = vor.u32 1.1754944e-38, %v1203
    %v1205 = vsel %vm1202, %v1204, %v1200
    %v1206 = vmul.f32 1.0, %v1205
    %v1207 = vtanh.pop %v1167
    %v1208 = vxor.u32 %v1168, 2147483648
    %v1209 = vmul.f32 %v1208, 1.442695
    %v1210 = vpow.pop %v1209
    %v1211 = vadd.f32 %v1210, 1.0
    %v1212 = vrcp.pop %v1211
    %v1213 = vmul.f32 %v1211, %v1212
    %v1214 = vsub.f32 1.0, %v1213
    %v1215 = vmul.f32 %v1212, %v1214
    %v1216 = vadd.f32 %v1212, %v1215
    %vm1217 = vweird.f32 %v1211
    %vm1218 = vweird.f32 %v1212
    %vm1219 = vmor %vm1217, %vm1218
    %v1220 = vsel %vm1219, %v1212, %v1216
    %v1221 = vand.u32 2147483647, %v1211
    %vm1222 = vcmp.eq.f32.partialorder %v1221, 8.507059e+37
    %v1223 = vand.u32 %v1211, 2147483648
    %v1224 = vor.u32 1.1754944e-38, %v1223
    %v1225 = vsel %vm1222, %v1224, %v1220
    %v1226 = vmul.f32 1.0, %v1225
    %v1227 = vmul.f32 %v1206, %v609
    %v1228 = vmul.f32 %v1187, %v1207
    %v1229 = vadd.f32 %v1227, %v1228
    %v1230 = vtanh.pop %v1229
    %v1231 = vmul.f32 %v1226, %v1230
    %v1232 = vpack.c.bf16 %v1231, %v1231
    %1233 = vmatpush.bf16.msra.mxu0 %v714
    %1234 = vmatpush.bf16.msra.mxu0 %v711
    %1235 = vmatpush.bf16.msra.mxu0 %v708
    %1236 = vmatpush.bf16.msra.mxu0 %v705
    %1237 = vmatpush.bf16.msra.mxu0 %v702
    %1238 = vmatpush.bf16.msra.mxu0 %v699
    %1239 = vmatpush.bf16.msra.mxu0 %v696
    %1240 = vmatpush.bf16.msra.mxu0 %v693
    %1241 = vmatmul.bf16.gmra.mxu0 %v1232
    %v1242 = vpop.f32.mrf.mxu0
    %v1243 = vadd.f32 0.0, %v1242
    %v1244 = vpop.f32.mrf.mxu0
    %1245 = vdwg.mxu0
    %1246 = vmatpush.bf16.msra.mxu0 %v715
    %1247 = vmatpush.bf16.msra.mxu0 %v712
    %1248 = vmatpush.bf16.msra.mxu0 %v709
    %1249 = vmatpush.bf16.msra.mxu0 %v706
    %1250 = vmatpush.bf16.msra.mxu0 %v703
    %1251 = vmatpush.bf16.msra.mxu0 %v700
    %1252 = vmatpush.bf16.msra.mxu0 %v697
    %1253 = vmatpush.bf16.msra.mxu0 %v694
    %1254 = vmatmul.bf16.gmra.mxu0 %v1232
    %v1255 = vpop.f32.mrf.mxu0
    %v1256 = vadd.f32 0.0, %v1255
    %v1257 = vpop.f32.mrf.mxu0
    %1258 = vdwg.mxu0
    %1259 = vmatpush.bf16.msra.mxu0 %v716
    %1260 = vmatpush.bf16.msra.mxu0 %v713
    %1261 = vmatpush.bf16.msra.mxu0 %v710
    %1262 = vmatpush.bf16.msra.mxu0 %v707
    %1263 = vmatpush.bf16.msra.mxu0 %v704
    %1264 = vmatpush.bf16.msra.mxu0 %v701
    %1265 = vmatpush.bf16.msra.mxu0 %v698
    %1266 = vmatpush.bf16.msra.mxu0 %v695
    %1267 = vmatmul.bf16.gmra.mxu0 %v1232
    %v1268 = vpop.f32.mrf.mxu0
    %v1269 = vadd.f32 0.0, %v1268
    %v1270 = vpop.f32.mrf.mxu0
    %1271 = vdwg.mxu0
    %v1272 = vadd.f32 %v202, %v1243
    %v1273 = vadd.f32 %v203, %v1256
    %v1274 = vadd.f32 %v204, %v1269
    %v1275 = vpack.c.bf16 %v1000, %v1000
    %1276 = vmatpush.bf16.msra.mxu0 %v885
    %1277 = vmatpush.bf16.msra.mxu0 %v882
    %1278 = vmatpush.bf16.msra.mxu0 %v879
    %1279 = vmatpush.bf16.msra.mxu0 %v876
    %1280 = vmatpush.bf16.msra.mxu0 %v873
    %1281 = vmatpush.bf16.msra.mxu0 %v870
    %1282 = vmatpush.bf16.msra.mxu0 %v867
    %1283 = vmatpush.bf16.msra.mxu0 %v864
    %1284 = vmatmul.bf16.gmra.mxu0 %v1275
    %v1285 = vpop.f32.mrf.mxu0
    %v1286 = vadd.f32 0.0, %v1285
    %v1287 = vpop.f32.mrf.mxu0
    %1288 = vdwg.mxu0
    %1289 = vmatpush.bf16.msra.mxu0 %v886
    %1290 = vmatpush.bf16.msra.mxu0 %v883
    %1291 = vmatpush.bf16.msra.mxu0 %v880
    %1292 = vmatpush.bf16.msra.mxu0 %v877
    %1293 = vmatpush.bf16.msra.mxu0 %v874
    %1294 = vmatpush.bf16.msra.mxu0 %v871
    %1295 = vmatpush.bf16.msra.mxu0 %v868
    %1296 = vmatpush.bf16.msra.mxu0 %v865
    %1297 = vmatmul.bf16.gmra.mxu0 %v1275
    %v1298 = vpop.f32.mrf.mxu0
    %v1299 = vadd.f32 0.0, %v1298
    %v1300 = vpop.f32.mrf.mxu0
    %1301 = vdwg.mxu0
    %1302 = vmatpush.bf16.msra.mxu0 %v887
    %1303 = vmatpush.bf16.msra.mxu0 %v884
    %1304 = vmatpush.bf16.msra.mxu0 %v881
    %1305 = vmatpush.bf16.msra.mxu0 %v878
    %1306 = vmatpush.bf16.msra.mxu0 %v875
    %1307 = vmatpush.bf16.msra.mxu0 %v872
    %1308 = vmatpush.bf16.msra.mxu0 %v869
    %1309 = vmatpush.bf16.msra.mxu0 %v866
    %1310 = vmatmul.bf16.gmra.mxu0 %v1275
    %v1311 = vpop.f32.mrf.mxu0
    %v1312 = vadd.f32 0.0, %v1311
    %v1313 = vpop.f32.mrf.mxu0
    %1314 = vdwg.mxu0
    %v1315 = vadd.f32 %v210, %v1286
    %v1316 = vadd.f32 %v211, %v1299
    %v1317 = vadd.f32 %v212, %v1312
    %v1318 = vadd.f32 %v1272, %v1315
    %v1319 = vxor.u32 %v1318, 2147483648
    %v1320 = vmul.f32 %v1319, 1.442695
    %v1321 = vpow.pop %v1320
    %v1322 = vadd.f32 %v1321, 1.0
    %v1323 = vrcp.pop %v1322
    %v1324 = vmul.f32 %v1322, %v1323
    %v1325 = vsub.f32 1.0, %v1324
    %v1326 = vmul.f32 %v1323, %v1325
    %v1327 = vadd.f32 %v1323, %v1326
    %vm1328 = vweird.f32 %v1322
    %vm1329 = vweird.f32 %v1323
    %vm1330 = vmor %vm1328, %vm1329
    %v1331 = vsel %vm1330, %v1323, %v1327
    %v1332 = vand.u32 2147483647, %v1322
    %vm1333 = vcmp.eq.f32.partialorder %v1332, 8.507059e+37
    %v1334 = vand.u32 %v1322, 2147483648
    %v1335 = vor.u32 1.1754944e-38, %v1334
    %v1336 = vsel %vm1333, %v1335, %v1331
    %v1337 = vmul.f32 1.0, %v1336
    %v1338 = vadd.f32 %v1273, %v1316
    %v1339 = vxor.u32 %v1338, 2147483648
    %v1340 = vmul.f32 %v1339, 1.442695
    %v1341 = vpow.pop %v1340
    %v1342 = vadd.f32 %v1341, 1.0
    %v1343 = vrcp.pop %v1342
    %v1344 = vmul.f32 %v1342, %v1343
    %v1345 = vsub.f32 1.0, %v1344
    %v1346 = vmul.f32 %v1343, %v1345
    %v1347 = vadd.f32 %v1343, %v1346
    %vm1348 = vweird.f32 %v1342
    %vm1349 = vweird.f32 %v1343
    %vm1350 = vmor %vm1348, %vm1349
    %v1351 = vsel %vm1350, %v1343, %v1347
    %v1352 = vand.u32 2147483647, %v1342
    %vm1353 = vcmp.eq.f32.partialorder %v1352, 8.507059e+37
    %v1354 = vand.u32 %v1342, 2147483648
    %v1355 = vor.u32 1.1754944e-38, %v1354
    %v1356 = vsel %vm1353, %v1355, %v1351
    %v1357 = vmul.f32 1.0, %v1356
    %v1358 = vmul.f32 %v1337, %v1317
    %v1359 = vadd.f32 %v1274, %v1358
    %v1360 = vtanh.pop %v1359
    %v1361 = vsub.f32 1.0, %v1357
    %v1362 = vmul.f32 %v1361, %v1360
    %v1363 = vmul.f32 %v1357, %v1000
    %v1364 = vadd.f32 %v1362, %v1363
    %v1365 = vmax.f32 %v1364, 0.0
    %v1366 = vmul.f32 %v1365, %v218
    %v1367 = vsel %vm1003, %v1366, 0.0
    %1368 = vadd.xlane.f32.xlu0 %v1367
    %v1369 = vpop.xlane.xlu0 %1368
    %vm1370 = vcmp.eq.s32.totalorder %v221, 1
    %v1371 = vsel %vm1370, %v1369, %v1008
    %s1372 = scalar_lea.vmem %s0, 4
    %v1373 = vld [vmem:[%s1372] sm:$0x3]
    %1374 = vst [vmem:[#allocation1] ss:$2 sm:$0xff] %v92
    %s1375 = scalar_lea.vmem [#allocation1], 16
    %1376 = vst [vmem:[%s1375] ss:$2 sm:$0xff] %v93
    %v1377 = vld.sshfl [vmem:[#allocation1] sm:$0xff pattern:$0x75316420]
    %v1378 = vld.sshfl [vmem:[#allocation1 + $0x8] sm:$0xff pattern:$0x75316420]
    %v1379 = vld.sshfl [vmem:[#allocation1 + $0x10] sm:$0xff pattern:$0x75316420]
    %v1380 = vld.sshfl [vmem:[#allocation1 + $0x18] sm:$0xff pattern:$0x75316420]
    %v1382 = vsel %vm235, %v1373, 0
    %v1384 = vsel %vm239, %v1377, 0
    %v1386 = vsel %vm239, %v1378, 0
    %v1388 = vsel %vm239, %v1379, 0
    %v1390 = vsel %vm239, %v1380, 0
    %1392 = vmatpush.msra.mxu0 0.0
    %1393 = vmatpush.msra.mxu0 0.0
    %1394 = vmatpush.msra.mxu0 0.0
    %1395 = vmatpush.msra.mxu0 0.0
    %1396 = vmatpush.msra.mxu0 0.0
    %1397 = vmatpush.msra.mxu0 0.0
    %1398 = vmatpush.msra.mxu0 0.0
    %1399 = vmatpush.msra.mxu0 0.0
    %1400 = vmatpush.msra.mxu0 0.0
    %1401 = vmatpush.msra.mxu0 0.0
    %1402 = vmatpush.msra.mxu0 0.0
    %1403 = vmatpush.msra.mxu0 0.0
    %1404 = vmatpush.msra.mxu0 0.0
    %1405 = vmatpush.msra.mxu0 0.0
    %1406 = vmatpush.msra.mxu0 0.0
    %1407 = vmatpush.msra.mxu0 %v1384
    %1408 = vmatmul.f32.gmra.mxu0 %v1382
    %v1409 = vpop.f32.mrf.mxu0
    %v1410 = vadd.f32 0.0, %v1409
    %1411 = vdwg.mxu0
    %1412 = vmatpush.msra.mxu0 0.0
    %1413 = vmatpush.msra.mxu0 0.0
    %1414 = vmatpush.msra.mxu0 0.0
    %1415 = vmatpush.msra.mxu0 0.0
    %1416 = vmatpush.msra.mxu0 0.0
    %1417 = vmatpush.msra.mxu0 0.0
    %1418 = vmatpush.msra.mxu0 0.0
    %1419 = vmatpush.msra.mxu0 0.0
    %1420 = vmatpush.msra.mxu0 0.0
    %1421 = vmatpush.msra.mxu0 0.0
    %1422 = vmatpush.msra.mxu0 0.0
    %1423 = vmatpush.msra.mxu0 0.0
    %1424 = vmatpush.msra.mxu0 0.0
    %1425 = vmatpush.msra.mxu0 0.0
    %1426 = vmatpush.msra.mxu0 0.0
    %1427 = vmatpush.msra.mxu0 %v1386
    %1428 = vmatmul.f32.gmra.mxu0 %v1382
    %v1429 = vpop.f32.mrf.mxu0
    %v1430 = vadd.f32 0.0, %v1429
    %1431 = vdwg.mxu0
    %1432 = vmatpush.msra.mxu0 0.0
    %1433 = vmatpush.msra.mxu0 0.0
    %1434 = vmatpush.msra.mxu0 0.0
    %1435 = vmatpush.msra.mxu0 0.0
    %1436 = vmatpush.msra.mxu0 0.0
    %1437 = vmatpush.msra.mxu0 0.0
    %1438 = vmatpush.msra.mxu0 0.0
    %1439 = vmatpush.msra.mxu0 0.0
    %1440 = vmatpush.msra.mxu0 0.0
    %1441 = vmatpush.msra.mxu0 0.0
    %1442 = vmatpush.msra.mxu0 0.0
    %1443 = vmatpush.msra.mxu0 0.0
    %1444 = vmatpush.msra.mxu0 0.0
    %1445 = vmatpush.msra.mxu0 0.0
    %1446 = vmatpush.msra.mxu0 0.0
    %1447 = vmatpush.msra.mxu0 %v1388
    %1448 = vmatmul.f32.gmra.mxu0 %v1382
    %v1449 = vpop.f32.mrf.mxu0
    %v1450 = vadd.f32 0.0, %v1449
    %1451 = vdwg.mxu0
    %1452 = vmatpush.msra.mxu0 0.0
    %1453 = vmatpush.msra.mxu0 0.0
    %1454 = vmatpush.msra.mxu0 0.0
    %1455 = vmatpush.msra.mxu0 0.0
    %1456 = vmatpush.msra.mxu0 0.0
    %1457 = vmatpush.msra.mxu0 0.0
    %1458 = vmatpush.msra.mxu0 0.0
    %1459 = vmatpush.msra.mxu0 0.0
    %1460 = vmatpush.msra.mxu0 0.0
    %1461 = vmatpush.msra.mxu0 0.0
    %1462 = vmatpush.msra.mxu0 0.0
    %1463 = vmatpush.msra.mxu0 0.0
    %1464 = vmatpush.msra.mxu0 0.0
    %1465 = vmatpush.msra.mxu0 0.0
    %1466 = vmatpush.msra.mxu0 0.0
    %1467 = vmatpush.msra.mxu0 %v1390
    %1468 = vmatmul.f32.gmra.mxu0 %v1382
    %v1469 = vpop.f32.mrf.mxu0
    %v1470 = vadd.f32 0.0, %v1469
    %1471 = vdwg.mxu0
    %v1472 = vadd.f32 %v192, %v1410
    %v1473 = vadd.f32 %v193, %v1430
    %v1474 = vadd.f32 %v194, %v1450
    %v1475 = vadd.f32 %v195, %v1470
    %1476 = vmatpush.bf16.msra.mxu0 %v457
    %1477 = vmatpush.bf16.msra.mxu0 %v453
    %1478 = vmatpush.bf16.msra.mxu0 %v449
    %1479 = vmatpush.bf16.msra.mxu0 %v445
    %1480 = vmatpush.bf16.msra.mxu0 %v441
    %1481 = vmatpush.bf16.msra.mxu0 %v437
    %1482 = vmatpush.bf16.msra.mxu0 %v433
    %1483 = vmatpush.bf16.msra.mxu0 %v429
    %1484 = vmatmul.bf16.gmra.mxu0 %v1232
    %v1485 = vpop.f32.mrf.mxu0
    %v1486 = vadd.f32 0.0, %v1485
    %v1487 = vpop.f32.mrf.mxu0
    %1488 = vdwg.mxu0
    %1489 = vmatpush.bf16.msra.mxu0 %v458
    %1490 = vmatpush.bf16.msra.mxu0 %v454
    %1491 = vmatpush.bf16.msra.mxu0 %v450
    %1492 = vmatpush.bf16.msra.mxu0 %v446
    %1493 = vmatpush.bf16.msra.mxu0 %v442
    %1494 = vmatpush.bf16.msra.mxu0 %v438
    %1495 = vmatpush.bf16.msra.mxu0 %v434
    %1496 = vmatpush.bf16.msra.mxu0 %v430
    %1497 = vmatmul.bf16.gmra.mxu0 %v1232
    %v1498 = vpop.f32.mrf.mxu0
    %v1499 = vadd.f32 0.0, %v1498
    %v1500 = vpop.f32.mrf.mxu0
    %1501 = vdwg.mxu0
    %1502 = vmatpush.bf16.msra.mxu0 %v459
    %1503 = vmatpush.bf16.msra.mxu0 %v455
    %1504 = vmatpush.bf16.msra.mxu0 %v451
    %1505 = vmatpush.bf16.msra.mxu0 %v447
    %1506 = vmatpush.bf16.msra.mxu0 %v443
    %1507 = vmatpush.bf16.msra.mxu0 %v439
    %1508 = vmatpush.bf16.msra.mxu0 %v435
    %1509 = vmatpush.bf16.msra.mxu0 %v431
    %1510 = vmatmul.bf16.gmra.mxu0 %v1232
    %v1511 = vpop.f32.mrf.mxu0
    %v1512 = vadd.f32 0.0, %v1511
    %v1513 = vpop.f32.mrf.mxu0
    %1514 = vdwg.mxu0
    %1515 = vmatpush.bf16.msra.mxu0 %v460
    %1516 = vmatpush.bf16.msra.mxu0 %v456
    %1517 = vmatpush.bf16.msra.mxu0 %v452
    %1518 = vmatpush.bf16.msra.mxu0 %v448
    %1519 = vmatpush.bf16.msra.mxu0 %v444
    %1520 = vmatpush.bf16.msra.mxu0 %v440
    %1521 = vmatpush.bf16.msra.mxu0 %v436
    %1522 = vmatpush.bf16.msra.mxu0 %v432
    %1523 = vmatmul.bf16.gmra.mxu0 %v1232
    %v1524 = vpop.f32.mrf.mxu0
    %v1525 = vadd.f32 0.0, %v1524
    %v1526 = vpop.f32.mrf.mxu0
    %1527 = vdwg.mxu0
    %v1528 = vadd.f32 %v1472, %v1486
    %v1529 = vadd.f32 %v1473, %v1499
    %v1530 = vadd.f32 %v1474, %v1512
    %v1531 = vadd.f32 %v1475, %v1525
    %v1532 = vxor.u32 %v1528, 2147483648
    %v1533 = vmul.f32 %v1532, 1.442695
    %v1534 = vpow.pop %v1533
    %v1535 = vadd.f32 %v1534, 1.0
    %v1536 = vrcp.pop %v1535
    %v1537 = vmul.f32 %v1535, %v1536
    %v1538 = vsub.f32 1.0, %v1537
    %v1539 = vmul.f32 %v1536, %v1538
    %v1540 = vadd.f32 %v1536, %v1539
    %vm1541 = vweird.f32 %v1535
    %vm1542 = vweird.f32 %v1536
    %vm1543 = vmor %vm1541, %vm1542
    %v1544 = vsel %vm1543, %v1536, %v1540
    %v1545 = vand.u32 2147483647, %v1535
    %vm1546 = vcmp.eq.f32.partialorder %v1545, 8.507059e+37
    %v1547 = vand.u32 %v1535, 2147483648
    %v1548 = vor.u32 1.1754944e-38, %v1547
    %v1549 = vsel %vm1546, %v1548, %v1544
    %v1550 = vmul.f32 1.0, %v1549
    %v1551 = vxor.u32 %v1529, 2147483648
    %v1552 = vmul.f32 %v1551, 1.442695
    %v1553 = vpow.pop %v1552
    %v1554 = vadd.f32 %v1553, 1.0
    %v1555 = vrcp.pop %v1554
    %v1556 = vmul.f32 %v1554, %v1555
    %v1557 = vsub.f32 1.0, %v1556
    %v1558 = vmul.f32 %v1555, %v1557
    %v1559 = vadd.f32 %v1555, %v1558
    %vm1560 = vweird.f32 %v1554
    %vm1561 = vweird.f32 %v1555
    %vm1562 = vmor %vm1560, %vm1561
    %v1563 = vsel %vm1562, %v1555, %v1559
    %v1564 = vand.u32 2147483647, %v1554
    %vm1565 = vcmp.eq.f32.partialorder %v1564, 8.507059e+37
    %v1566 = vand.u32 %v1554, 2147483648
    %v1567 = vor.u32 1.1754944e-38, %v1566
    %v1568 = vsel %vm1565, %v1567, %v1563
    %v1569 = vmul.f32 1.0, %v1568
    %v1570 = vtanh.pop %v1530
    %v1571 = vxor.u32 %v1531, 2147483648
    %v1572 = vmul.f32 %v1571, 1.442695
    %v1573 = vpow.pop %v1572
    %v1574 = vadd.f32 %v1573, 1.0
    %v1575 = vrcp.pop %v1574
    %v1576 = vmul.f32 %v1574, %v1575
    %v1577 = vsub.f32 1.0, %v1576
    %v1578 = vmul.f32 %v1575, %v1577
    %v1579 = vadd.f32 %v1575, %v1578
    %vm1580 = vweird.f32 %v1574
    %vm1581 = vweird.f32 %v1575
    %vm1582 = vmor %vm1580, %vm1581
    %v1583 = vsel %vm1582, %v1575, %v1579
    %v1584 = vand.u32 2147483647, %v1574
    %vm1585 = vcmp.eq.f32.partialorder %v1584, 8.507059e+37
    %v1586 = vand.u32 %v1574, 2147483648
    %v1587 = vor.u32 1.1754944e-38, %v1586
    %v1588 = vsel %vm1585, %v1587, %v1583
    %v1589 = vmul.f32 1.0, %v1588
    %v1590 = vmul.f32 %v1569, %v1229
    %v1591 = vmul.f32 %v1550, %v1570
    %v1592 = vadd.f32 %v1590, %v1591
    %v1593 = vtanh.pop %v1592
    %v1594 = vmul.f32 %v1589, %v1593
    %v1595 = vpack.c.bf16 %v1594, %v1594
    %1596 = vmatpush.bf16.msra.mxu0 %v714
    %1597 = vmatpush.bf16.msra.mxu0 %v711
    %1598 = vmatpush.bf16.msra.mxu0 %v708
    %1599 = vmatpush.bf16.msra.mxu0 %v705
    %1600 = vmatpush.bf16.msra.mxu0 %v702
    %1601 = vmatpush.bf16.msra.mxu0 %v699
    %1602 = vmatpush.bf16.msra.mxu0 %v696
    %1603 = vmatpush.bf16.msra.mxu0 %v693
    %1604 = vmatmul.bf16.gmra.mxu0 %v1595
    %v1605 = vpop.f32.mrf.mxu0
    %v1606 = vadd.f32 0.0, %v1605
    %v1607 = vpop.f32.mrf.mxu0
    %1608 = vdwg.mxu0
    %1609 = vmatpush.bf16.msra.mxu0 %v715
    %1610 = vmatpush.bf16.msra.mxu0 %v712
    %1611 = vmatpush.bf16.msra.mxu0 %v709
    %1612 = vmatpush.bf16.msra.mxu0 %v706
    %1613 = vmatpush.bf16.msra.mxu0 %v703
    %1614 = vmatpush.bf16.msra.mxu0 %v700
    %1615 = vmatpush.bf16.msra.mxu0 %v697
    %1616 = vmatpush.bf16.msra.mxu0 %v694
    %1617 = vmatmul.bf16.gmra.mxu0 %v1595
    %v1618 = vpop.f32.mrf.mxu0
    %v1619 = vadd.f32 0.0, %v1618
    %v1620 = vpop.f32.mrf.mxu0
    %1621 = vdwg.mxu0
    %1622 = vmatpush.bf16.msra.mxu0 %v716
    %1623 = vmatpush.bf16.msra.mxu0 %v713
    %1624 = vmatpush.bf16.msra.mxu0 %v710
    %1625 = vmatpush.bf16.msra.mxu0 %v707
    %1626 = vmatpush.bf16.msra.mxu0 %v704
    %1627 = vmatpush.bf16.msra.mxu0 %v701
    %1628 = vmatpush.bf16.msra.mxu0 %v698
    %1629 = vmatpush.bf16.msra.mxu0 %v695
    %1630 = vmatmul.bf16.gmra.mxu0 %v1595
    %v1631 = vpop.f32.mrf.mxu0
    %v1632 = vadd.f32 0.0, %v1631
    %v1633 = vpop.f32.mrf.mxu0
    %1634 = vdwg.mxu0
    %v1635 = vadd.f32 %v202, %v1606
    %v1636 = vadd.f32 %v203, %v1619
    %v1637 = vadd.f32 %v204, %v1632
    %v1638 = vpack.c.bf16 %v1364, %v1364
    %1639 = vmatpush.bf16.msra.mxu0 %v885
    %1640 = vmatpush.bf16.msra.mxu0 %v882
    %1641 = vmatpush.bf16.msra.mxu0 %v879
    %1642 = vmatpush.bf16.msra.mxu0 %v876
    %1643 = vmatpush.bf16.msra.mxu0 %v873
    %1644 = vmatpush.bf16.msra.mxu0 %v870
    %1645 = vmatpush.bf16.msra.mxu0 %v867
    %1646 = vmatpush.bf16.msra.mxu0 %v864
    %1647 = vmatmul.bf16.gmra.mxu0 %v1638
    %v1648 = vpop.f32.mrf.mxu0
    %v1649 = vadd.f32 0.0, %v1648
    %v1650 = vpop.f32.mrf.mxu0
    %1651 = vdwg.mxu0
    %1652 = vmatpush.bf16.msra.mxu0 %v886
    %1653 = vmatpush.bf16.msra.mxu0 %v883
    %1654 = vmatpush.bf16.msra.mxu0 %v880
    %1655 = vmatpush.bf16.msra.mxu0 %v877
    %1656 = vmatpush.bf16.msra.mxu0 %v874
    %1657 = vmatpush.bf16.msra.mxu0 %v871
    %1658 = vmatpush.bf16.msra.mxu0 %v868
    %1659 = vmatpush.bf16.msra.mxu0 %v865
    %1660 = vmatmul.bf16.gmra.mxu0 %v1638
    %v1661 = vpop.f32.mrf.mxu0
    %v1662 = vadd.f32 0.0, %v1661
    %v1663 = vpop.f32.mrf.mxu0
    %1664 = vdwg.mxu0
    %1665 = vmatpush.bf16.msra.mxu0 %v887
    %1666 = vmatpush.bf16.msra.mxu0 %v884
    %1667 = vmatpush.bf16.msra.mxu0 %v881
    %1668 = vmatpush.bf16.msra.mxu0 %v878
    %1669 = vmatpush.bf16.msra.mxu0 %v875
    %1670 = vmatpush.bf16.msra.mxu0 %v872
    %1671 = vmatpush.bf16.msra.mxu0 %v869
    %1672 = vmatpush.bf16.msra.mxu0 %v866
    %1673 = vmatmul.bf16.gmra.mxu0 %v1638
    %v1674 = vpop.f32.mrf.mxu0
    %v1675 = vadd.f32 0.0, %v1674
    %v1676 = vpop.f32.mrf.mxu0
    %1677 = vdwg.mxu0
    %v1678 = vadd.f32 %v210, %v1649
    %v1679 = vadd.f32 %v211, %v1662
    %v1680 = vadd.f32 %v212, %v1675
    %v1681 = vadd.f32 %v1635, %v1678
    %v1682 = vxor.u32 %v1681, 2147483648
    %v1683 = vmul.f32 %v1682, 1.442695
    %v1684 = vpow.pop %v1683
    %v1685 = vadd.f32 %v1684, 1.0
    %v1686 = vrcp.pop %v1685
    %v1687 = vmul.f32 %v1685, %v1686
    %v1688 = vsub.f32 1.0, %v1687
    %v1689 = vmul.f32 %v1686, %v1688
    %v1690 = vadd.f32 %v1686, %v1689
    %vm1691 = vweird.f32 %v1685
    %vm1692 = vweird.f32 %v1686
    %vm1693 = vmor %vm1691, %vm1692
    %v1694 = vsel %vm1693, %v1686, %v1690
    %v1695 = vand.u32 2147483647, %v1685
    %vm1696 = vcmp.eq.f32.partialorder %v1695, 8.507059e+37
    %v1697 = vand.u32 %v1685, 2147483648
    %v1698 = vor.u32 1.1754944e-38, %v1697
    %v1699 = vsel %vm1696, %v1698, %v1694
    %v1700 = vmul.f32 1.0, %v1699
    %v1701 = vadd.f32 %v1636, %v1679
    %v1702 = vxor.u32 %v1701, 2147483648
    %v1703 = vmul.f32 %v1702, 1.442695
    %v1704 = vpow.pop %v1703
    %v1705 = vadd.f32 %v1704, 1.0
    %v1706 = vrcp.pop %v1705
    %v1707 = vmul.f32 %v1705, %v1706
    %v1708 = vsub.f32 1.0, %v1707
    %v1709 = vmul.f32 %v1706, %v1708
    %v1710 = vadd.f32 %v1706, %v1709
    %vm1711 = vweird.f32 %v1705
    %vm1712 = vweird.f32 %v1706
    %vm1713 = vmor %vm1711, %vm1712
    %v1714 = vsel %vm1713, %v1706, %v1710
    %v1715 = vand.u32 2147483647, %v1705
    %vm1716 = vcmp.eq.f32.partialorder %v1715, 8.507059e+37
    %v1717 = vand.u32 %v1705, 2147483648
    %v1718 = vor.u32 1.1754944e-38, %v1717
    %v1719 = vsel %vm1716, %v1718, %v1714
    %v1720 = vmul.f32 1.0, %v1719
    %v1721 = vmul.f32 %v1700, %v1680
    %v1722 = vadd.f32 %v1637, %v1721
    %v1723 = vtanh.pop %v1722
    %v1724 = vsub.f32 1.0, %v1720
    %v1725 = vmul.f32 %v1724, %v1723
    %v1726 = vmul.f32 %v1720, %v1364
    %v1727 = vadd.f32 %v1725, %v1726
    %v1728 = vmax.f32 %v1727, 0.0
    %v1729 = vmul.f32 %v1728, %v218
    %v1730 = vsel %vm1003, %v1729, 0.0
    %1731 = vadd.xlane.f32.xlu0 %v1730
    %v1732 = vpop.xlane.xlu0 %1731
    %vm1733 = vcmp.eq.s32.totalorder %v221, 2
    %v1734 = vsel %vm1733, %v1732, %v1371
    %s1735 = scalar_lea.vmem %s0, 6
    %v1736 = vld [vmem:[%s1735] sm:$0x3]
    %1737 = vst [vmem:[#allocation1] ss:$2 sm:$0xff] %v92
    %s1738 = scalar_lea.vmem [#allocation1], 16
    %1739 = vst [vmem:[%s1738] ss:$2 sm:$0xff] %v93
    %v1740 = vld.sshfl [vmem:[#allocation1] sm:$0xff pattern:$0x75316420]
    %v1741 = vld.sshfl [vmem:[#allocation1 + $0x8] sm:$0xff pattern:$0x75316420]
    %v1742 = vld.sshfl [vmem:[#allocation1 + $0x10] sm:$0xff pattern:$0x75316420]
    %v1743 = vld.sshfl [vmem:[#allocation1 + $0x18] sm:$0xff pattern:$0x75316420]
    %v1745 = vsel %vm235, %v1736, 0
    %v1747 = vsel %vm239, %v1740, 0
    %v1749 = vsel %vm239, %v1741, 0
    %v1751 = vsel %vm239, %v1742, 0
    %v1753 = vsel %vm239, %v1743, 0
    %1755 = vmatpush.msra.mxu0 0.0
    %1756 = vmatpush.msra.mxu0 0.0
    %1757 = vmatpush.msra.mxu0 0.0
    %1758 = vmatpush.msra.mxu0 0.0
    %1759 = vmatpush.msra.mxu0 0.0
    %1760 = vmatpush.msra.mxu0 0.0
    %1761 = vmatpush.msra.mxu0 0.0
    %1762 = vmatpush.msra.mxu0 0.0
    %1763 = vmatpush.msra.mxu0 0.0
    %1764 = vmatpush.msra.mxu0 0.0
    %1765 = vmatpush.msra.mxu0 0.0
    %1766 = vmatpush.msra.mxu0 0.0
    %1767 = vmatpush.msra.mxu0 0.0
    %1768 = vmatpush.msra.mxu0 0.0
    %1769 = vmatpush.msra.mxu0 0.0
    %1770 = vmatpush.msra.mxu0 %v1747
    %1771 = vmatmul.f32.gmra.mxu0 %v1745
    %v1772 = vpop.f32.mrf.mxu0
    %v1773 = vadd.f32 0.0, %v1772
    %1774 = vdwg.mxu0
    %1775 = vmatpush.msra.mxu0 0.0
    %1776 = vmatpush.msra.mxu0 0.0
    %1777 = vmatpush.msra.mxu0 0.0
    %1778 = vmatpush.msra.mxu0 0.0
    %1779 = vmatpush.msra.mxu0 0.0
    %1780 = vmatpush.msra.mxu0 0.0
    %1781 = vmatpush.msra.mxu0 0.0
    %1782 = vmatpush.msra.mxu0 0.0
    %1783 = vmatpush.msra.mxu0 0.0
    %1784 = vmatpush.msra.mxu0 0.0
    %1785 = vmatpush.msra.mxu0 0.0
    %1786 = vmatpush.msra.mxu0 0.0
    %1787 = vmatpush.msra.mxu0 0.0
    %1788 = vmatpush.msra.mxu0 0.0
    %1789 = vmatpush.msra.mxu0 0.0
    %1790 = vmatpush.msra.mxu0 %v1749
    %1791 = vmatmul.f32.gmra.mxu0 %v1745
    %v1792 = vpop.f32.mrf.mxu0
    %v1793 = vadd.f32 0.0, %v1792
    %1794 = vdwg.mxu0
    %1795 = vmatpush.msra.mxu0 0.0
    %1796 = vmatpush.msra.mxu0 0.0
    %1797 = vmatpush.msra.mxu0 0.0
    %1798 = vmatpush.msra.mxu0 0.0
    %1799 = vmatpush.msra.mxu0 0.0
    %1800 = vmatpush.msra.mxu0 0.0
    %1801 = vmatpush.msra.mxu0 0.0
    %1802 = vmatpush.msra.mxu0 0.0
    %1803 = vmatpush.msra.mxu0 0.0
    %1804 = vmatpush.msra.mxu0 0.0
    %1805 = vmatpush.msra.mxu0 0.0
    %1806 = vmatpush.msra.mxu0 0.0
    %1807 = vmatpush.msra.mxu0 0.0
    %1808 = vmatpush.msra.mxu0 0.0
    %1809 = vmatpush.msra.mxu0 0.0
    %1810 = vmatpush.msra.mxu0 %v1751
    %1811 = vmatmul.f32.gmra.mxu0 %v1745
    %v1812 = vpop.f32.mrf.mxu0
    %v1813 = vadd.f32 0.0, %v1812
    %1814 = vdwg.mxu0
    %1815 = vmatpush.msra.mxu0 0.0
    %1816 = vmatpush.msra.mxu0 0.0
    %1817 = vmatpush.msra.mxu0 0.0
    %1818 = vmatpush.msra.mxu0 0.0
    %1819 = vmatpush.msra.mxu0 0.0
    %1820 = vmatpush.msra.mxu0 0.0
    %1821 = vmatpush.msra.mxu0 0.0
    %1822 = vmatpush.msra.mxu0 0.0
    %1823 = vmatpush.msra.mxu0 0.0
    %1824 = vmatpush.msra.mxu0 0.0
    %1825 = vmatpush.msra.mxu0 0.0
    %1826 = vmatpush.msra.mxu0 0.0
    %1827 = vmatpush.msra.mxu0 0.0
    %1828 = vmatpush.msra.mxu0 0.0
    %1829 = vmatpush.msra.mxu0 0.0
    %1830 = vmatpush.msra.mxu0 %v1753
    %1831 = vmatmul.f32.gmra.mxu0 %v1745
    %v1832 = vpop.f32.mrf.mxu0
    %v1833 = vadd.f32 0.0, %v1832
    %1834 = vdwg.mxu0
    %v1835 = vadd.f32 %v192, %v1773
    %v1836 = vadd.f32 %v193, %v1793
    %v1837 = vadd.f32 %v194, %v1813
    %v1838 = vadd.f32 %v195, %v1833
    %1839 = vmatpush.bf16.msra.mxu0 %v457
    %1840 = vmatpush.bf16.msra.mxu0 %v453
    %1841 = vmatpush.bf16.msra.mxu0 %v449
    %1842 = vmatpush.bf16.msra.mxu0 %v445
    %1843 = vmatpush.bf16.msra.mxu0 %v441
    %1844 = vmatpush.bf16.msra.mxu0 %v437
    %1845 = vmatpush.bf16.msra.mxu0 %v433
    %1846 = vmatpush.bf16.msra.mxu0 %v429
    %1847 = vmatmul.bf16.gmra.mxu0 %v1595
    %v1848 = vpop.f32.mrf.mxu0
    %v1849 = vadd.f32 0.0, %v1848
    %v1850 = vpop.f32.mrf.mxu0
    %1851 = vdwg.mxu0
    %1852 = vmatpush.bf16.msra.mxu0 %v458
    %1853 = vmatpush.bf16.msra.mxu0 %v454
    %1854 = vmatpush.bf16.msra.mxu0 %v450
    %1855 = vmatpush.bf16.msra.mxu0 %v446
    %1856 = vmatpush.bf16.msra.mxu0 %v442
    %1857 = vmatpush.bf16.msra.mxu0 %v438
    %1858 = vmatpush.bf16.msra.mxu0 %v434
    %1859 = vmatpush.bf16.msra.mxu0 %v430
    %1860 = vmatmul.bf16.gmra.mxu0 %v1595
    %v1861 = vpop.f32.mrf.mxu0
    %v1862 = vadd.f32 0.0, %v1861
    %v1863 = vpop.f32.mrf.mxu0
    %1864 = vdwg.mxu0
    %1865 = vmatpush.bf16.msra.mxu0 %v459
    %1866 = vmatpush.bf16.msra.mxu0 %v455
    %1867 = vmatpush.bf16.msra.mxu0 %v451
    %1868 = vmatpush.bf16.msra.mxu0 %v447
    %1869 = vmatpush.bf16.msra.mxu0 %v443
    %1870 = vmatpush.bf16.msra.mxu0 %v439
    %1871 = vmatpush.bf16.msra.mxu0 %v435
    %1872 = vmatpush.bf16.msra.mxu0 %v431
    %1873 = vmatmul.bf16.gmra.mxu0 %v1595
    %v1874 = vpop.f32.mrf.mxu0
    %v1875 = vadd.f32 0.0, %v1874
    %v1876 = vpop.f32.mrf.mxu0
    %1877 = vdwg.mxu0
    %1878 = vmatpush.bf16.msra.mxu0 %v460
    %1879 = vmatpush.bf16.msra.mxu0 %v456
    %1880 = vmatpush.bf16.msra.mxu0 %v452
    %1881 = vmatpush.bf16.msra.mxu0 %v448
    %1882 = vmatpush.bf16.msra.mxu0 %v444
    %1883 = vmatpush.bf16.msra.mxu0 %v440
    %1884 = vmatpush.bf16.msra.mxu0 %v436
    %1885 = vmatpush.bf16.msra.mxu0 %v432
    %1886 = vmatmul.bf16.gmra.mxu0 %v1595
    %v1887 = vpop.f32.mrf.mxu0
    %v1888 = vadd.f32 0.0, %v1887
    %v1889 = vpop.f32.mrf.mxu0
    %1890 = vdwg.mxu0
    %v1891 = vadd.f32 %v1835, %v1849
    %v1892 = vadd.f32 %v1836, %v1862
    %v1893 = vadd.f32 %v1837, %v1875
    %v1894 = vadd.f32 %v1838, %v1888
    %v1895 = vxor.u32 %v1891, 2147483648
    %v1896 = vmul.f32 %v1895, 1.442695
    %v1897 = vpow.pop %v1896
    %v1898 = vadd.f32 %v1897, 1.0
    %v1899 = vrcp.pop %v1898
    %v1900 = vmul.f32 %v1898, %v1899
    %v1901 = vsub.f32 1.0, %v1900
    %v1902 = vmul.f32 %v1899, %v1901
    %v1903 = vadd.f32 %v1899, %v1902
    %vm1904 = vweird.f32 %v1898
    %vm1905 = vweird.f32 %v1899
    %vm1906 = vmor %vm1904, %vm1905
    %v1907 = vsel %vm1906, %v1899, %v1903
    %v1908 = vand.u32 2147483647, %v1898
    %vm1909 = vcmp.eq.f32.partialorder %v1908, 8.507059e+37
    %v1910 = vand.u32 %v1898, 2147483648
    %v1911 = vor.u32 1.1754944e-38, %v1910
    %v1912 = vsel %vm1909, %v1911, %v1907
    %v1913 = vmul.f32 1.0, %v1912
    %v1914 = vxor.u32 %v1892, 2147483648
    %v1915 = vmul.f32 %v1914, 1.442695
    %v1916 = vpow.pop %v1915
    %v1917 = vadd.f32 %v1916, 1.0
    %v1918 = vrcp.pop %v1917
    %v1919 = vmul.f32 %v1917, %v1918
    %v1920 = vsub.f32 1.0, %v1919
    %v1921 = vmul.f32 %v1918, %v1920
    %v1922 = vadd.f32 %v1918, %v1921
    %vm1923 = vweird.f32 %v1917
    %vm1924 = vweird.f32 %v1918
    %vm1925 = vmor %vm1923, %vm1924
    %v1926 = vsel %vm1925, %v1918, %v1922
    %v1927 = vand.u32 2147483647, %v1917
    %vm1928 = vcmp.eq.f32.partialorder %v1927, 8.507059e+37
    %v1929 = vand.u32 %v1917, 2147483648
    %v1930 = vor.u32 1.1754944e-38, %v1929
    %v1931 = vsel %vm1928, %v1930, %v1926
    %v1932 = vmul.f32 1.0, %v1931
    %v1933 = vtanh.pop %v1893
    %v1934 = vxor.u32 %v1894, 2147483648
    %v1935 = vmul.f32 %v1934, 1.442695
    %v1936 = vpow.pop %v1935
    %v1937 = vadd.f32 %v1936, 1.0
    %v1938 = vrcp.pop %v1937
    %v1939 = vmul.f32 %v1937, %v1938
    %v1940 = vsub.f32 1.0, %v1939
    %v1941 = vmul.f32 %v1938, %v1940
    %v1942 = vadd.f32 %v1938, %v1941
    %vm1943 = vweird.f32 %v1937
    %vm1944 = vweird.f32 %v1938
    %vm1945 = vmor %vm1943, %vm1944
    %v1946 = vsel %vm1945, %v1938, %v1942
    %v1947 = vand.u32 2147483647, %v1937
    %vm1948 = vcmp.eq.f32.partialorder %v1947, 8.507059e+37
    %v1949 = vand.u32 %v1937, 2147483648
    %v1950 = vor.u32 1.1754944e-38, %v1949
    %v1951 = vsel %vm1948, %v1950, %v1946
    %v1952 = vmul.f32 1.0, %v1951
    %v1953 = vmul.f32 %v1932, %v1592
    %v1954 = vmul.f32 %v1913, %v1933
    %v1955 = vadd.f32 %v1953, %v1954
    %v1956 = vtanh.pop %v1955
    %v1957 = vmul.f32 %v1952, %v1956
    %v1958 = vpack.c.bf16 %v1957, %v1957
    %1959 = vmatpush.bf16.msra.mxu0 %v714
    %1960 = vmatpush.bf16.msra.mxu0 %v711
    %1961 = vmatpush.bf16.msra.mxu0 %v708
    %1962 = vmatpush.bf16.msra.mxu0 %v705
    %1963 = vmatpush.bf16.msra.mxu0 %v702
    %1964 = vmatpush.bf16.msra.mxu0 %v699
    %1965 = vmatpush.bf16.msra.mxu0 %v696
    %1966 = vmatpush.bf16.msra.mxu0 %v693
    %1967 = vmatmul.bf16.gmra.mxu0 %v1958
    %v1968 = vpop.f32.mrf.mxu0
    %v1969 = vadd.f32 0.0, %v1968
    %v1970 = vpop.f32.mrf.mxu0
    %1971 = vdwg.mxu0
    %1972 = vmatpush.bf16.msra.mxu0 %v715
    %1973 = vmatpush.bf16.msra.mxu0 %v712
    %1974 = vmatpush.bf16.msra.mxu0 %v709
    %1975 = vmatpush.bf16.msra.mxu0 %v706
    %1976 = vmatpush.bf16.msra.mxu0 %v703
    %1977 = vmatpush.bf16.msra.mxu0 %v700
    %1978 = vmatpush.bf16.msra.mxu0 %v697
    %1979 = vmatpush.bf16.msra.mxu0 %v694
    %1980 = vmatmul.bf16.gmra.mxu0 %v1958
    %v1981 = vpop.f32.mrf.mxu0
    %v1982 = vadd.f32 0.0, %v1981
    %v1983 = vpop.f32.mrf.mxu0
    %1984 = vdwg.mxu0
    %1985 = vmatpush.bf16.msra.mxu0 %v716
    %1986 = vmatpush.bf16.msra.mxu0 %v713
    %1987 = vmatpush.bf16.msra.mxu0 %v710
    %1988 = vmatpush.bf16.msra.mxu0 %v707
    %1989 = vmatpush.bf16.msra.mxu0 %v704
    %1990 = vmatpush.bf16.msra.mxu0 %v701
    %1991 = vmatpush.bf16.msra.mxu0 %v698
    %1992 = vmatpush.bf16.msra.mxu0 %v695
    %1993 = vmatmul.bf16.gmra.mxu0 %v1958
    %v1994 = vpop.f32.mrf.mxu0
    %v1995 = vadd.f32 0.0, %v1994
    %v1996 = vpop.f32.mrf.mxu0
    %1997 = vdwg.mxu0
    %v1998 = vadd.f32 %v202, %v1969
    %v1999 = vadd.f32 %v203, %v1982
    %v2000 = vadd.f32 %v204, %v1995
    %v2001 = vpack.c.bf16 %v1727, %v1727
    %2002 = vmatpush.bf16.msra.mxu0 %v885
    %2003 = vmatpush.bf16.msra.mxu0 %v882
    %2004 = vmatpush.bf16.msra.mxu0 %v879
    %2005 = vmatpush.bf16.msra.mxu0 %v876
    %2006 = vmatpush.bf16.msra.mxu0 %v873
    %2007 = vmatpush.bf16.msra.mxu0 %v870
    %2008 = vmatpush.bf16.msra.mxu0 %v867
    %2009 = vmatpush.bf16.msra.mxu0 %v864
    %2010 = vmatmul.bf16.gmra.mxu0 %v2001
    %v2011 = vpop.f32.mrf.mxu0
    %v2012 = vadd.f32 0.0, %v2011
    %v2013 = vpop.f32.mrf.mxu0
    %2014 = vdwg.mxu0
    %2015 = vmatpush.bf16.msra.mxu0 %v886
    %2016 = vmatpush.bf16.msra.mxu0 %v883
    %2017 = vmatpush.bf16.msra.mxu0 %v880
    %2018 = vmatpush.bf16.msra.mxu0 %v877
    %2019 = vmatpush.bf16.msra.mxu0 %v874
    %2020 = vmatpush.bf16.msra.mxu0 %v871
    %2021 = vmatpush.bf16.msra.mxu0 %v868
    %2022 = vmatpush.bf16.msra.mxu0 %v865
    %2023 = vmatmul.bf16.gmra.mxu0 %v2001
    %v2024 = vpop.f32.mrf.mxu0
    %v2025 = vadd.f32 0.0, %v2024
    %v2026 = vpop.f32.mrf.mxu0
    %2027 = vdwg.mxu0
    %2028 = vmatpush.bf16.msra.mxu0 %v887
    %2029 = vmatpush.bf16.msra.mxu0 %v884
    %2030 = vmatpush.bf16.msra.mxu0 %v881
    %2031 = vmatpush.bf16.msra.mxu0 %v878
    %2032 = vmatpush.bf16.msra.mxu0 %v875
    %2033 = vmatpush.bf16.msra.mxu0 %v872
    %2034 = vmatpush.bf16.msra.mxu0 %v869
    %2035 = vmatpush.bf16.msra.mxu0 %v866
    %2036 = vmatmul.bf16.gmra.mxu0 %v2001
    %v2037 = vpop.f32.mrf.mxu0
    %v2038 = vadd.f32 0.0, %v2037
    %v2039 = vpop.f32.mrf.mxu0
    %2040 = vdwg.mxu0
    %v2041 = vadd.f32 %v210, %v2012
    %v2042 = vadd.f32 %v211, %v2025
    %v2043 = vadd.f32 %v212, %v2038
    %v2044 = vadd.f32 %v1998, %v2041
    %v2045 = vxor.u32 %v2044, 2147483648
    %v2046 = vmul.f32 %v2045, 1.442695
    %v2047 = vpow.pop %v2046
    %v2048 = vadd.f32 %v2047, 1.0
    %v2049 = vrcp.pop %v2048
    %v2050 = vmul.f32 %v2048, %v2049
    %v2051 = vsub.f32 1.0, %v2050
    %v2052 = vmul.f32 %v2049, %v2051
    %v2053 = vadd.f32 %v2049, %v2052
    %vm2054 = vweird.f32 %v2048
    %vm2055 = vweird.f32 %v2049
    %vm2056 = vmor %vm2054, %vm2055
    %v2057 = vsel %vm2056, %v2049, %v2053
    %v2058 = vand.u32 2147483647, %v2048
    %vm2059 = vcmp.eq.f32.partialorder %v2058, 8.507059e+37
    %v2060 = vand.u32 %v2048, 2147483648
    %v2061 = vor.u32 1.1754944e-38, %v2060
    %v2062 = vsel %vm2059, %v2061, %v2057
    %v2063 = vmul.f32 1.0, %v2062
    %v2064 = vadd.f32 %v1999, %v2042
    %v2065 = vxor.u32 %v2064, 2147483648
    %v2066 = vmul.f32 %v2065, 1.442695
    %v2067 = vpow.pop %v2066
    %v2068 = vadd.f32 %v2067, 1.0
    %v2069 = vrcp.pop %v2068
    %v2070 = vmul.f32 %v2068, %v2069
    %v2071 = vsub.f32 1.0, %v2070
    %v2072 = vmul.f32 %v2069, %v2071
    %v2073 = vadd.f32 %v2069, %v2072
    %vm2074 = vweird.f32 %v2068
    %vm2075 = vweird.f32 %v2069
    %vm2076 = vmor %vm2074, %vm2075
    %v2077 = vsel %vm2076, %v2069, %v2073
    %v2078 = vand.u32 2147483647, %v2068
    %vm2079 = vcmp.eq.f32.partialorder %v2078, 8.507059e+37
    %v2080 = vand.u32 %v2068, 2147483648
    %v2081 = vor.u32 1.1754944e-38, %v2080
    %v2082 = vsel %vm2079, %v2081, %v2077
    %v2083 = vmul.f32 1.0, %v2082
    %v2084 = vmul.f32 %v2063, %v2043
    %v2085 = vadd.f32 %v2000, %v2084
    %v2086 = vtanh.pop %v2085
    %v2087 = vsub.f32 1.0, %v2083
    %v2088 = vmul.f32 %v2087, %v2086
    %v2089 = vmul.f32 %v2083, %v1727
    %v2090 = vadd.f32 %v2088, %v2089
    %v2091 = vmax.f32 %v2090, 0.0
    %v2092 = vmul.f32 %v2091, %v218
    %v2093 = vsel %vm1003, %v2092, 0.0
    %2094 = vadd.xlane.f32.xlu0 %v2093
    %v2095 = vpop.xlane.xlu0 %2094
    %vm2096 = vcmp.eq.s32.totalorder %v221, 3
    %v2097 = vsel %vm2096, %v2095, %v1734
    %s2098 = scalar_lea.vmem %s0, 8
    %v2099 = vld [vmem:[%s2098] sm:$0x3]
    %2100 = vst [vmem:[#allocation1] ss:$2 sm:$0xff] %v92
    %s2101 = scalar_lea.vmem [#allocation1], 16
    %2102 = vst [vmem:[%s2101] ss:$2 sm:$0xff] %v93
    %v2103 = vld.sshfl [vmem:[#allocation1] sm:$0xff pattern:$0x75316420]
    %v2104 = vld.sshfl [vmem:[#allocation1 + $0x8] sm:$0xff pattern:$0x75316420]
    %v2105 = vld.sshfl [vmem:[#allocation1 + $0x10] sm:$0xff pattern:$0x75316420]
    %v2106 = vld.sshfl [vmem:[#allocation1 + $0x18] sm:$0xff pattern:$0x75316420]
    %v2108 = vsel %vm235, %v2099, 0
    %v2110 = vsel %vm239, %v2103, 0
    %v2112 = vsel %vm239, %v2104, 0
    %v2114 = vsel %vm239, %v2105, 0
    %v2116 = vsel %vm239, %v2106, 0
    %2118 = vmatpush.msra.mxu0 0.0
    %2119 = vmatpush.msra.mxu0 0.0
    %2120 = vmatpush.msra.mxu0 0.0
    %2121 = vmatpush.msra.mxu0 0.0
    %2122 = vmatpush.msra.mxu0 0.0
    %2123 = vmatpush.msra.mxu0 0.0
    %2124 = vmatpush.msra.mxu0 0.0
    %2125 = vmatpush.msra.mxu0 0.0
    %2126 = vmatpush.msra.mxu0 0.0
    %2127 = vmatpush.msra.mxu0 0.0
    %2128 = vmatpush.msra.mxu0 0.0
    %2129 = vmatpush.msra.mxu0 0.0
    %2130 = vmatpush.msra.mxu0 0.0
    %2131 = vmatpush.msra.mxu0 0.0
    %2132 = vmatpush.msra.mxu0 0.0
    %2133 = vmatpush.msra.mxu0 %v2110
    %2134 = vmatmul.f32.gmra.mxu0 %v2108
    %v2135 = vpop.f32.mrf.mxu0
    %v2136 = vadd.f32 0.0, %v2135
    %2137 = vdwg.mxu0
    %2138 = vmatpush.msra.mxu0 0.0
    %2139 = vmatpush.msra.mxu0 0.0
    %2140 = vmatpush.msra.mxu0 0.0
    %2141 = vmatpush.msra.mxu0 0.0
    %2142 = vmatpush.msra.mxu0 0.0
    %2143 = vmatpush.msra.mxu0 0.0
    %2144 = vmatpush.msra.mxu0 0.0
    %2145 = vmatpush.msra.mxu0 0.0
    %2146 = vmatpush.msra.mxu0 0.0
    %2147 = vmatpush.msra.mxu0 0.0
    %2148 = vmatpush.msra.mxu0 0.0
    %2149 = vmatpush.msra.mxu0 0.0
    %2150 = vmatpush.msra.mxu0 0.0
    %2151 = vmatpush.msra.mxu0 0.0
    %2152 = vmatpush.msra.mxu0 0.0
    %2153 = vmatpush.msra.mxu0 %v2112
    %2154 = vmatmul.f32.gmra.mxu0 %v2108
    %v2155 = vpop.f32.mrf.mxu0
    %v2156 = vadd.f32 0.0, %v2155
    %2157 = vdwg.mxu0
    %2158 = vmatpush.msra.mxu0 0.0
    %2159 = vmatpush.msra.mxu0 0.0
    %2160 = vmatpush.msra.mxu0 0.0
    %2161 = vmatpush.msra.mxu0 0.0
    %2162 = vmatpush.msra.mxu0 0.0
    %2163 = vmatpush.msra.mxu0 0.0
    %2164 = vmatpush.msra.mxu0 0.0
    %2165 = vmatpush.msra.mxu0 0.0
    %2166 = vmatpush.msra.mxu0 0.0
    %2167 = vmatpush.msra.mxu0 0.0
    %2168 = vmatpush.msra.mxu0 0.0
    %2169 = vmatpush.msra.mxu0 0.0
    %2170 = vmatpush.msra.mxu0 0.0
    %2171 = vmatpush.msra.mxu0 0.0
    %2172 = vmatpush.msra.mxu0 0.0
    %2173 = vmatpush.msra.mxu0 %v2114
    %2174 = vmatmul.f32.gmra.mxu0 %v2108
    %v2175 = vpop.f32.mrf.mxu0
    %v2176 = vadd.f32 0.0, %v2175
    %2177 = vdwg.mxu0
    %2178 = vmatpush.msra.mxu0 0.0
    %2179 = vmatpush.msra.mxu0 0.0
    %2180 = vmatpush.msra.mxu0 0.0
    %2181 = vmatpush.msra.mxu0 0.0
    %2182 = vmatpush.msra.mxu0 0.0
    %2183 = vmatpush.msra.mxu0 0.0
    %2184 = vmatpush.msra.mxu0 0.0
    %2185 = vmatpush.msra.mxu0 0.0
    %2186 = vmatpush.msra.mxu0 0.0
    %2187 = vmatpush.msra.mxu0 0.0
    %2188 = vmatpush.msra.mxu0 0.0
    %2189 = vmatpush.msra.mxu0 0.0
    %2190 = vmatpush.msra.mxu0 0.0
    %2191 = vmatpush.msra.mxu0 0.0
    %2192 = vmatpush.msra.mxu0 0.0
    %2193 = vmatpush.msra.mxu0 %v2116
    %2194 = vmatmul.f32.gmra.mxu0 %v2108
    %v2195 = vpop.f32.mrf.mxu0
    %v2196 = vadd.f32 0.0, %v2195
    %2197 = vdwg.mxu0
    %v2198 = vadd.f32 %v192, %v2136
    %v2199 = vadd.f32 %v193, %v2156
    %v2200 = vadd.f32 %v194, %v2176
    %v2201 = vadd.f32 %v195, %v2196
    %2202 = vmatpush.bf16.msra.mxu0 %v457
    %2203 = vmatpush.bf16.msra.mxu0 %v453
    %2204 = vmatpush.bf16.msra.mxu0 %v449
    %2205 = vmatpush.bf16.msra.mxu0 %v445
    %2206 = vmatpush.bf16.msra.mxu0 %v441
    %2207 = vmatpush.bf16.msra.mxu0 %v437
    %2208 = vmatpush.bf16.msra.mxu0 %v433
    %2209 = vmatpush.bf16.msra.mxu0 %v429
    %2210 = vmatmul.bf16.gmra.mxu0 %v1958
    %v2211 = vpop.f32.mrf.mxu0
    %v2212 = vadd.f32 0.0, %v2211
    %v2213 = vpop.f32.mrf.mxu0
    %2214 = vdwg.mxu0
    %2215 = vmatpush.bf16.msra.mxu0 %v458
    %2216 = vmatpush.bf16.msra.mxu0 %v454
    %2217 = vmatpush.bf16.msra.mxu0 %v450
    %2218 = vmatpush.bf16.msra.mxu0 %v446
    %2219 = vmatpush.bf16.msra.mxu0 %v442
    %2220 = vmatpush.bf16.msra.mxu0 %v438
    %2221 = vmatpush.bf16.msra.mxu0 %v434
    %2222 = vmatpush.bf16.msra.mxu0 %v430
    %2223 = vmatmul.bf16.gmra.mxu0 %v1958
    %v2224 = vpop.f32.mrf.mxu0
    %v2225 = vadd.f32 0.0, %v2224
    %v2226 = vpop.f32.mrf.mxu0
    %2227 = vdwg.mxu0
    %2228 = vmatpush.bf16.msra.mxu0 %v459
    %2229 = vmatpush.bf16.msra.mxu0 %v455
    %2230 = vmatpush.bf16.msra.mxu0 %v451
    %2231 = vmatpush.bf16.msra.mxu0 %v447
    %2232 = vmatpush.bf16.msra.mxu0 %v443
    %2233 = vmatpush.bf16.msra.mxu0 %v439
    %2234 = vmatpush.bf16.msra.mxu0 %v435
    %2235 = vmatpush.bf16.msra.mxu0 %v431
    %2236 = vmatmul.bf16.gmra.mxu0 %v1958
    %v2237 = vpop.f32.mrf.mxu0
    %v2238 = vadd.f32 0.0, %v2237
    %v2239 = vpop.f32.mrf.mxu0
    %2240 = vdwg.mxu0
    %2241 = vmatpush.bf16.msra.mxu0 %v460
    %2242 = vmatpush.bf16.msra.mxu0 %v456
    %2243 = vmatpush.bf16.msra.mxu0 %v452
    %2244 = vmatpush.bf16.msra.mxu0 %v448
    %2245 = vmatpush.bf16.msra.mxu0 %v444
    %2246 = vmatpush.bf16.msra.mxu0 %v440
    %2247 = vmatpush.bf16.msra.mxu0 %v436
    %2248 = vmatpush.bf16.msra.mxu0 %v432
    %2249 = vmatmul.bf16.gmra.mxu0 %v1958
    %v2250 = vpop.f32.mrf.mxu0
    %v2251 = vadd.f32 0.0, %v2250
    %v2252 = vpop.f32.mrf.mxu0
    %2253 = vdwg.mxu0
    %v2254 = vadd.f32 %v2198, %v2212
    %v2255 = vadd.f32 %v2199, %v2225
    %v2256 = vadd.f32 %v2200, %v2238
    %v2257 = vadd.f32 %v2201, %v2251
    %v2258 = vxor.u32 %v2254, 2147483648
    %v2259 = vmul.f32 %v2258, 1.442695
    %v2260 = vpow.pop %v2259
    %v2261 = vadd.f32 %v2260, 1.0
    %v2262 = vrcp.pop %v2261
    %v2263 = vmul.f32 %v2261, %v2262
    %v2264 = vsub.f32 1.0, %v2263
    %v2265 = vmul.f32 %v2262, %v2264
    %v2266 = vadd.f32 %v2262, %v2265
    %vm2267 = vweird.f32 %v2261
    %vm2268 = vweird.f32 %v2262
    %vm2269 = vmor %vm2267, %vm2268
    %v2270 = vsel %vm2269, %v2262, %v2266
    %v2271 = vand.u32 2147483647, %v2261
    %vm2272 = vcmp.eq.f32.partialorder %v2271, 8.507059e+37
    %v2273 = vand.u32 %v2261, 2147483648
    %v2274 = vor.u32 1.1754944e-38, %v2273
    %v2275 = vsel %vm2272, %v2274, %v2270
    %v2276 = vmul.f32 1.0, %v2275
    %v2277 = vxor.u32 %v2255, 2147483648
    %v2278 = vmul.f32 %v2277, 1.442695
    %v2279 = vpow.pop %v2278
    %v2280 = vadd.f32 %v2279, 1.0
    %v2281 = vrcp.pop %v2280
    %v2282 = vmul.f32 %v2280, %v2281
    %v2283 = vsub.f32 1.0, %v2282
    %v2284 = vmul.f32 %v2281, %v2283
    %v2285 = vadd.f32 %v2281, %v2284
    %vm2286 = vweird.f32 %v2280
    %vm2287 = vweird.f32 %v2281
    %vm2288 = vmor %vm2286, %vm2287
    %v2289 = vsel %vm2288, %v2281, %v2285
    %v2290 = vand.u32 2147483647, %v2280
    %vm2291 = vcmp.eq.f32.partialorder %v2290, 8.507059e+37
    %v2292 = vand.u32 %v2280, 2147483648
    %v2293 = vor.u32 1.1754944e-38, %v2292
    %v2294 = vsel %vm2291, %v2293, %v2289
    %v2295 = vmul.f32 1.0, %v2294
    %v2296 = vtanh.pop %v2256
    %v2297 = vxor.u32 %v2257, 2147483648
    %v2298 = vmul.f32 %v2297, 1.442695
    %v2299 = vpow.pop %v2298
    %v2300 = vadd.f32 %v2299, 1.0
    %v2301 = vrcp.pop %v2300
    %v2302 = vmul.f32 %v2300, %v2301
    %v2303 = vsub.f32 1.0, %v2302
    %v2304 = vmul.f32 %v2301, %v2303
    %v2305 = vadd.f32 %v2301, %v2304
    %vm2306 = vweird.f32 %v2300
    %vm2307 = vweird.f32 %v2301
    %vm2308 = vmor %vm2306, %vm2307
    %v2309 = vsel %vm2308, %v2301, %v2305
    %v2310 = vand.u32 2147483647, %v2300
    %vm2311 = vcmp.eq.f32.partialorder %v2310, 8.507059e+37
    %v2312 = vand.u32 %v2300, 2147483648
    %v2313 = vor.u32 1.1754944e-38, %v2312
    %v2314 = vsel %vm2311, %v2313, %v2309
    %v2315 = vmul.f32 1.0, %v2314
    %v2316 = vmul.f32 %v2295, %v1955
    %v2317 = vmul.f32 %v2276, %v2296
    %v2318 = vadd.f32 %v2316, %v2317
    %v2319 = vtanh.pop %v2318
    %v2320 = vmul.f32 %v2315, %v2319
    %v2321 = vpack.c.bf16 %v2320, %v2320
    %2322 = vmatpush.bf16.msra.mxu0 %v714
    %2323 = vmatpush.bf16.msra.mxu0 %v711
    %2324 = vmatpush.bf16.msra.mxu0 %v708
    %2325 = vmatpush.bf16.msra.mxu0 %v705
    %2326 = vmatpush.bf16.msra.mxu0 %v702
    %2327 = vmatpush.bf16.msra.mxu0 %v699
    %2328 = vmatpush.bf16.msra.mxu0 %v696
    %2329 = vmatpush.bf16.msra.mxu0 %v693
    %2330 = vmatmul.bf16.gmra.mxu0 %v2321
    %v2331 = vpop.f32.mrf.mxu0
    %v2332 = vadd.f32 0.0, %v2331
    %v2333 = vpop.f32.mrf.mxu0
    %2334 = vdwg.mxu0
    %2335 = vmatpush.bf16.msra.mxu0 %v715
    %2336 = vmatpush.bf16.msra.mxu0 %v712
    %2337 = vmatpush.bf16.msra.mxu0 %v709
    %2338 = vmatpush.bf16.msra.mxu0 %v706
    %2339 = vmatpush.bf16.msra.mxu0 %v703
    %2340 = vmatpush.bf16.msra.mxu0 %v700
    %2341 = vmatpush.bf16.msra.mxu0 %v697
    %2342 = vmatpush.bf16.msra.mxu0 %v694
    %2343 = vmatmul.bf16.gmra.mxu0 %v2321
    %v2344 = vpop.f32.mrf.mxu0
    %v2345 = vadd.f32 0.0, %v2344
    %v2346 = vpop.f32.mrf.mxu0
    %2347 = vdwg.mxu0
    %2348 = vmatpush.bf16.msra.mxu0 %v716
    %2349 = vmatpush.bf16.msra.mxu0 %v713
    %2350 = vmatpush.bf16.msra.mxu0 %v710
    %2351 = vmatpush.bf16.msra.mxu0 %v707
    %2352 = vmatpush.bf16.msra.mxu0 %v704
    %2353 = vmatpush.bf16.msra.mxu0 %v701
    %2354 = vmatpush.bf16.msra.mxu0 %v698
    %2355 = vmatpush.bf16.msra.mxu0 %v695
    %2356 = vmatmul.bf16.gmra.mxu0 %v2321
    %v2357 = vpop.f32.mrf.mxu0
    %v2358 = vadd.f32 0.0, %v2357
    %v2359 = vpop.f32.mrf.mxu0
    %2360 = vdwg.mxu0
    %v2361 = vadd.f32 %v202, %v2332
    %v2362 = vadd.f32 %v203, %v2345
    %v2363 = vadd.f32 %v204, %v2358
    %v2364 = vpack.c.bf16 %v2090, %v2090
    %2365 = vmatpush.bf16.msra.mxu0 %v885
    %2366 = vmatpush.bf16.msra.mxu0 %v882
    %2367 = vmatpush.bf16.msra.mxu0 %v879
    %2368 = vmatpush.bf16.msra.mxu0 %v876
    %2369 = vmatpush.bf16.msra.mxu0 %v873
    %2370 = vmatpush.bf16.msra.mxu0 %v870
    %2371 = vmatpush.bf16.msra.mxu0 %v867
    %2372 = vmatpush.bf16.msra.mxu0 %v864
    %2373 = vmatmul.bf16.gmra.mxu0 %v2364
    %v2374 = vpop.f32.mrf.mxu0
    %v2375 = vadd.f32 0.0, %v2374
    %v2376 = vpop.f32.mrf.mxu0
    %2377 = vdwg.mxu0
    %2378 = vmatpush.bf16.msra.mxu0 %v886
    %2379 = vmatpush.bf16.msra.mxu0 %v883
    %2380 = vmatpush.bf16.msra.mxu0 %v880
    %2381 = vmatpush.bf16.msra.mxu0 %v877
    %2382 = vmatpush.bf16.msra.mxu0 %v874
    %2383 = vmatpush.bf16.msra.mxu0 %v871
    %2384 = vmatpush.bf16.msra.mxu0 %v868
    %2385 = vmatpush.bf16.msra.mxu0 %v865
    %2386 = vmatmul.bf16.gmra.mxu0 %v2364
    %v2387 = vpop.f32.mrf.mxu0
    %v2388 = vadd.f32 0.0, %v2387
    %v2389 = vpop.f32.mrf.mxu0
    %2390 = vdwg.mxu0
    %2391 = vmatpush.bf16.msra.mxu0 %v887
    %2392 = vmatpush.bf16.msra.mxu0 %v884
    %2393 = vmatpush.bf16.msra.mxu0 %v881
    %2394 = vmatpush.bf16.msra.mxu0 %v878
    %2395 = vmatpush.bf16.msra.mxu0 %v875
    %2396 = vmatpush.bf16.msra.mxu0 %v872
    %2397 = vmatpush.bf16.msra.mxu0 %v869
    %2398 = vmatpush.bf16.msra.mxu0 %v866
    %2399 = vmatmul.bf16.gmra.mxu0 %v2364
    %v2400 = vpop.f32.mrf.mxu0
    %v2401 = vadd.f32 0.0, %v2400
    %v2402 = vpop.f32.mrf.mxu0
    %2403 = vdwg.mxu0
    %v2404 = vadd.f32 %v210, %v2375
    %v2405 = vadd.f32 %v211, %v2388
    %v2406 = vadd.f32 %v212, %v2401
    %v2407 = vadd.f32 %v2361, %v2404
    %v2408 = vxor.u32 %v2407, 2147483648
    %v2409 = vmul.f32 %v2408, 1.442695
    %v2410 = vpow.pop %v2409
    %v2411 = vadd.f32 %v2410, 1.0
    %v2412 = vrcp.pop %v2411
    %v2413 = vmul.f32 %v2411, %v2412
    %v2414 = vsub.f32 1.0, %v2413
    %v2415 = vmul.f32 %v2412, %v2414
    %v2416 = vadd.f32 %v2412, %v2415
    %vm2417 = vweird.f32 %v2411
    %vm2418 = vweird.f32 %v2412
    %vm2419 = vmor %vm2417, %vm2418
    %v2420 = vsel %vm2419, %v2412, %v2416
    %v2421 = vand.u32 2147483647, %v2411
    %vm2422 = vcmp.eq.f32.partialorder %v2421, 8.507059e+37
    %v2423 = vand.u32 %v2411, 2147483648
    %v2424 = vor.u32 1.1754944e-38, %v2423
    %v2425 = vsel %vm2422, %v2424, %v2420
    %v2426 = vmul.f32 1.0, %v2425
    %v2427 = vadd.f32 %v2362, %v2405
    %v2428 = vxor.u32 %v2427, 2147483648
    %v2429 = vmul.f32 %v2428, 1.442695
    %v2430 = vpow.pop %v2429
    %v2431 = vadd.f32 %v2430, 1.0
    %v2432 = vrcp.pop %v2431
    %v2433 = vmul.f32 %v2431, %v2432
    %v2434 = vsub.f32 1.0, %v2433
    %v2435 = vmul.f32 %v2432, %v2434
    %v2436 = vadd.f32 %v2432, %v2435
    %vm2437 = vweird.f32 %v2431
    %vm2438 = vweird.f32 %v2432
    %vm2439 = vmor %vm2437, %vm2438
    %v2440 = vsel %vm2439, %v2432, %v2436
    %v2441 = vand.u32 2147483647, %v2431
    %vm2442 = vcmp.eq.f32.partialorder %v2441, 8.507059e+37
    %v2443 = vand.u32 %v2431, 2147483648
    %v2444 = vor.u32 1.1754944e-38, %v2443
    %v2445 = vsel %vm2442, %v2444, %v2440
    %v2446 = vmul.f32 1.0, %v2445
    %v2447 = vmul.f32 %v2426, %v2406
    %v2448 = vadd.f32 %v2363, %v2447
    %v2449 = vtanh.pop %v2448
    %v2450 = vsub.f32 1.0, %v2446
    %v2451 = vmul.f32 %v2450, %v2449
    %v2452 = vmul.f32 %v2446, %v2090
    %v2453 = vadd.f32 %v2451, %v2452
    %v2454 = vmax.f32 %v2453, 0.0
    %v2455 = vmul.f32 %v2454, %v218
    %v2456 = vsel %vm1003, %v2455, 0.0
    %2457 = vadd.xlane.f32.xlu0 %v2456
    %v2458 = vpop.xlane.xlu0 %2457
    %vm2459 = vcmp.eq.s32.totalorder %v221, 4
    %v2460 = vsel %vm2459, %v2458, %v2097
    %s2461 = scalar_lea.vmem %s0, 10
    %v2462 = vld [vmem:[%s2461] sm:$0x3]
    %2463 = vst [vmem:[#allocation1] ss:$2 sm:$0xff] %v92
    %s2464 = scalar_lea.vmem [#allocation1], 16
    %2465 = vst [vmem:[%s2464] ss:$2 sm:$0xff] %v93
    %v2466 = vld.sshfl [vmem:[#allocation1] sm:$0xff pattern:$0x75316420]
    %v2467 = vld.sshfl [vmem:[#allocation1 + $0x8] sm:$0xff pattern:$0x75316420]
    %v2468 = vld.sshfl [vmem:[#allocation1 + $0x10] sm:$0xff pattern:$0x75316420]
    %v2469 = vld.sshfl [vmem:[#allocation1 + $0x18] sm:$0xff pattern:$0x75316420]
    %v2471 = vsel %vm235, %v2462, 0
    %v2473 = vsel %vm239, %v2466, 0
    %v2475 = vsel %vm239, %v2467, 0
    %v2477 = vsel %vm239, %v2468, 0
    %v2479 = vsel %vm239, %v2469, 0
    %2481 = vmatpush.msra.mxu0 0.0
    %2482 = vmatpush.msra.mxu0 0.0
    %2483 = vmatpush.msra.mxu0 0.0
    %2484 = vmatpush.msra.mxu0 0.0
    %2485 = vmatpush.msra.mxu0 0.0
    %2486 = vmatpush.msra.mxu0 0.0
    %2487 = vmatpush.msra.mxu0 0.0
    %2488 = vmatpush.msra.mxu0 0.0
    %2489 = vmatpush.msra.mxu0 0.0
    %2490 = vmatpush.msra.mxu0 0.0
    %2491 = vmatpush.msra.mxu0 0.0
    %2492 = vmatpush.msra.mxu0 0.0
    %2493 = vmatpush.msra.mxu0 0.0
    %2494 = vmatpush.msra.mxu0 0.0
    %2495 = vmatpush.msra.mxu0 0.0
    %2496 = vmatpush.msra.mxu0 %v2473
    %2497 = vmatmul.f32.gmra.mxu0 %v2471
    %v2498 = vpop.f32.mrf.mxu0
    %v2499 = vadd.f32 0.0, %v2498
    %2500 = vdwg.mxu0
    %2501 = vmatpush.msra.mxu0 0.0
    %2502 = vmatpush.msra.mxu0 0.0
    %2503 = vmatpush.msra.mxu0 0.0
    %2504 = vmatpush.msra.mxu0 0.0
    %2505 = vmatpush.msra.mxu0 0.0
    %2506 = vmatpush.msra.mxu0 0.0
    %2507 = vmatpush.msra.mxu0 0.0
    %2508 = vmatpush.msra.mxu0 0.0
    %2509 = vmatpush.msra.mxu0 0.0
    %2510 = vmatpush.msra.mxu0 0.0
    %2511 = vmatpush.msra.mxu0 0.0
    %2512 = vmatpush.msra.mxu0 0.0
    %2513 = vmatpush.msra.mxu0 0.0
    %2514 = vmatpush.msra.mxu0 0.0
    %2515 = vmatpush.msra.mxu0 0.0
    %2516 = vmatpush.msra.mxu0 %v2475
    %2517 = vmatmul.f32.gmra.mxu0 %v2471
    %v2518 = vpop.f32.mrf.mxu0
    %v2519 = vadd.f32 0.0, %v2518
    %2520 = vdwg.mxu0
    %2521 = vmatpush.msra.mxu0 0.0
    %2522 = vmatpush.msra.mxu0 0.0
    %2523 = vmatpush.msra.mxu0 0.0
    %2524 = vmatpush.msra.mxu0 0.0
    %2525 = vmatpush.msra.mxu0 0.0
    %2526 = vmatpush.msra.mxu0 0.0
    %2527 = vmatpush.msra.mxu0 0.0
    %2528 = vmatpush.msra.mxu0 0.0
    %2529 = vmatpush.msra.mxu0 0.0
    %2530 = vmatpush.msra.mxu0 0.0
    %2531 = vmatpush.msra.mxu0 0.0
    %2532 = vmatpush.msra.mxu0 0.0
    %2533 = vmatpush.msra.mxu0 0.0
    %2534 = vmatpush.msra.mxu0 0.0
    %2535 = vmatpush.msra.mxu0 0.0
    %2536 = vmatpush.msra.mxu0 %v2477
    %2537 = vmatmul.f32.gmra.mxu0 %v2471
    %v2538 = vpop.f32.mrf.mxu0
    %v2539 = vadd.f32 0.0, %v2538
    %2540 = vdwg.mxu0
    %2541 = vmatpush.msra.mxu0 0.0
    %2542 = vmatpush.msra.mxu0 0.0
    %2543 = vmatpush.msra.mxu0 0.0
    %2544 = vmatpush.msra.mxu0 0.0
    %2545 = vmatpush.msra.mxu0 0.0
    %2546 = vmatpush.msra.mxu0 0.0
    %2547 = vmatpush.msra.mxu0 0.0
    %2548 = vmatpush.msra.mxu0 0.0
    %2549 = vmatpush.msra.mxu0 0.0
    %2550 = vmatpush.msra.mxu0 0.0
    %2551 = vmatpush.msra.mxu0 0.0
    %2552 = vmatpush.msra.mxu0 0.0
    %2553 = vmatpush.msra.mxu0 0.0
    %2554 = vmatpush.msra.mxu0 0.0
    %2555 = vmatpush.msra.mxu0 0.0
    %2556 = vmatpush.msra.mxu0 %v2479
    %2557 = vmatmul.f32.gmra.mxu0 %v2471
    %v2558 = vpop.f32.mrf.mxu0
    %v2559 = vadd.f32 0.0, %v2558
    %2560 = vdwg.mxu0
    %v2561 = vadd.f32 %v192, %v2499
    %v2562 = vadd.f32 %v193, %v2519
    %v2563 = vadd.f32 %v194, %v2539
    %v2564 = vadd.f32 %v195, %v2559
    %2565 = vmatpush.bf16.msra.mxu0 %v457
    %2566 = vmatpush.bf16.msra.mxu0 %v453
    %2567 = vmatpush.bf16.msra.mxu0 %v449
    %2568 = vmatpush.bf16.msra.mxu0 %v445
    %2569 = vmatpush.bf16.msra.mxu0 %v441
    %2570 = vmatpush.bf16.msra.mxu0 %v437
    %2571 = vmatpush.bf16.msra.mxu0 %v433
    %2572 = vmatpush.bf16.msra.mxu0 %v429
    %2573 = vmatmul.bf16.gmra.mxu0 %v2321
    %v2574 = vpop.f32.mrf.mxu0
    %v2575 = vadd.f32 0.0, %v2574
    %v2576 = vpop.f32.mrf.mxu0
    %2577 = vdwg.mxu0
    %2578 = vmatpush.bf16.msra.mxu0 %v458
    %2579 = vmatpush.bf16.msra.mxu0 %v454
    %2580 = vmatpush.bf16.msra.mxu0 %v450
    %2581 = vmatpush.bf16.msra.mxu0 %v446
    %2582 = vmatpush.bf16.msra.mxu0 %v442
    %2583 = vmatpush.bf16.msra.mxu0 %v438
    %2584 = vmatpush.bf16.msra.mxu0 %v434
    %2585 = vmatpush.bf16.msra.mxu0 %v430
    %2586 = vmatmul.bf16.gmra.mxu0 %v2321
    %v2587 = vpop.f32.mrf.mxu0
    %v2588 = vadd.f32 0.0, %v2587
    %v2589 = vpop.f32.mrf.mxu0
    %2590 = vdwg.mxu0
    %2591 = vmatpush.bf16.msra.mxu0 %v459
    %2592 = vmatpush.bf16.msra.mxu0 %v455
    %2593 = vmatpush.bf16.msra.mxu0 %v451
    %2594 = vmatpush.bf16.msra.mxu0 %v447
    %2595 = vmatpush.bf16.msra.mxu0 %v443
    %2596 = vmatpush.bf16.msra.mxu0 %v439
    %2597 = vmatpush.bf16.msra.mxu0 %v435
    %2598 = vmatpush.bf16.msra.mxu0 %v431
    %2599 = vmatmul.bf16.gmra.mxu0 %v2321
    %v2600 = vpop.f32.mrf.mxu0
    %v2601 = vadd.f32 0.0, %v2600
    %v2602 = vpop.f32.mrf.mxu0
    %2603 = vdwg.mxu0
    %2604 = vmatpush.bf16.msra.mxu0 %v460
    %2605 = vmatpush.bf16.msra.mxu0 %v456
    %2606 = vmatpush.bf16.msra.mxu0 %v452
    %2607 = vmatpush.bf16.msra.mxu0 %v448
    %2608 = vmatpush.bf16.msra.mxu0 %v444
    %2609 = vmatpush.bf16.msra.mxu0 %v440
    %2610 = vmatpush.bf16.msra.mxu0 %v436
    %2611 = vmatpush.bf16.msra.mxu0 %v432
    %2612 = vmatmul.bf16.gmra.mxu0 %v2321
    %v2613 = vpop.f32.mrf.mxu0
    %v2614 = vadd.f32 0.0, %v2613
    %v2615 = vpop.f32.mrf.mxu0
    %2616 = vdwg.mxu0
    %v2617 = vadd.f32 %v2561, %v2575
    %v2618 = vadd.f32 %v2562, %v2588
    %v2619 = vadd.f32 %v2563, %v2601
    %v2620 = vadd.f32 %v2564, %v2614
    %v2621 = vxor.u32 %v2617, 2147483648
    %v2622 = vmul.f32 %v2621, 1.442695
    %v2623 = vpow.pop %v2622
    %v2624 = vadd.f32 %v2623, 1.0
    %v2625 = vrcp.pop %v2624
    %v2626 = vmul.f32 %v2624, %v2625
    %v2627 = vsub.f32 1.0, %v2626
    %v2628 = vmul.f32 %v2625, %v2627
    %v2629 = vadd.f32 %v2625, %v2628
    %vm2630 = vweird.f32 %v2624
    %vm2631 = vweird.f32 %v2625
    %vm2632 = vmor %vm2630, %vm2631
    %v2633 = vsel %vm2632, %v2625, %v2629
    %v2634 = vand.u32 2147483647, %v2624
    %vm2635 = vcmp.eq.f32.partialorder %v2634, 8.507059e+37
    %v2636 = vand.u32 %v2624, 2147483648
    %v2637 = vor.u32 1.1754944e-38, %v2636
    %v2638 = vsel %vm2635, %v2637, %v2633
    %v2639 = vmul.f32 1.0, %v2638
    %v2640 = vxor.u32 %v2618, 2147483648
    %v2641 = vmul.f32 %v2640, 1.442695
    %v2642 = vpow.pop %v2641
    %v2643 = vadd.f32 %v2642, 1.0
    %v2644 = vrcp.pop %v2643
    %v2645 = vmul.f32 %v2643, %v2644
    %v2646 = vsub.f32 1.0, %v2645
    %v2647 = vmul.f32 %v2644, %v2646
    %v2648 = vadd.f32 %v2644, %v2647
    %vm2649 = vweird.f32 %v2643
    %vm2650 = vweird.f32 %v2644
    %vm2651 = vmor %vm2649, %vm2650
    %v2652 = vsel %vm2651, %v2644, %v2648
    %v2653 = vand.u32 2147483647, %v2643
    %vm2654 = vcmp.eq.f32.partialorder %v2653, 8.507059e+37
    %v2655 = vand.u32 %v2643, 2147483648
    %v2656 = vor.u32 1.1754944e-38, %v2655
    %v2657 = vsel %vm2654, %v2656, %v2652
    %v2658 = vmul.f32 1.0, %v2657
    %v2659 = vtanh.pop %v2619
    %v2660 = vxor.u32 %v2620, 2147483648
    %v2661 = vmul.f32 %v2660, 1.442695
    %v2662 = vpow.pop %v2661
    %v2663 = vadd.f32 %v2662, 1.0
    %v2664 = vrcp.pop %v2663
    %v2665 = vmul.f32 %v2663, %v2664
    %v2666 = vsub.f32 1.0, %v2665
    %v2667 = vmul.f32 %v2664, %v2666
    %v2668 = vadd.f32 %v2664, %v2667
    %vm2669 = vweird.f32 %v2663
    %vm2670 = vweird.f32 %v2664
    %vm2671 = vmor %vm2669, %vm2670
    %v2672 = vsel %vm2671, %v2664, %v2668
    %v2673 = vand.u32 2147483647, %v2663
    %vm2674 = vcmp.eq.f32.partialorder %v2673, 8.507059e+37
    %v2675 = vand.u32 %v2663, 2147483648
    %v2676 = vor.u32 1.1754944e-38, %v2675
    %v2677 = vsel %vm2674, %v2676, %v2672
    %v2678 = vmul.f32 1.0, %v2677
    %v2679 = vmul.f32 %v2658, %v2318
    %v2680 = vmul.f32 %v2639, %v2659
    %v2681 = vadd.f32 %v2679, %v2680
    %v2682 = vtanh.pop %v2681
    %v2683 = vmul.f32 %v2678, %v2682
    %v2684 = vpack.c.bf16 %v2683, %v2683
    %2685 = vmatpush.bf16.msra.mxu0 %v714
    %2686 = vmatpush.bf16.msra.mxu0 %v711
    %2687 = vmatpush.bf16.msra.mxu0 %v708
    %2688 = vmatpush.bf16.msra.mxu0 %v705
    %2689 = vmatpush.bf16.msra.mxu0 %v702
    %2690 = vmatpush.bf16.msra.mxu0 %v699
    %2691 = vmatpush.bf16.msra.mxu0 %v696
    %2692 = vmatpush.bf16.msra.mxu0 %v693
    %2693 = vmatmul.bf16.gmra.mxu0 %v2684
    %v2694 = vpop.f32.mrf.mxu0
    %v2695 = vadd.f32 0.0, %v2694
    %v2696 = vpop.f32.mrf.mxu0
    %2697 = vdwg.mxu0
    %2698 = vmatpush.bf16.msra.mxu0 %v715
    %2699 = vmatpush.bf16.msra.mxu0 %v712
    %2700 = vmatpush.bf16.msra.mxu0 %v709
    %2701 = vmatpush.bf16.msra.mxu0 %v706
    %2702 = vmatpush.bf16.msra.mxu0 %v703
    %2703 = vmatpush.bf16.msra.mxu0 %v700
    %2704 = vmatpush.bf16.msra.mxu0 %v697
    %2705 = vmatpush.bf16.msra.mxu0 %v694
    %2706 = vmatmul.bf16.gmra.mxu0 %v2684
    %v2707 = vpop.f32.mrf.mxu0
    %v2708 = vadd.f32 0.0, %v2707
    %v2709 = vpop.f32.mrf.mxu0
    %2710 = vdwg.mxu0
    %2711 = vmatpush.bf16.msra.mxu0 %v716
    %2712 = vmatpush.bf16.msra.mxu0 %v713
    %2713 = vmatpush.bf16.msra.mxu0 %v710
    %2714 = vmatpush.bf16.msra.mxu0 %v707
    %2715 = vmatpush.bf16.msra.mxu0 %v704
    %2716 = vmatpush.bf16.msra.mxu0 %v701
    %2717 = vmatpush.bf16.msra.mxu0 %v698
    %2718 = vmatpush.bf16.msra.mxu0 %v695
    %2719 = vmatmul.bf16.gmra.mxu0 %v2684
    %v2720 = vpop.f32.mrf.mxu0
    %v2721 = vadd.f32 0.0, %v2720
    %v2722 = vpop.f32.mrf.mxu0
    %2723 = vdwg.mxu0
    %v2724 = vadd.f32 %v202, %v2695
    %v2725 = vadd.f32 %v203, %v2708
    %v2726 = vadd.f32 %v204, %v2721
    %v2727 = vpack.c.bf16 %v2453, %v2453
    %2728 = vmatpush.bf16.msra.mxu0 %v885
    %2729 = vmatpush.bf16.msra.mxu0 %v882
    %2730 = vmatpush.bf16.msra.mxu0 %v879
    %2731 = vmatpush.bf16.msra.mxu0 %v876
    %2732 = vmatpush.bf16.msra.mxu0 %v873
    %2733 = vmatpush.bf16.msra.mxu0 %v870
    %2734 = vmatpush.bf16.msra.mxu0 %v867
    %2735 = vmatpush.bf16.msra.mxu0 %v864
    %2736 = vmatmul.bf16.gmra.mxu0 %v2727
    %v2737 = vpop.f32.mrf.mxu0
    %v2738 = vadd.f32 0.0, %v2737
    %v2739 = vpop.f32.mrf.mxu0
    %2740 = vdwg.mxu0
    %2741 = vmatpush.bf16.msra.mxu0 %v886
    %2742 = vmatpush.bf16.msra.mxu0 %v883
    %2743 = vmatpush.bf16.msra.mxu0 %v880
    %2744 = vmatpush.bf16.msra.mxu0 %v877
    %2745 = vmatpush.bf16.msra.mxu0 %v874
    %2746 = vmatpush.bf16.msra.mxu0 %v871
    %2747 = vmatpush.bf16.msra.mxu0 %v868
    %2748 = vmatpush.bf16.msra.mxu0 %v865
    %2749 = vmatmul.bf16.gmra.mxu0 %v2727
    %v2750 = vpop.f32.mrf.mxu0
    %v2751 = vadd.f32 0.0, %v2750
    %v2752 = vpop.f32.mrf.mxu0
    %2753 = vdwg.mxu0
    %2754 = vmatpush.bf16.msra.mxu0 %v887
    %2755 = vmatpush.bf16.msra.mxu0 %v884
    %2756 = vmatpush.bf16.msra.mxu0 %v881
    %2757 = vmatpush.bf16.msra.mxu0 %v878
    %2758 = vmatpush.bf16.msra.mxu0 %v875
    %2759 = vmatpush.bf16.msra.mxu0 %v872
    %2760 = vmatpush.bf16.msra.mxu0 %v869
    %2761 = vmatpush.bf16.msra.mxu0 %v866
    %2762 = vmatmul.bf16.gmra.mxu0 %v2727
    %v2763 = vpop.f32.mrf.mxu0
    %v2764 = vadd.f32 0.0, %v2763
    %v2765 = vpop.f32.mrf.mxu0
    %2766 = vdwg.mxu0
    %v2767 = vadd.f32 %v210, %v2738
    %v2768 = vadd.f32 %v211, %v2751
    %v2769 = vadd.f32 %v212, %v2764
    %v2770 = vadd.f32 %v2724, %v2767
    %v2771 = vxor.u32 %v2770, 2147483648
    %v2772 = vmul.f32 %v2771, 1.442695
    %v2773 = vpow.pop %v2772
    %v2774 = vadd.f32 %v2773, 1.0
    %v2775 = vrcp.pop %v2774
    %v2776 = vmul.f32 %v2774, %v2775
    %v2777 = vsub.f32 1.0, %v2776
    %v2778 = vmul.f32 %v2775, %v2777
    %v2779 = vadd.f32 %v2775, %v2778
    %vm2780 = vweird.f32 %v2774
    %vm2781 = vweird.f32 %v2775
    %vm2782 = vmor %vm2780, %vm2781
    %v2783 = vsel %vm2782, %v2775, %v2779
    %v2784 = vand.u32 2147483647, %v2774
    %vm2785 = vcmp.eq.f32.partialorder %v2784, 8.507059e+37
    %v2786 = vand.u32 %v2774, 2147483648
    %v2787 = vor.u32 1.1754944e-38, %v2786
    %v2788 = vsel %vm2785, %v2787, %v2783
    %v2789 = vmul.f32 1.0, %v2788
    %v2790 = vadd.f32 %v2725, %v2768
    %v2791 = vxor.u32 %v2790, 2147483648
    %v2792 = vmul.f32 %v2791, 1.442695
    %v2793 = vpow.pop %v2792
    %v2794 = vadd.f32 %v2793, 1.0
    %v2795 = vrcp.pop %v2794
    %v2796 = vmul.f32 %v2794, %v2795
    %v2797 = vsub.f32 1.0, %v2796
    %v2798 = vmul.f32 %v2795, %v2797
    %v2799 = vadd.f32 %v2795, %v2798
    %vm2800 = vweird.f32 %v2794
    %vm2801 = vweird.f32 %v2795
    %vm2802 = vmor %vm2800, %vm2801
    %v2803 = vsel %vm2802, %v2795, %v2799
    %v2804 = vand.u32 2147483647, %v2794
    %vm2805 = vcmp.eq.f32.partialorder %v2804, 8.507059e+37
    %v2806 = vand.u32 %v2794, 2147483648
    %v2807 = vor.u32 1.1754944e-38, %v2806
    %v2808 = vsel %vm2805, %v2807, %v2803
    %v2809 = vmul.f32 1.0, %v2808
    %v2810 = vmul.f32 %v2789, %v2769
    %v2811 = vadd.f32 %v2726, %v2810
    %v2812 = vtanh.pop %v2811
    %v2813 = vsub.f32 1.0, %v2809
    %v2814 = vmul.f32 %v2813, %v2812
    %v2815 = vmul.f32 %v2809, %v2453
    %v2816 = vadd.f32 %v2814, %v2815
    %v2817 = vmax.f32 %v2816, 0.0
    %v2818 = vmul.f32 %v2817, %v218
    %v2819 = vsel %vm1003, %v2818, 0.0
    %2820 = vadd.xlane.f32.xlu0 %v2819
    %v2821 = vpop.xlane.xlu0 %2820
    %vm2822 = vcmp.eq.s32.totalorder %v221, 5
    %v2823 = vsel %vm2822, %v2821, %v2460
    %s2824 = scalar_lea.vmem %s0, 12
    %v2825 = vld [vmem:[%s2824] sm:$0x3]
    %2826 = vst [vmem:[#allocation1] ss:$2 sm:$0xff] %v92
    %s2827 = scalar_lea.vmem [#allocation1], 16
    %2828 = vst [vmem:[%s2827] ss:$2 sm:$0xff] %v93
    %v2829 = vld.sshfl [vmem:[#allocation1] sm:$0xff pattern:$0x75316420]
    %v2830 = vld.sshfl [vmem:[#allocation1 + $0x8] sm:$0xff pattern:$0x75316420]
    %v2831 = vld.sshfl [vmem:[#allocation1 + $0x10] sm:$0xff pattern:$0x75316420]
    %v2832 = vld.sshfl [vmem:[#allocation1 + $0x18] sm:$0xff pattern:$0x75316420]
    %v2834 = vsel %vm235, %v2825, 0
    %v2836 = vsel %vm239, %v2829, 0
    %v2838 = vsel %vm239, %v2830, 0
    %v2840 = vsel %vm239, %v2831, 0
    %v2842 = vsel %vm239, %v2832, 0
    %2844 = vmatpush.msra.mxu0 0.0
    %2845 = vmatpush.msra.mxu0 0.0
    %2846 = vmatpush.msra.mxu0 0.0
    %2847 = vmatpush.msra.mxu0 0.0
    %2848 = vmatpush.msra.mxu0 0.0
    %2849 = vmatpush.msra.mxu0 0.0
    %2850 = vmatpush.msra.mxu0 0.0
    %2851 = vmatpush.msra.mxu0 0.0
    %2852 = vmatpush.msra.mxu0 0.0
    %2853 = vmatpush.msra.mxu0 0.0
    %2854 = vmatpush.msra.mxu0 0.0
    %2855 = vmatpush.msra.mxu0 0.0
    %2856 = vmatpush.msra.mxu0 0.0
    %2857 = vmatpush.msra.mxu0 0.0
    %2858 = vmatpush.msra.mxu0 0.0
    %2859 = vmatpush.msra.mxu0 %v2836
    %2860 = vmatmul.f32.gmra.mxu0 %v2834
    %v2861 = vpop.f32.mrf.mxu0
    %v2862 = vadd.f32 0.0, %v2861
    %2863 = vdwg.mxu0
    %2864 = vmatpush.msra.mxu0 0.0
    %2865 = vmatpush.msra.mxu0 0.0
    %2866 = vmatpush.msra.mxu0 0.0
    %2867 = vmatpush.msra.mxu0 0.0
    %2868 = vmatpush.msra.mxu0 0.0
    %2869 = vmatpush.msra.mxu0 0.0
    %2870 = vmatpush.msra.mxu0 0.0
    %2871 = vmatpush.msra.mxu0 0.0
    %2872 = vmatpush.msra.mxu0 0.0
    %2873 = vmatpush.msra.mxu0 0.0
    %2874 = vmatpush.msra.mxu0 0.0
    %2875 = vmatpush.msra.mxu0 0.0
    %2876 = vmatpush.msra.mxu0 0.0
    %2877 = vmatpush.msra.mxu0 0.0
    %2878 = vmatpush.msra.mxu0 0.0
    %2879 = vmatpush.msra.mxu0 %v2838
    %2880 = vmatmul.f32.gmra.mxu0 %v2834
    %v2881 = vpop.f32.mrf.mxu0
    %v2882 = vadd.f32 0.0, %v2881
    %2883 = vdwg.mxu0
    %2884 = vmatpush.msra.mxu0 0.0
    %2885 = vmatpush.msra.mxu0 0.0
    %2886 = vmatpush.msra.mxu0 0.0
    %2887 = vmatpush.msra.mxu0 0.0
    %2888 = vmatpush.msra.mxu0 0.0
    %2889 = vmatpush.msra.mxu0 0.0
    %2890 = vmatpush.msra.mxu0 0.0
    %2891 = vmatpush.msra.mxu0 0.0
    %2892 = vmatpush.msra.mxu0 0.0
    %2893 = vmatpush.msra.mxu0 0.0
    %2894 = vmatpush.msra.mxu0 0.0
    %2895 = vmatpush.msra.mxu0 0.0
    %2896 = vmatpush.msra.mxu0 0.0
    %2897 = vmatpush.msra.mxu0 0.0
    %2898 = vmatpush.msra.mxu0 0.0
    %2899 = vmatpush.msra.mxu0 %v2840
    %2900 = vmatmul.f32.gmra.mxu0 %v2834
    %v2901 = vpop.f32.mrf.mxu0
    %v2902 = vadd.f32 0.0, %v2901
    %2903 = vdwg.mxu0
    %2904 = vmatpush.msra.mxu0 0.0
    %2905 = vmatpush.msra.mxu0 0.0
    %2906 = vmatpush.msra.mxu0 0.0
    %2907 = vmatpush.msra.mxu0 0.0
    %2908 = vmatpush.msra.mxu0 0.0
    %2909 = vmatpush.msra.mxu0 0.0
    %2910 = vmatpush.msra.mxu0 0.0
    %2911 = vmatpush.msra.mxu0 0.0
    %2912 = vmatpush.msra.mxu0 0.0
    %2913 = vmatpush.msra.mxu0 0.0
    %2914 = vmatpush.msra.mxu0 0.0
    %2915 = vmatpush.msra.mxu0 0.0
    %2916 = vmatpush.msra.mxu0 0.0
    %2917 = vmatpush.msra.mxu0 0.0
    %2918 = vmatpush.msra.mxu0 0.0
    %2919 = vmatpush.msra.mxu0 %v2842
    %2920 = vmatmul.f32.gmra.mxu0 %v2834
    %v2921 = vpop.f32.mrf.mxu0
    %v2922 = vadd.f32 0.0, %v2921
    %2923 = vdwg.mxu0
    %v2924 = vadd.f32 %v192, %v2862
    %v2925 = vadd.f32 %v193, %v2882
    %v2926 = vadd.f32 %v194, %v2902
    %v2927 = vadd.f32 %v195, %v2922
    %2928 = vmatpush.bf16.msra.mxu0 %v457
    %2929 = vmatpush.bf16.msra.mxu0 %v453
    %2930 = vmatpush.bf16.msra.mxu0 %v449
    %2931 = vmatpush.bf16.msra.mxu0 %v445
    %2932 = vmatpush.bf16.msra.mxu0 %v441
    %2933 = vmatpush.bf16.msra.mxu0 %v437
    %2934 = vmatpush.bf16.msra.mxu0 %v433
    %2935 = vmatpush.bf16.msra.mxu0 %v429
    %2936 = vmatmul.bf16.gmra.mxu0 %v2684
    %v2937 = vpop.f32.mrf.mxu0
    %v2938 = vadd.f32 0.0, %v2937
    %v2939 = vpop.f32.mrf.mxu0
    %2940 = vdwg.mxu0
    %2941 = vmatpush.bf16.msra.mxu0 %v458
    %2942 = vmatpush.bf16.msra.mxu0 %v454
    %2943 = vmatpush.bf16.msra.mxu0 %v450
    %2944 = vmatpush.bf16.msra.mxu0 %v446
    %2945 = vmatpush.bf16.msra.mxu0 %v442
    %2946 = vmatpush.bf16.msra.mxu0 %v438
    %2947 = vmatpush.bf16.msra.mxu0 %v434
    %2948 = vmatpush.bf16.msra.mxu0 %v430
    %2949 = vmatmul.bf16.gmra.mxu0 %v2684
    %v2950 = vpop.f32.mrf.mxu0
    %v2951 = vadd.f32 0.0, %v2950
    %v2952 = vpop.f32.mrf.mxu0
    %2953 = vdwg.mxu0
    %2954 = vmatpush.bf16.msra.mxu0 %v459
    %2955 = vmatpush.bf16.msra.mxu0 %v455
    %2956 = vmatpush.bf16.msra.mxu0 %v451
    %2957 = vmatpush.bf16.msra.mxu0 %v447
    %2958 = vmatpush.bf16.msra.mxu0 %v443
    %2959 = vmatpush.bf16.msra.mxu0 %v439
    %2960 = vmatpush.bf16.msra.mxu0 %v435
    %2961 = vmatpush.bf16.msra.mxu0 %v431
    %2962 = vmatmul.bf16.gmra.mxu0 %v2684
    %v2963 = vpop.f32.mrf.mxu0
    %v2964 = vadd.f32 0.0, %v2963
    %v2965 = vpop.f32.mrf.mxu0
    %2966 = vdwg.mxu0
    %2967 = vmatpush.bf16.msra.mxu0 %v460
    %2968 = vmatpush.bf16.msra.mxu0 %v456
    %2969 = vmatpush.bf16.msra.mxu0 %v452
    %2970 = vmatpush.bf16.msra.mxu0 %v448
    %2971 = vmatpush.bf16.msra.mxu0 %v444
    %2972 = vmatpush.bf16.msra.mxu0 %v440
    %2973 = vmatpush.bf16.msra.mxu0 %v436
    %2974 = vmatpush.bf16.msra.mxu0 %v432
    %2975 = vmatmul.bf16.gmra.mxu0 %v2684
    %v2976 = vpop.f32.mrf.mxu0
    %v2977 = vadd.f32 0.0, %v2976
    %v2978 = vpop.f32.mrf.mxu0
    %2979 = vdwg.mxu0
    %v2980 = vadd.f32 %v2924, %v2938
    %v2981 = vadd.f32 %v2925, %v2951
    %v2982 = vadd.f32 %v2926, %v2964
    %v2983 = vadd.f32 %v2927, %v2977
    %v2984 = vxor.u32 %v2980, 2147483648
    %v2985 = vmul.f32 %v2984, 1.442695
    %v2986 = vpow.pop %v2985
    %v2987 = vadd.f32 %v2986, 1.0
    %v2988 = vrcp.pop %v2987
    %v2989 = vmul.f32 %v2987, %v2988
    %v2990 = vsub.f32 1.0, %v2989
    %v2991 = vmul.f32 %v2988, %v2990
    %v2992 = vadd.f32 %v2988, %v2991
    %vm2993 = vweird.f32 %v2987
    %vm2994 = vweird.f32 %v2988
    %vm2995 = vmor %vm2993, %vm2994
    %v2996 = vsel %vm2995, %v2988, %v2992
    %v2997 = vand.u32 2147483647, %v2987
    %vm2998 = vcmp.eq.f32.partialorder %v2997, 8.507059e+37
    %v2999 = vand.u32 %v2987, 2147483648
    %v3000 = vor.u32 1.1754944e-38, %v2999
    %v3001 = vsel %vm2998, %v3000, %v2996
    %v3002 = vmul.f32 1.0, %v3001
    %v3003 = vxor.u32 %v2981, 2147483648
    %v3004 = vmul.f32 %v3003, 1.442695
    %v3005 = vpow.pop %v3004
    %v3006 = vadd.f32 %v3005, 1.0
    %v3007 = vrcp.pop %v3006
    %v3008 = vmul.f32 %v3006, %v3007
    %v3009 = vsub.f32 1.0, %v3008
    %v3010 = vmul.f32 %v3007, %v3009
    %v3011 = vadd.f32 %v3007, %v3010
    %vm3012 = vweird.f32 %v3006
    %vm3013 = vweird.f32 %v3007
    %vm3014 = vmor %vm3012, %vm3013
    %v3015 = vsel %vm3014, %v3007, %v3011
    %v3016 = vand.u32 2147483647, %v3006
    %vm3017 = vcmp.eq.f32.partialorder %v3016, 8.507059e+37
    %v3018 = vand.u32 %v3006, 2147483648
    %v3019 = vor.u32 1.1754944e-38, %v3018
    %v3020 = vsel %vm3017, %v3019, %v3015
    %v3021 = vmul.f32 1.0, %v3020
    %v3022 = vtanh.pop %v2982
    %v3023 = vxor.u32 %v2983, 2147483648
    %v3024 = vmul.f32 %v3023, 1.442695
    %v3025 = vpow.pop %v3024
    %v3026 = vadd.f32 %v3025, 1.0
    %v3027 = vrcp.pop %v3026
    %v3028 = vmul.f32 %v3026, %v3027
    %v3029 = vsub.f32 1.0, %v3028
    %v3030 = vmul.f32 %v3027, %v3029
    %v3031 = vadd.f32 %v3027, %v3030
    %vm3032 = vweird.f32 %v3026
    %vm3033 = vweird.f32 %v3027
    %vm3034 = vmor %vm3032, %vm3033
    %v3035 = vsel %vm3034, %v3027, %v3031
    %v3036 = vand.u32 2147483647, %v3026
    %vm3037 = vcmp.eq.f32.partialorder %v3036, 8.507059e+37
    %v3038 = vand.u32 %v3026, 2147483648
    %v3039 = vor.u32 1.1754944e-38, %v3038
    %v3040 = vsel %vm3037, %v3039, %v3035
    %v3041 = vmul.f32 1.0, %v3040
    %v3042 = vmul.f32 %v3021, %v2681
    %v3043 = vmul.f32 %v3002, %v3022
    %v3044 = vadd.f32 %v3042, %v3043
    %v3045 = vtanh.pop %v3044
    %v3046 = vmul.f32 %v3041, %v3045
    %v3047 = vpack.c.bf16 %v3046, %v3046
    %3048 = vmatpush.bf16.msra.mxu0 %v714
    %3049 = vmatpush.bf16.msra.mxu0 %v711
    %3050 = vmatpush.bf16.msra.mxu0 %v708
    %3051 = vmatpush.bf16.msra.mxu0 %v705
    %3052 = vmatpush.bf16.msra.mxu0 %v702
    %3053 = vmatpush.bf16.msra.mxu0 %v699
    %3054 = vmatpush.bf16.msra.mxu0 %v696
    %3055 = vmatpush.bf16.msra.mxu0 %v693
    %3056 = vmatmul.bf16.gmra.mxu0 %v3047
    %v3057 = vpop.f32.mrf.mxu0
    %v3058 = vadd.f32 0.0, %v3057
    %v3059 = vpop.f32.mrf.mxu0
    %3060 = vdwg.mxu0
    %3061 = vmatpush.bf16.msra.mxu0 %v715
    %3062 = vmatpush.bf16.msra.mxu0 %v712
    %3063 = vmatpush.bf16.msra.mxu0 %v709
    %3064 = vmatpush.bf16.msra.mxu0 %v706
    %3065 = vmatpush.bf16.msra.mxu0 %v703
    %3066 = vmatpush.bf16.msra.mxu0 %v700
    %3067 = vmatpush.bf16.msra.mxu0 %v697
    %3068 = vmatpush.bf16.msra.mxu0 %v694
    %3069 = vmatmul.bf16.gmra.mxu0 %v3047
    %v3070 = vpop.f32.mrf.mxu0
    %v3071 = vadd.f32 0.0, %v3070
    %v3072 = vpop.f32.mrf.mxu0
    %3073 = vdwg.mxu0
    %3074 = vmatpush.bf16.msra.mxu0 %v716
    %3075 = vmatpush.bf16.msra.mxu0 %v713
    %3076 = vmatpush.bf16.msra.mxu0 %v710
    %3077 = vmatpush.bf16.msra.mxu0 %v707
    %3078 = vmatpush.bf16.msra.mxu0 %v704
    %3079 = vmatpush.bf16.msra.mxu0 %v701
    %3080 = vmatpush.bf16.msra.mxu0 %v698
    %3081 = vmatpush.bf16.msra.mxu0 %v695
    %3082 = vmatmul.bf16.gmra.mxu0 %v3047
    %v3083 = vpop.f32.mrf.mxu0
    %v3084 = vadd.f32 0.0, %v3083
    %v3085 = vpop.f32.mrf.mxu0
    %3086 = vdwg.mxu0
    %v3087 = vadd.f32 %v202, %v3058
    %v3088 = vadd.f32 %v203, %v3071
    %v3089 = vadd.f32 %v204, %v3084
    %v3090 = vpack.c.bf16 %v2816, %v2816
    %3091 = vmatpush.bf16.msra.mxu0 %v885
    %3092 = vmatpush.bf16.msra.mxu0 %v882
    %3093 = vmatpush.bf16.msra.mxu0 %v879
    %3094 = vmatpush.bf16.msra.mxu0 %v876
    %3095 = vmatpush.bf16.msra.mxu0 %v873
    %3096 = vmatpush.bf16.msra.mxu0 %v870
    %3097 = vmatpush.bf16.msra.mxu0 %v867
    %3098 = vmatpush.bf16.msra.mxu0 %v864
    %3099 = vmatmul.bf16.gmra.mxu0 %v3090
    %v3100 = vpop.f32.mrf.mxu0
    %v3101 = vadd.f32 0.0, %v3100
    %v3102 = vpop.f32.mrf.mxu0
    %3103 = vdwg.mxu0
    %3104 = vmatpush.bf16.msra.mxu0 %v886
    %3105 = vmatpush.bf16.msra.mxu0 %v883
    %3106 = vmatpush.bf16.msra.mxu0 %v880
    %3107 = vmatpush.bf16.msra.mxu0 %v877
    %3108 = vmatpush.bf16.msra.mxu0 %v874
    %3109 = vmatpush.bf16.msra.mxu0 %v871
    %3110 = vmatpush.bf16.msra.mxu0 %v868
    %3111 = vmatpush.bf16.msra.mxu0 %v865
    %3112 = vmatmul.bf16.gmra.mxu0 %v3090
    %v3113 = vpop.f32.mrf.mxu0
    %v3114 = vadd.f32 0.0, %v3113
    %v3115 = vpop.f32.mrf.mxu0
    %3116 = vdwg.mxu0
    %3117 = vmatpush.bf16.msra.mxu0 %v887
    %3118 = vmatpush.bf16.msra.mxu0 %v884
    %3119 = vmatpush.bf16.msra.mxu0 %v881
    %3120 = vmatpush.bf16.msra.mxu0 %v878
    %3121 = vmatpush.bf16.msra.mxu0 %v875
    %3122 = vmatpush.bf16.msra.mxu0 %v872
    %3123 = vmatpush.bf16.msra.mxu0 %v869
    %3124 = vmatpush.bf16.msra.mxu0 %v866
    %3125 = vmatmul.bf16.gmra.mxu0 %v3090
    %v3126 = vpop.f32.mrf.mxu0
    %v3127 = vadd.f32 0.0, %v3126
    %v3128 = vpop.f32.mrf.mxu0
    %3129 = vdwg.mxu0
    %v3130 = vadd.f32 %v210, %v3101
    %v3131 = vadd.f32 %v211, %v3114
    %v3132 = vadd.f32 %v212, %v3127
    %v3133 = vadd.f32 %v3087, %v3130
    %v3134 = vxor.u32 %v3133, 2147483648
    %v3135 = vmul.f32 %v3134, 1.442695
    %v3136 = vpow.pop %v3135
    %v3137 = vadd.f32 %v3136, 1.0
    %v3138 = vrcp.pop %v3137
    %v3139 = vmul.f32 %v3137, %v3138
    %v3140 = vsub.f32 1.0, %v3139
    %v3141 = vmul.f32 %v3138, %v3140
    %v3142 = vadd.f32 %v3138, %v3141
    %vm3143 = vweird.f32 %v3137
    %vm3144 = vweird.f32 %v3138
    %vm3145 = vmor %vm3143, %vm3144
    %v3146 = vsel %vm3145, %v3138, %v3142
    %v3147 = vand.u32 2147483647, %v3137
    %vm3148 = vcmp.eq.f32.partialorder %v3147, 8.507059e+37
    %v3149 = vand.u32 %v3137, 2147483648
    %v3150 = vor.u32 1.1754944e-38, %v3149
    %v3151 = vsel %vm3148, %v3150, %v3146
    %v3152 = vmul.f32 1.0, %v3151
    %v3153 = vadd.f32 %v3088, %v3131
    %v3154 = vxor.u32 %v3153, 2147483648
    %v3155 = vmul.f32 %v3154, 1.442695
    %v3156 = vpow.pop %v3155
    %v3157 = vadd.f32 %v3156, 1.0
    %v3158 = vrcp.pop %v3157
    %v3159 = vmul.f32 %v3157, %v3158
    %v3160 = vsub.f32 1.0, %v3159
    %v3161 = vmul.f32 %v3158, %v3160
    %v3162 = vadd.f32 %v3158, %v3161
    %vm3163 = vweird.f32 %v3157
    %vm3164 = vweird.f32 %v3158
    %vm3165 = vmor %vm3163, %vm3164
    %v3166 = vsel %vm3165, %v3158, %v3162
    %v3167 = vand.u32 2147483647, %v3157
    %vm3168 = vcmp.eq.f32.partialorder %v3167, 8.507059e+37
    %v3169 = vand.u32 %v3157, 2147483648
    %v3170 = vor.u32 1.1754944e-38, %v3169
    %v3171 = vsel %vm3168, %v3170, %v3166
    %v3172 = vmul.f32 1.0, %v3171
    %v3173 = vmul.f32 %v3152, %v3132
    %v3174 = vadd.f32 %v3089, %v3173
    %v3175 = vtanh.pop %v3174
    %v3176 = vsub.f32 1.0, %v3172
    %v3177 = vmul.f32 %v3176, %v3175
    %v3178 = vmul.f32 %v3172, %v2816
    %v3179 = vadd.f32 %v3177, %v3178
    %v3180 = vmax.f32 %v3179, 0.0
    %v3181 = vmul.f32 %v3180, %v218
    %v3182 = vsel %vm1003, %v3181, 0.0
    %3183 = vadd.xlane.f32.xlu0 %v3182
    %v3184 = vpop.xlane.xlu0 %3183
    %vm3185 = vcmp.eq.s32.totalorder %v221, 6
    %v3186 = vsel %vm3185, %v3184, %v2823
    %s3187 = scalar_lea.vmem %s0, 14
    %v3188 = vld [vmem:[%s3187] sm:$0x3]
    %3189 = vst [vmem:[#allocation1] ss:$2 sm:$0xff] %v92
    %s3190 = scalar_lea.vmem [#allocation1], 16
    %3191 = vst [vmem:[%s3190] ss:$2 sm:$0xff] %v93
    %v3192 = vld.sshfl [vmem:[#allocation1] sm:$0xff pattern:$0x75316420]
    %v3193 = vld.sshfl [vmem:[#allocation1 + $0x8] sm:$0xff pattern:$0x75316420]
    %v3194 = vld.sshfl [vmem:[#allocation1 + $0x10] sm:$0xff pattern:$0x75316420]
    %v3195 = vld.sshfl [vmem:[#allocation1 + $0x18] sm:$0xff pattern:$0x75316420]
    %v3197 = vsel %vm235, %v3188, 0
    %v3199 = vsel %vm239, %v3192, 0
    %v3201 = vsel %vm239, %v3193, 0
    %v3203 = vsel %vm239, %v3194, 0
    %v3205 = vsel %vm239, %v3195, 0
    %3207 = vmatpush.msra.mxu0 0.0
    %3208 = vmatpush.msra.mxu0 0.0
    %3209 = vmatpush.msra.mxu0 0.0
    %3210 = vmatpush.msra.mxu0 0.0
    %3211 = vmatpush.msra.mxu0 0.0
    %3212 = vmatpush.msra.mxu0 0.0
    %3213 = vmatpush.msra.mxu0 0.0
    %3214 = vmatpush.msra.mxu0 0.0
    %3215 = vmatpush.msra.mxu0 0.0
    %3216 = vmatpush.msra.mxu0 0.0
    %3217 = vmatpush.msra.mxu0 0.0
    %3218 = vmatpush.msra.mxu0 0.0
    %3219 = vmatpush.msra.mxu0 0.0
    %3220 = vmatpush.msra.mxu0 0.0
    %3221 = vmatpush.msra.mxu0 0.0
    %3222 = vmatpush.msra.mxu0 %v3199
    %3223 = vmatmul.f32.gmra.mxu0 %v3197
    %v3224 = vpop.f32.mrf.mxu0
    %v3225 = vadd.f32 0.0, %v3224
    %3226 = vdwg.mxu0
    %3227 = vmatpush.msra.mxu0 0.0
    %3228 = vmatpush.msra.mxu0 0.0
    %3229 = vmatpush.msra.mxu0 0.0
    %3230 = vmatpush.msra.mxu0 0.0
    %3231 = vmatpush.msra.mxu0 0.0
    %3232 = vmatpush.msra.mxu0 0.0
    %3233 = vmatpush.msra.mxu0 0.0
    %3234 = vmatpush.msra.mxu0 0.0
    %3235 = vmatpush.msra.mxu0 0.0
    %3236 = vmatpush.msra.mxu0 0.0
    %3237 = vmatpush.msra.mxu0 0.0
    %3238 = vmatpush.msra.mxu0 0.0
    %3239 = vmatpush.msra.mxu0 0.0
    %3240 = vmatpush.msra.mxu0 0.0
    %3241 = vmatpush.msra.mxu0 0.0
    %3242 = vmatpush.msra.mxu0 %v3201
    %3243 = vmatmul.f32.gmra.mxu0 %v3197
    %v3244 = vpop.f32.mrf.mxu0
    %v3245 = vadd.f32 0.0, %v3244
    %3246 = vdwg.mxu0
    %3247 = vmatpush.msra.mxu0 0.0
    %3248 = vmatpush.msra.mxu0 0.0
    %3249 = vmatpush.msra.mxu0 0.0
    %3250 = vmatpush.msra.mxu0 0.0
    %3251 = vmatpush.msra.mxu0 0.0
    %3252 = vmatpush.msra.mxu0 0.0
    %3253 = vmatpush.msra.mxu0 0.0
    %3254 = vmatpush.msra.mxu0 0.0
    %3255 = vmatpush.msra.mxu0 0.0
    %3256 = vmatpush.msra.mxu0 0.0
    %3257 = vmatpush.msra.mxu0 0.0
    %3258 = vmatpush.msra.mxu0 0.0
    %3259 = vmatpush.msra.mxu0 0.0
    %3260 = vmatpush.msra.mxu0 0.0
    %3261 = vmatpush.msra.mxu0 0.0
    %3262 = vmatpush.msra.mxu0 %v3203
    %3263 = vmatmul.f32.gmra.mxu0 %v3197
    %v3264 = vpop.f32.mrf.mxu0
    %v3265 = vadd.f32 0.0, %v3264
    %3266 = vdwg.mxu0
    %3267 = vmatpush.msra.mxu0 0.0
    %3268 = vmatpush.msra.mxu0 0.0
    %3269 = vmatpush.msra.mxu0 0.0
    %3270 = vmatpush.msra.mxu0 0.0
    %3271 = vmatpush.msra.mxu0 0.0
    %3272 = vmatpush.msra.mxu0 0.0
    %3273 = vmatpush.msra.mxu0 0.0
    %3274 = vmatpush.msra.mxu0 0.0
    %3275 = vmatpush.msra.mxu0 0.0
    %3276 = vmatpush.msra.mxu0 0.0
    %3277 = vmatpush.msra.mxu0 0.0
    %3278 = vmatpush.msra.mxu0 0.0
    %3279 = vmatpush.msra.mxu0 0.0
    %3280 = vmatpush.msra.mxu0 0.0
    %3281 = vmatpush.msra.mxu0 0.0
    %3282 = vmatpush.msra.mxu0 %v3205
    %3283 = vmatmul.f32.gmra.mxu0 %v3197
    %v3284 = vpop.f32.mrf.mxu0
    %v3285 = vadd.f32 0.0, %v3284
    %3286 = vdwg.mxu0
    %v3287 = vadd.f32 %v192, %v3225
    %v3288 = vadd.f32 %v193, %v3245
    %v3289 = vadd.f32 %v194, %v3265
    %v3290 = vadd.f32 %v195, %v3285
    %3291 = vmatpush.bf16.msra.mxu0 %v457
    %3292 = vmatpush.bf16.msra.mxu0 %v453
    %3293 = vmatpush.bf16.msra.mxu0 %v449
    %3294 = vmatpush.bf16.msra.mxu0 %v445
    %3295 = vmatpush.bf16.msra.mxu0 %v441
    %3296 = vmatpush.bf16.msra.mxu0 %v437
    %3297 = vmatpush.bf16.msra.mxu0 %v433
    %3298 = vmatpush.bf16.msra.mxu0 %v429
    %3299 = vmatmul.bf16.gmra.mxu0 %v3047
    %v3300 = vpop.f32.mrf.mxu0
    %v3301 = vadd.f32 0.0, %v3300
    %v3302 = vpop.f32.mrf.mxu0
    %3303 = vdwg.mxu0
    %3304 = vmatpush.bf16.msra.mxu0 %v458
    %3305 = vmatpush.bf16.msra.mxu0 %v454
    %3306 = vmatpush.bf16.msra.mxu0 %v450
    %3307 = vmatpush.bf16.msra.mxu0 %v446
    %3308 = vmatpush.bf16.msra.mxu0 %v442
    %3309 = vmatpush.bf16.msra.mxu0 %v438
    %3310 = vmatpush.bf16.msra.mxu0 %v434
    %3311 = vmatpush.bf16.msra.mxu0 %v430
    %3312 = vmatmul.bf16.gmra.mxu0 %v3047
    %v3313 = vpop.f32.mrf.mxu0
    %v3314 = vadd.f32 0.0, %v3313
    %v3315 = vpop.f32.mrf.mxu0
    %3316 = vdwg.mxu0
    %3317 = vmatpush.bf16.msra.mxu0 %v459
    %3318 = vmatpush.bf16.msra.mxu0 %v455
    %3319 = vmatpush.bf16.msra.mxu0 %v451
    %3320 = vmatpush.bf16.msra.mxu0 %v447
    %3321 = vmatpush.bf16.msra.mxu0 %v443
    %3322 = vmatpush.bf16.msra.mxu0 %v439
    %3323 = vmatpush.bf16.msra.mxu0 %v435
    %3324 = vmatpush.bf16.msra.mxu0 %v431
    %3325 = vmatmul.bf16.gmra.mxu0 %v3047
    %v3326 = vpop.f32.mrf.mxu0
    %v3327 = vadd.f32 0.0, %v3326
    %v3328 = vpop.f32.mrf.mxu0
    %3329 = vdwg.mxu0
    %3330 = vmatpush.bf16.msra.mxu0 %v460
    %3331 = vmatpush.bf16.msra.mxu0 %v456
    %3332 = vmatpush.bf16.msra.mxu0 %v452
    %3333 = vmatpush.bf16.msra.mxu0 %v448
    %3334 = vmatpush.bf16.msra.mxu0 %v444
    %3335 = vmatpush.bf16.msra.mxu0 %v440
    %3336 = vmatpush.bf16.msra.mxu0 %v436
    %3337 = vmatpush.bf16.msra.mxu0 %v432
    %3338 = vmatmul.bf16.gmra.mxu0 %v3047
    %v3339 = vpop.f32.mrf.mxu0
    %v3340 = vadd.f32 0.0, %v3339
    %v3341 = vpop.f32.mrf.mxu0
    %3342 = vdwg.mxu0
    %v3343 = vadd.f32 %v3287, %v3301
    %v3344 = vadd.f32 %v3288, %v3314
    %v3345 = vadd.f32 %v3289, %v3327
    %v3346 = vadd.f32 %v3290, %v3340
    %v3347 = vxor.u32 %v3343, 2147483648
    %v3348 = vmul.f32 %v3347, 1.442695
    %v3349 = vpow.pop %v3348
    %v3350 = vadd.f32 %v3349, 1.0
    %v3351 = vrcp.pop %v3350
    %v3352 = vmul.f32 %v3350, %v3351
    %v3353 = vsub.f32 1.0, %v3352
    %v3354 = vmul.f32 %v3351, %v3353
    %v3355 = vadd.f32 %v3351, %v3354
    %vm3356 = vweird.f32 %v3350
    %vm3357 = vweird.f32 %v3351
    %vm3358 = vmor %vm3356, %vm3357
    %v3359 = vsel %vm3358, %v3351, %v3355
    %v3360 = vand.u32 2147483647, %v3350
    %vm3361 = vcmp.eq.f32.partialorder %v3360, 8.507059e+37
    %v3362 = vand.u32 %v3350, 2147483648
    %v3363 = vor.u32 1.1754944e-38, %v3362
    %v3364 = vsel %vm3361, %v3363, %v3359
    %v3365 = vmul.f32 1.0, %v3364
    %v3366 = vxor.u32 %v3344, 2147483648
    %v3367 = vmul.f32 %v3366, 1.442695
    %v3368 = vpow.pop %v3367
    %v3369 = vadd.f32 %v3368, 1.0
    %v3370 = vrcp.pop %v3369
    %v3371 = vmul.f32 %v3369, %v3370
    %v3372 = vsub.f32 1.0, %v3371
    %v3373 = vmul.f32 %v3370, %v3372
    %v3374 = vadd.f32 %v3370, %v3373
    %vm3375 = vweird.f32 %v3369
    %vm3376 = vweird.f32 %v3370
    %vm3377 = vmor %vm3375, %vm3376
    %v3378 = vsel %vm3377, %v3370, %v3374
    %v3379 = vand.u32 2147483647, %v3369
    %vm3380 = vcmp.eq.f32.partialorder %v3379, 8.507059e+37
    %v3381 = vand.u32 %v3369, 2147483648
    %v3382 = vor.u32 1.1754944e-38, %v3381
    %v3383 = vsel %vm3380, %v3382, %v3378
    %v3384 = vmul.f32 1.0, %v3383
    %v3385 = vtanh.pop %v3345
    %v3386 = vxor.u32 %v3346, 2147483648
    %v3387 = vmul.f32 %v3386, 1.442695
    %v3388 = vpow.pop %v3387
    %v3389 = vadd.f32 %v3388, 1.0
    %v3390 = vrcp.pop %v3389
    %v3391 = vmul.f32 %v3389, %v3390
    %v3392 = vsub.f32 1.0, %v3391
    %v3393 = vmul.f32 %v3390, %v3392
    %v3394 = vadd.f32 %v3390, %v3393
    %vm3395 = vweird.f32 %v3389
    %vm3396 = vweird.f32 %v3390
    %vm3397 = vmor %vm3395, %vm3396
    %v3398 = vsel %vm3397, %v3390, %v3394
    %v3399 = vand.u32 2147483647, %v3389
    %vm3400 = vcmp.eq.f32.partialorder %v3399, 8.507059e+37
    %v3401 = vand.u32 %v3389, 2147483648
    %v3402 = vor.u32 1.1754944e-38, %v3401
    %v3403 = vsel %vm3400, %v3402, %v3398
    %v3404 = vmul.f32 1.0, %v3403
    %v3405 = vmul.f32 %v3384, %v3044
    %v3406 = vmul.f32 %v3365, %v3385
    %v3407 = vadd.f32 %v3405, %v3406
    %v3408 = vtanh.pop %v3407
    %v3409 = vmul.f32 %v3404, %v3408
    %v3410 = vpack.c.bf16 %v3409, %v3409
    %3411 = vmatpush.bf16.msra.mxu0 %v714
    %3412 = vmatpush.bf16.msra.mxu0 %v711
    %3413 = vmatpush.bf16.msra.mxu0 %v708
    %3414 = vmatpush.bf16.msra.mxu0 %v705
    %3415 = vmatpush.bf16.msra.mxu0 %v702
    %3416 = vmatpush.bf16.msra.mxu0 %v699
    %3417 = vmatpush.bf16.msra.mxu0 %v696
    %3418 = vmatpush.bf16.msra.mxu0 %v693
    %3419 = vmatmul.bf16.gmra.mxu0 %v3410
    %v3420 = vpop.f32.mrf.mxu0
    %v3421 = vadd.f32 0.0, %v3420
    %v3422 = vpop.f32.mrf.mxu0
    %3423 = vdwg.mxu0
    %3424 = vmatpush.bf16.msra.mxu0 %v715
    %3425 = vmatpush.bf16.msra.mxu0 %v712
    %3426 = vmatpush.bf16.msra.mxu0 %v709
    %3427 = vmatpush.bf16.msra.mxu0 %v706
    %3428 = vmatpush.bf16.msra.mxu0 %v703
    %3429 = vmatpush.bf16.msra.mxu0 %v700
    %3430 = vmatpush.bf16.msra.mxu0 %v697
    %3431 = vmatpush.bf16.msra.mxu0 %v694
    %3432 = vmatmul.bf16.gmra.mxu0 %v3410
    %v3433 = vpop.f32.mrf.mxu0
    %v3434 = vadd.f32 0.0, %v3433
    %v3435 = vpop.f32.mrf.mxu0
    %3436 = vdwg.mxu0
    %3437 = vmatpush.bf16.msra.mxu0 %v716
    %3438 = vmatpush.bf16.msra.mxu0 %v713
    %3439 = vmatpush.bf16.msra.mxu0 %v710
    %3440 = vmatpush.bf16.msra.mxu0 %v707
    %3441 = vmatpush.bf16.msra.mxu0 %v704
    %3442 = vmatpush.bf16.msra.mxu0 %v701
    %3443 = vmatpush.bf16.msra.mxu0 %v698
    %3444 = vmatpush.bf16.msra.mxu0 %v695
    %3445 = vmatmul.bf16.gmra.mxu0 %v3410
    %v3446 = vpop.f32.mrf.mxu0
    %v3447 = vadd.f32 0.0, %v3446
    %v3448 = vpop.f32.mrf.mxu0
    %3449 = vdwg.mxu0
    %v3450 = vadd.f32 %v202, %v3421
    %v3451 = vadd.f32 %v203, %v3434
    %v3452 = vadd.f32 %v204, %v3447
    %v3453 = vpack.c.bf16 %v3179, %v3179
    %3454 = vmatpush.bf16.msra.mxu0 %v885
    %3455 = vmatpush.bf16.msra.mxu0 %v882
    %3456 = vmatpush.bf16.msra.mxu0 %v879
    %3457 = vmatpush.bf16.msra.mxu0 %v876
    %3458 = vmatpush.bf16.msra.mxu0 %v873
    %3459 = vmatpush.bf16.msra.mxu0 %v870
    %3460 = vmatpush.bf16.msra.mxu0 %v867
    %3461 = vmatpush.bf16.msra.mxu0 %v864
    %3462 = vmatmul.bf16.gmra.mxu0 %v3453
    %v3463 = vpop.f32.mrf.mxu0
    %v3464 = vadd.f32 0.0, %v3463
    %v3465 = vpop.f32.mrf.mxu0
    %3466 = vdwg.mxu0
    %3467 = vmatpush.bf16.msra.mxu0 %v886
    %3468 = vmatpush.bf16.msra.mxu0 %v883
    %3469 = vmatpush.bf16.msra.mxu0 %v880
    %3470 = vmatpush.bf16.msra.mxu0 %v877
    %3471 = vmatpush.bf16.msra.mxu0 %v874
    %3472 = vmatpush.bf16.msra.mxu0 %v871
    %3473 = vmatpush.bf16.msra.mxu0 %v868
    %3474 = vmatpush.bf16.msra.mxu0 %v865
    %3475 = vmatmul.bf16.gmra.mxu0 %v3453
    %v3476 = vpop.f32.mrf.mxu0
    %v3477 = vadd.f32 0.0, %v3476
    %v3478 = vpop.f32.mrf.mxu0
    %3479 = vdwg.mxu0
    %3480 = vmatpush.bf16.msra.mxu0 %v887
    %3481 = vmatpush.bf16.msra.mxu0 %v884
    %3482 = vmatpush.bf16.msra.mxu0 %v881
    %3483 = vmatpush.bf16.msra.mxu0 %v878
    %3484 = vmatpush.bf16.msra.mxu0 %v875
    %3485 = vmatpush.bf16.msra.mxu0 %v872
    %3486 = vmatpush.bf16.msra.mxu0 %v869
    %3487 = vmatpush.bf16.msra.mxu0 %v866
    %3488 = vmatmul.bf16.gmra.mxu0 %v3453
    %v3489 = vpop.f32.mrf.mxu0
    %v3490 = vadd.f32 0.0, %v3489
    %v3491 = vpop.f32.mrf.mxu0
    %3492 = vdwg.mxu0
    %v3493 = vadd.f32 %v210, %v3464
    %v3494 = vadd.f32 %v211, %v3477
    %v3495 = vadd.f32 %v212, %v3490
    %v3496 = vadd.f32 %v3450, %v3493
    %v3497 = vxor.u32 %v3496, 2147483648
    %v3498 = vmul.f32 %v3497, 1.442695
    %v3499 = vpow.pop %v3498
    %v3500 = vadd.f32 %v3499, 1.0
    %v3501 = vrcp.pop %v3500
    %v3502 = vmul.f32 %v3500, %v3501
    %v3503 = vsub.f32 1.0, %v3502
    %v3504 = vmul.f32 %v3501, %v3503
    %v3505 = vadd.f32 %v3501, %v3504
    %vm3506 = vweird.f32 %v3500
    %vm3507 = vweird.f32 %v3501
    %vm3508 = vmor %vm3506, %vm3507
    %v3509 = vsel %vm3508, %v3501, %v3505
    %v3510 = vand.u32 2147483647, %v3500
    %vm3511 = vcmp.eq.f32.partialorder %v3510, 8.507059e+37
    %v3512 = vand.u32 %v3500, 2147483648
    %v3513 = vor.u32 1.1754944e-38, %v3512
    %v3514 = vsel %vm3511, %v3513, %v3509
    %v3515 = vmul.f32 1.0, %v3514
    %v3516 = vadd.f32 %v3451, %v3494
    %v3517 = vxor.u32 %v3516, 2147483648
    %v3518 = vmul.f32 %v3517, 1.442695
    %v3519 = vpow.pop %v3518
    %v3520 = vadd.f32 %v3519, 1.0
    %v3521 = vrcp.pop %v3520
    %v3522 = vmul.f32 %v3520, %v3521
    %v3523 = vsub.f32 1.0, %v3522
    %v3524 = vmul.f32 %v3521, %v3523
    %v3525 = vadd.f32 %v3521, %v3524
    %vm3526 = vweird.f32 %v3520
    %vm3527 = vweird.f32 %v3521
    %vm3528 = vmor %vm3526, %vm3527
    %v3529 = vsel %vm3528, %v3521, %v3525
    %v3530 = vand.u32 2147483647, %v3520
    %vm3531 = vcmp.eq.f32.partialorder %v3530, 8.507059e+37
    %v3532 = vand.u32 %v3520, 2147483648
    %v3533 = vor.u32 1.1754944e-38, %v3532
    %v3534 = vsel %vm3531, %v3533, %v3529
    %v3535 = vmul.f32 1.0, %v3534
    %v3536 = vmul.f32 %v3515, %v3495
    %v3537 = vadd.f32 %v3452, %v3536
    %v3538 = vtanh.pop %v3537
    %v3539 = vsub.f32 1.0, %v3535
    %v3540 = vmul.f32 %v3539, %v3538
    %v3541 = vmul.f32 %v3535, %v3179
    %v3542 = vadd.f32 %v3540, %v3541
    %v3543 = vmax.f32 %v3542, 0.0
    %v3544 = vmul.f32 %v3543, %v218
    %v3545 = vsel %vm1003, %v3544, 0.0
    %3546 = vadd.xlane.f32.xlu0 %v3545
    %v3547 = vpop.xlane.xlu0 %3546
    %vm3548 = vcmp.eq.s32.totalorder %v221, 7
    %v3549 = vsel %vm3548, %v3547, %v3186
    %3550 = vst [vmem:[#allocation2] sm:$0x3] %v3409
    %3551 = vst [vmem:[#allocation3] sm:$0x3] %v3407
    %3552 = vst [vmem:[#allocation4] sm:$0x3] %v3542
    %v3553 = vld [vmem:[#allocation5] sm:$0x1]
    %v3555 = vperm.slane %v3553, 0
    %3556 = vset.pattern.permute.xlu0 0
    %3557 = vperm.xlu0 %3556, %v3555
    %v3558 = vpop.permute.xlu0 %3557
    %v3560 = vadd.f32 %v3549, %v3558
    %vm3561 = vcmask 58368
    %3562 = vst.msk [vmem:[#allocation12] sm:$0x3] %vm3561, %v3560
    // Predicated region
    $region58: #{single_price_model_forward.1} parent=1 // pred_check
      _
    $region59: #{single_price_model_forward.1} parent=1 // pred_check_branch
      %3564 = sbr.rel (0) target = $region61
    $region60: #{single_price_model_forward.1} parent=1 // pred_region
      %3566 = vsyncadd [#allocation8], 0
      %s3568 = sshll.u32 [#allocation12], 4
      %s3569 = int_to_ptr.vmem [resolvable:$true] %s3568
      %s3570 = sshll.u32 %s10, 4
      %s3571 = int_to_ptr.hbm [resolvable:$true] %s3570
      %3573 = dma.vmem_to_hbm [thread:$0]  %s3569, 32, %s3571, [#allocation8]
    $region61: #{single_price_model_forward.1} parent=1 // pred_fallthru
      _
    // Predicated region
    $region62: #{single_price_model_forward.1} parent=1 // pred_check
      _
    $region63: #{single_price_model_forward.1} parent=1 // pred_check_branch
      %3575 = sbr.rel (0) target = $region65
    $region64: #{single_price_model_forward.1} parent=1 // pred_region
      %3577 = dma.done [#allocation8], 32
    $region65: #{single_price_model_forward.1} parent=1 // pred_fallthru
      _
    %3578 = vsyncpa [#allocation7], 1
    %3579 = vsyncpa [#allocation10], 1
    %3580 = vsyncpa [#allocation8], 1

</llo_original>
